<compile_context>
chip_gen: v7x
topology: tpu7x:2x2x1
jax: 0.10.0
libtpu: 0.0.40
codegen_flags: <defaults>
</compile_context>

<pallas_src>
import jax
import jax.numpy as jnp
from jax.experimental import pallas as pl
from jax.experimental.pallas import tpu as pltpu


# ----------------------------- fused Pallas kernel -----------------------------

def _mnist_fused_kernel(
    x_ref,                                    # (1, 28, 28)   one image
    m1_ref, b1_ref,                           # conv1 folded weights (5,28,120) / bias (1,120)
    cs1a_ref, cs1b_ref, rs1a_ref, rs1b_ref,   # pool1 col-select (120,60)x2 / row-select (12,24)x2
    m2_ref, b2_ref,                           # conv2 folded weights (5,60,80) / bias (1,80)
    cs2a_ref, cs2b_ref, rs2a_ref, rs2b_ref,   # pool2 col-select (80,40)x2 / row-select (4,8)x2
    w1l_ref, b1l_ref,                         # linear_1 pre-permuted (4,40,128) / bias (1,128)
    w2l_ref, b2l_ref,                         # linear_2 pre-transposed (128,10) / bias (1,10)
    o_ref,                                    # (1, 1, 10)
):
    def mm(a, b):
        return jnp.dot(a, b, preferred_element_type=jnp.float32)

    x = x_ref[0]                                                    # (28, 28)

    # conv1 + bias + ReLU  -> channel-concatenated slab (24, 5*24)
    a1 = b1_ref[...]                                                # (1, 120)
    for kh in range(5):
        a1 = a1 + mm(x[kh:kh + 24, :], m1_ref[kh])                  # (24,28)@(28,120)
    a1 = jnp.maximum(a1, 0.0)

    # 2x2 / stride 2 max-pool  -> (12, 5*12)
    u1 = jnp.maximum(mm(a1, cs1a_ref[...]), mm(a1, cs1b_ref[...]))  # (24, 60)
    p1 = jnp.maximum(mm(rs1a_ref[...], u1), mm(rs1b_ref[...], u1))  # (12, 60)

    # conv2 + bias + ReLU  -> (8, 10*8)
    a2 = b2_ref[...]                                                # (1, 80)
    for kh in range(5):
        a2 = a2 + mm(p1[kh:kh + 8, :], m2_ref[kh])                  # (8,60)@(60,80)
    a2 = jnp.maximum(a2, 0.0)

    # 2x2 / stride 2 max-pool  -> (4, 10*4)
    u2 = jnp.maximum(mm(a2, cs2a_ref[...]), mm(a2, cs2b_ref[...]))  # (8, 40)
    p2 = jnp.maximum(mm(rs2a_ref[...], u2), mm(rs2b_ref[...], u2))  # (4, 40)

    # linear_1 + sigmoid  -> (1, 128)   (flatten is folded into w1l at prep time)
    h = b1l_ref[...]
    for ii in range(4):
        h = h + mm(p2[ii:ii + 1, :], w1l_ref[ii])                   # (1,40)@(40,128)
    h = jax.nn.sigmoid(h)

    # linear_2 + sigmoid  -> (1, 10)
    o_ref[0] = jax.nn.sigmoid(mm(h, w2l_ref[...]) + b2l_ref[...])


# -------------------------- one-time parameter folding -------------------------

def _conv_col_matrices(w, wi, wo):
    """Fold a (Cout, Cin, KH, KW) conv weight into KH banded column matrices.

    Acting on a channel-concatenated activation slab (rows = image rows,
    cols = Cin*wi), the valid conv is   sum_kh  slab[kh:kh+Ho, :] @ M[kh]
    with M[kh][ci*wi + q, co*wo + j] = w[co, ci, kh, q - j]  (0 <= q-j < KW).
    """
    cout, cin, k_h, k_w = w.shape
    q = jnp.arange(wi)[:, None]
    j = jnp.arange(wo)[None, :]
    d = q - j                                           # (wi, wo)
    valid = ((d >= 0) & (d < k_w)).astype(w.dtype)
    dcl = jnp.clip(d, 0, k_w - 1)
    band = w[:, :, :, dcl] * valid[None, None, None]    # (cout, cin, kh, wi, wo)
    return band.transpose(2, 1, 3, 0, 4).reshape(k_h, cin * wi, cout * wo)


def _pool_col_select(c, wi, dj):
    """(c*wi, c*wi//2) matrix picking column 2j+dj of each channel block."""
    wo = wi // 2
    rows = (jnp.arange(c)[:, None] * wi + 2 * jnp.arange(wo)[None, :] + dj).reshape(-1)
    cols = (jnp.arange(c)[:, None] * wo + jnp.arange(wo)[None, :]).reshape(-1)
    return jnp.zeros((c * wi, c * wo), jnp.float32).at[rows, cols].set(1.0)


def _pool_row_select(hi, di):
    """(hi//2, hi) matrix picking row 2a+di."""
    ho = hi // 2
    r = jnp.arange(ho)
    return jnp.zeros((ho, hi), jnp.float32).at[r, 2 * r + di].set(1.0)


def prepare_params(params):
    """Fold PyTorch-shaped params into kernel-ready constants (done once)."""
    m1 = _conv_col_matrices(params["conv1_w"], 28, 24)                      # (5, 28, 120)
    b1 = jnp.repeat(params["conv1_b"], 24).reshape(1, 120)
    cs1a, cs1b = _pool_col_select(5, 24, 0), _pool_col_select(5, 24, 1)     # (120, 60)
    rs1a, rs1b = _pool_row_select(24, 0), _pool_row_select(24, 1)           # (12, 24)

    m2 = _conv_col_matrices(params["conv2_w"], 12, 8)                       # (5, 60, 80)
    b2 = jnp.repeat(params["conv2_b"], 8).reshape(1, 80)
    cs2a, cs2b = _pool_col_select(10, 8, 0), _pool_col_select(10, 8, 1)     # (80, 40)
    rs2a, rs2b = _pool_row_select(8, 0), _pool_row_select(8, 1)             # (4, 8)

    # linear_1: hidden[h] = sum_{c,ii,jj} W[h, c*16+4ii+jj] * pooled2[c, ii, jj]
    # pooled2 slab is (4, 10*4) with column c*4+jj -> pre-permute W accordingly.
    w1l = (params["lin1_w"].reshape(128, 10, 4, 4)
           .transpose(2, 1, 3, 0).reshape(4, 40, 128))                      # (4, 40, 128)
    b1l = params["lin1_b"].reshape(1, 128)
    w2l = params["lin2_w"].T                                                # (128, 10)
    b2l = params["lin2_b"].reshape(1, 10)

    return (m1, b1, cs1a, cs1b, rs1a, rs1b,
            m2, b2, cs2a, cs2b, rs2a, rs2b,
            w1l, b1l, w2l, b2l)


# --------------------------------- forward ------------------------------------

@jax.jit
def mnist_classifier_forward(prep, x):
    """prep: tuple from prepare_params();  x: (B, 784) float32  ->  (B, 10)."""
    b = x.shape[0]
    x3 = x.astype(jnp.float32).reshape(b, 28, 28)

    def const_spec(arr):
        nd = arr.ndim
        return pl.BlockSpec(tuple(arr.shape), lambda i: (0,) * nd)

    out = pl.pallas_call(
        _mnist_fused_kernel,
        grid=(b,),
        in_specs=[pl.BlockSpec((1, 28, 28), lambda i: (i, 0, 0))]
                 + [const_spec(a) for a in prep],
        out_specs=pl.BlockSpec((1, 1, 10), lambda i: (i, 0, 0)),
        out_shape=jax.ShapeDtypeStruct((b, 1, 10), jnp.float32),
        compiler_params=pltpu.CompilerParams(dimension_semantics=("parallel",)),
    )(x3, *prep)
    return out.reshape(b, 10)


# --------------------------- params / reference / main -------------------------

def init_params(key):
    """Deterministic init matching the PyTorch layer shapes (Kaiming-uniform-like)."""
    ks = jax.random.split(key, 8)

    def u(k, shape, fan_in):
        bound = 1.0 / jnp.sqrt(jnp.float32(fan_in))
        return jax.random.uniform(k, shape, jnp.float32, -bound, bound)

    return {
        "conv1_w": u(ks[0], (5, 1, 5, 5), 1 * 5 * 5),
        "conv1_b": u(ks[1], (5,), 1 * 5 * 5),
        "conv2_w": u(ks[2], (10, 5, 5, 5), 5 * 5 * 5),
        "conv2_b": u(ks[3], (10,), 5 * 5 * 5),
        "lin1_w":  u(ks[4], (128, 4 * 4 * 10), 4 * 4 * 10),   # PyTorch (out, in)
        "lin1_b":  u(ks[5], (128,), 4 * 4 * 10),
        "lin2_w":  u(ks[6], (10, 128), 128),
        "lin2_b":  u(ks[7], (10,), 128),
    }


def _reference_forward(params, x):
    """Pure-JAX (XLA) reference matching the PyTorch module semantics."""
    b = x.shape[0]
    dn = ("NCHW", "OIHW", "NCHW")
    out = x.reshape(b, 1, 28, 28)
    out = jax.lax.conv_general_dilated(out, params["conv1_w"], (1, 1), "VALID",
                                       dimension_numbers=dn)
    out = jax.nn.relu(out + params["conv1_b"].reshape(1, 5, 1, 1))
    out = jax.lax.reduce_window(out, -jnp.inf, jax.lax.max,
                                (1, 1, 2, 2), (1, 1, 2, 2), "VALID")
    out = jax.lax.conv_general_dilated(out, params["conv2_w"], (1, 1), "VALID",
                                       dimension_numbers=dn)
    out = jax.nn.relu(out + params["conv2_b"].reshape(1, 10, 1, 1))
    out = jax.lax.reduce_window(out, -jnp.inf, jax.lax.max,
                                (1, 1, 2, 2), (1, 1, 2, 2), "VALID")
    out = out.reshape(b, 4 * 4 * 10)
    out = jax.nn.sigmoid(out @ params["lin1_w"].T + params["lin1_b"])
    out = jax.nn.sigmoid(out @ params["lin2_w"].T + params["lin2_b"])
    return out


if __name__ == "__main__":
    key = jax.random.PRNGKey(0)
    k_param, k_x = jax.random.split(key)
    params = init_params(k_param)
    prep = prepare_params(params)

    x = jax.random.normal(k_x, (2, 784), dtype=jnp.float32)   # batch=2 MNIST images

    y = mnist_classifier_forward(prep, x)
    jax.block_until_ready(y)
    assert y.shape == (2, 10)

    y_ref = _reference_forward(params, x)
    assert jnp.allclose(y, y_ref, atol=1e-3, rtol=1e-3), (
        "Pallas kernel disagrees with pure-JAX reference")

    print("KERNEL_OK")
</pallas_src>

<mosaic_0001>
module attributes {stable_mosaic.version = 11 : i64} {
  func.func @_mnist_fused_kernel(%arg0: i32, %arg1: memref<1x28x28xf32, #tpu.memory_space<vmem>>, %arg2: memref<5x28x120xf32, #tpu.memory_space<vmem>>, %arg3: memref<1x120xf32, #tpu.memory_space<vmem>>, %arg4: memref<120x60xf32, #tpu.memory_space<vmem>>, %arg5: memref<120x60xf32, #tpu.memory_space<vmem>>, %arg6: memref<12x24xf32, #tpu.memory_space<vmem>>, %arg7: memref<12x24xf32, #tpu.memory_space<vmem>>, %arg8: memref<5x60x80xf32, #tpu.memory_space<vmem>>, %arg9: memref<1x80xf32, #tpu.memory_space<vmem>>, %arg10: memref<80x40xf32, #tpu.memory_space<vmem>>, %arg11: memref<80x40xf32, #tpu.memory_space<vmem>>, %arg12: memref<4x8xf32, #tpu.memory_space<vmem>>, %arg13: memref<4x8xf32, #tpu.memory_space<vmem>>, %arg14: memref<4x40x128xf32, #tpu.memory_space<vmem>>, %arg15: memref<1x128xf32, #tpu.memory_space<vmem>>, %arg16: memref<128x10xf32, #tpu.memory_space<vmem>>, %arg17: memref<1x10xf32, #tpu.memory_space<vmem>>, %arg18: memref<1x1x10xf32, #tpu.memory_space<vmem>>) attributes {dimension_semantics = [#tpu.dimension_semantics<parallel>], iteration_bounds = array<i64: 2>, scalar_prefetch = 0 : i64, scratch_operands = 0 : i64, tpu.core_type = #tpu.core_type<tc>, window_params = [{transform_indices = @transform_0, window_bounds = array<i64: 1, 28, 28>}, {pipeline_mode = #tpu.pipeline_mode<synchronous>, transform_indices = @transform_1, window_bounds = array<i64: 5, 28, 120>}, {pipeline_mode = #tpu.pipeline_mode<synchronous>, transform_indices = @transform_2, window_bounds = array<i64: 1, 120>}, {pipeline_mode = #tpu.pipeline_mode<synchronous>, transform_indices = @transform_3, window_bounds = array<i64: 120, 60>}, {pipeline_mode = #tpu.pipeline_mode<synchronous>, transform_indices = @transform_4, window_bounds = array<i64: 120, 60>}, {pipeline_mode = #tpu.pipeline_mode<synchronous>, transform_indices = @transform_5, window_bounds = array<i64: 12, 24>}, {pipeline_mode = #tpu.pipeline_mode<synchronous>, transform_indices = @transform_6, window_bounds = array<i64: 12, 24>}, {pipeline_mode = #tpu.pipeline_mode<synchronous>, transform_indices = @transform_7, window_bounds = array<i64: 5, 60, 80>}, {pipeline_mode = #tpu.pipeline_mode<synchronous>, transform_indices = @transform_8, window_bounds = array<i64: 1, 80>}, {pipeline_mode = #tpu.pipeline_mode<synchronous>, transform_indices = @transform_9, window_bounds = array<i64: 80, 40>}, {pipeline_mode = #tpu.pipeline_mode<synchronous>, transform_indices = @transform_10, window_bounds = array<i64: 80, 40>}, {pipeline_mode = #tpu.pipeline_mode<synchronous>, transform_indices = @transform_11, window_bounds = array<i64: 4, 8>}, {pipeline_mode = #tpu.pipeline_mode<synchronous>, transform_indices = @transform_12, window_bounds = array<i64: 4, 8>}, {pipeline_mode = #tpu.pipeline_mode<synchronous>, transform_indices = @transform_13, window_bounds = array<i64: 4, 40, 128>}, {pipeline_mode = #tpu.pipeline_mode<synchronous>, transform_indices = @transform_14, window_bounds = array<i64: 1, 128>}, {pipeline_mode = #tpu.pipeline_mode<synchronous>, transform_indices = @transform_15, window_bounds = array<i64: 128, 10>}, {pipeline_mode = #tpu.pipeline_mode<synchronous>, transform_indices = @transform_16, window_bounds = array<i64: 1, 10>}, {transform_indices = @transform_17, window_bounds = array<i64: 1, 1, 10>}]} {
    %c0 = arith.constant 0 : index
    %c0_0 = arith.constant 0 : index
    %c0_1 = arith.constant 0 : index
    %0 = vector.load %arg1[%c0, %c0_0, %c0_1] : memref<1x28x28xf32, #tpu.memory_space<vmem>>, vector<1x28x28xf32>
    %1 = vector.shape_cast %0 : vector<1x28x28xf32> to vector<28x28xf32>
    %c0_2 = arith.constant 0 : index
    %c0_3 = arith.constant 0 : index
    %2 = vector.load %arg3[%c0_2, %c0_3] : memref<1x120xf32, #tpu.memory_space<vmem>>, vector<1x120xf32>
    %3 = vector.extract_strided_slice %1 {offsets = [0, 0], sizes = [24, 28], strides = [1, 1]} : vector<28x28xf32> to vector<24x28xf32>
    %c0_4 = arith.constant 0 : index
    %c0_5 = arith.constant 0 : index
    %c0_6 = arith.constant 0 : index
    %4 = vector.load %arg2[%c0_4, %c0_5, %c0_6] : memref<5x28x120xf32, #tpu.memory_space<vmem>>, vector<1x28x120xf32>
    %5 = vector.shape_cast %4 : vector<1x28x120xf32> to vector<28x120xf32>
    %cst = arith.constant dense<0.000000e+00> : vector<24x120xf32>
    %6 = tpu.matmul %3, %5, %cst {dimension_numbers = #tpu.dot_dimension_numbers<[1], [0], [0], [1], [0, 0, 1, 1], [], []>} : vector<24x28xf32>, vector<28x120xf32>, vector<24x120xf32> -> vector<24x120xf32>
    %7 = vector.broadcast %2 : vector<1x120xf32> to vector<24x120xf32>
    %8 = arith.addf %7, %6 : vector<24x120xf32>
    %9 = vector.extract_strided_slice %1 {offsets = [1, 0], sizes = [24, 28], strides = [1, 1]} : vector<28x28xf32> to vector<24x28xf32>
    %c1 = arith.constant 1 : index
    %c0_7 = arith.constant 0 : index
    %c0_8 = arith.constant 0 : index
    %10 = vector.load %arg2[%c1, %c0_7, %c0_8] : memref<5x28x120xf32, #tpu.memory_space<vmem>>, vector<1x28x120xf32>
    %11 = vector.shape_cast %10 : vector<1x28x120xf32> to vector<28x120xf32>
    %cst_9 = arith.constant dense<0.000000e+00> : vector<24x120xf32>
    %12 = tpu.matmul %9, %11, %cst_9 {dimension_numbers = #tpu.dot_dimension_numbers<[1], [0], [0], [1], [0, 0, 1, 1], [], []>} : vector<24x28xf32>, vector<28x120xf32>, vector<24x120xf32> -> vector<24x120xf32>
    %13 = arith.addf %8, %12 : vector<24x120xf32>
    %14 = vector.extract_strided_slice %1 {offsets = [2, 0], sizes = [24, 28], strides = [1, 1]} : vector<28x28xf32> to vector<24x28xf32>
    %c2 = arith.constant 2 : index
    %c0_10 = arith.constant 0 : index
    %c0_11 = arith.constant 0 : index
    %15 = vector.load %arg2[%c2, %c0_10, %c0_11] : memref<5x28x120xf32, #tpu.memory_space<vmem>>, vector<1x28x120xf32>
    %16 = vector.shape_cast %15 : vector<1x28x120xf32> to vector<28x120xf32>
    %cst_12 = arith.constant dense<0.000000e+00> : vector<24x120xf32>
    %17 = tpu.matmul %14, %16, %cst_12 {dimension_numbers = #tpu.dot_dimension_numbers<[1], [0], [0], [1], [0, 0, 1, 1], [], []>} : vector<24x28xf32>, vector<28x120xf32>, vector<24x120xf32> -> vector<24x120xf32>
    %18 = arith.addf %13, %17 : vector<24x120xf32>
    %19 = vector.extract_strided_slice %1 {offsets = [3, 0], sizes = [24, 28], strides = [1, 1]} : vector<28x28xf32> to vector<24x28xf32>
    %c3 = arith.constant 3 : index
    %c0_13 = arith.constant 0 : index
    %c0_14 = arith.constant 0 : index
    %20 = vector.load %arg2[%c3, %c0_13, %c0_14] : memref<5x28x120xf32, #tpu.memory_space<vmem>>, vector<1x28x120xf32>
    %21 = vector.shape_cast %20 : vector<1x28x120xf32> to vector<28x120xf32>
    %cst_15 = arith.constant dense<0.000000e+00> : vector<24x120xf32>
    %22 = tpu.matmul %19, %21, %cst_15 {dimension_numbers = #tpu.dot_dimension_numbers<[1], [0], [0], [1], [0, 0, 1, 1], [], []>} : vector<24x28xf32>, vector<28x120xf32>, vector<24x120xf32> -> vector<24x120xf32>
    %23 = arith.addf %18, %22 : vector<24x120xf32>
    %24 = vector.extract_strided_slice %1 {offsets = [4, 0], sizes = [24, 28], strides = [1, 1]} : vector<28x28xf32> to vector<24x28xf32>
    %c4 = arith.constant 4 : index
    %c0_16 = arith.constant 0 : index
    %c0_17 = arith.constant 0 : index
    %25 = vector.load %arg2[%c4, %c0_16, %c0_17] : memref<5x28x120xf32, #tpu.memory_space<vmem>>, vector<1x28x120xf32>
    %26 = vector.shape_cast %25 : vector<1x28x120xf32> to vector<28x120xf32>
    %cst_18 = arith.constant dense<0.000000e+00> : vector<24x120xf32>
    %27 = tpu.matmul %24, %26, %cst_18 {dimension_numbers = #tpu.dot_dimension_numbers<[1], [0], [0], [1], [0, 0, 1, 1], [], []>} : vector<24x28xf32>, vector<28x120xf32>, vector<24x120xf32> -> vector<24x120xf32>
    %28 = arith.addf %23, %27 : vector<24x120xf32>
    %cst_19 = arith.constant 0.000000e+00 : f32
    %29 = vector.broadcast %cst_19 : f32 to vector<24x120xf32>
    %30 = arith.maximumf %28, %29 : vector<24x120xf32>
    %c0_20 = arith.constant 0 : index
    %c0_21 = arith.constant 0 : index
    %31 = vector.load %arg4[%c0_20, %c0_21] : memref<120x60xf32, #tpu.memory_space<vmem>>, vector<120x60xf32>
    %cst_22 = arith.constant dense<0.000000e+00> : vector<24x60xf32>
    %32 = tpu.matmul %30, %31, %cst_22 {dimension_numbers = #tpu.dot_dimension_numbers<[1], [0], [0], [1], [0, 0, 1, 1], [], []>} : vector<24x120xf32>, vector<120x60xf32>, vector<24x60xf32> -> vector<24x60xf32>
    %c0_23 = arith.constant 0 : index
    %c0_24 = arith.constant 0 : index
    %33 = vector.load %arg5[%c0_23, %c0_24] : memref<120x60xf32, #tpu.memory_space<vmem>>, vector<120x60xf32>
    %cst_25 = arith.constant dense<0.000000e+00> : vector<24x60xf32>
    %34 = tpu.matmul %30, %33, %cst_25 {dimension_numbers = #tpu.dot_dimension_numbers<[1], [0], [0], [1], [0, 0, 1, 1], [], []>} : vector<24x120xf32>, vector<120x60xf32>, vector<24x60xf32> -> vector<24x60xf32>
    %35 = arith.maximumf %32, %34 : vector<24x60xf32>
    %c0_26 = arith.constant 0 : index
    %c0_27 = arith.constant 0 : index
    %36 = vector.load %arg6[%c0_26, %c0_27] : memref<12x24xf32, #tpu.memory_space<vmem>>, vector<12x24xf32>
    %cst_28 = arith.constant dense<0.000000e+00> : vector<12x60xf32>
    %37 = tpu.matmul %36, %35, %cst_28 {dimension_numbers = #tpu.dot_dimension_numbers<[1], [0], [0], [1], [0, 0, 1, 1], [], []>} : vector<12x24xf32>, vector<24x60xf32>, vector<12x60xf32> -> vector<12x60xf32>
    %c0_29 = arith.constant 0 : index
    %c0_30 = arith.constant 0 : index
    %38 = vector.load %arg7[%c0_29, %c0_30] : memref<12x24xf32, #tpu.memory_space<vmem>>, vector<12x24xf32>
    %cst_31 = arith.constant dense<0.000000e+00> : vector<12x60xf32>
    %39 = tpu.matmul %38, %35, %cst_31 {dimension_numbers = #tpu.dot_dimension_numbers<[1], [0], [0], [1], [0, 0, 1, 1], [], []>} : vector<12x24xf32>, vector<24x60xf32>, vector<12x60xf32> -> vector<12x60xf32>
    %40 = arith.maximumf %37, %39 : vector<12x60xf32>
    %c0_32 = arith.constant 0 : index
    %c0_33 = arith.constant 0 : index
    %41 = vector.load %arg9[%c0_32, %c0_33] : memref<1x80xf32, #tpu.memory_space<vmem>>, vector<1x80xf32>
    %42 = vector.extract_strided_slice %40 {offsets = [0, 0], sizes = [8, 60], strides = [1, 1]} : vector<12x60xf32> to vector<8x60xf32>
    %c0_34 = arith.constant 0 : index
    %c0_35 = arith.constant 0 : index
    %c0_36 = arith.constant 0 : index
    %43 = vector.load %arg8[%c0_34, %c0_35, %c0_36] : memref<5x60x80xf32, #tpu.memory_space<vmem>>, vector<1x60x80xf32>
    %44 = vector.shape_cast %43 : vector<1x60x80xf32> to vector<60x80xf32>
    %cst_37 = arith.constant dense<0.000000e+00> : vector<8x80xf32>
    %45 = tpu.matmul %42, %44, %cst_37 {dimension_numbers = #tpu.dot_dimension_numbers<[1], [0], [0], [1], [0, 0, 1, 1], [], []>} : vector<8x60xf32>, vector<60x80xf32>, vector<8x80xf32> -> vector<8x80xf32>
    %46 = vector.broadcast %41 : vector<1x80xf32> to vector<8x80xf32>
    %47 = arith.addf %46, %45 : vector<8x80xf32>
    %48 = vector.extract_strided_slice %40 {offsets = [1, 0], sizes = [8, 60], strides = [1, 1]} : vector<12x60xf32> to vector<8x60xf32>
    %c1_38 = arith.constant 1 : index
    %c0_39 = arith.constant 0 : index
    %c0_40 = arith.constant 0 : index
    %49 = vector.load %arg8[%c1_38, %c0_39, %c0_40] : memref<5x60x80xf32, #tpu.memory_space<vmem>>, vector<1x60x80xf32>
    %50 = vector.shape_cast %49 : vector<1x60x80xf32> to vector<60x80xf32>
    %cst_41 = arith.constant dense<0.000000e+00> : vector<8x80xf32>
    %51 = tpu.matmul %48, %50, %cst_41 {dimension_numbers = #tpu.dot_dimension_numbers<[1], [0], [0], [1], [0, 0, 1, 1], [], []>} : vector<8x60xf32>, vector<60x80xf32>, vector<8x80xf32> -> vector<8x80xf32>
    %52 = arith.addf %47, %51 : vector<8x80xf32>
    %53 = vector.extract_strided_slice %40 {offsets = [2, 0], sizes = [8, 60], strides = [1, 1]} : vector<12x60xf32> to vector<8x60xf32>
    %c2_42 = arith.constant 2 : index
    %c0_43 = arith.constant 0 : index
    %c0_44 = arith.constant 0 : index
    %54 = vector.load %arg8[%c2_42, %c0_43, %c0_44] : memref<5x60x80xf32, #tpu.memory_space<vmem>>, vector<1x60x80xf32>
    %55 = vector.shape_cast %54 : vector<1x60x80xf32> to vector<60x80xf32>
    %cst_45 = arith.constant dense<0.000000e+00> : vector<8x80xf32>
    %56 = tpu.matmul %53, %55, %cst_45 {dimension_numbers = #tpu.dot_dimension_numbers<[1], [0], [0], [1], [0, 0, 1, 1], [], []>} : vector<8x60xf32>, vector<60x80xf32>, vector<8x80xf32> -> vector<8x80xf32>
    %57 = arith.addf %52, %56 : vector<8x80xf32>
    %58 = vector.extract_strided_slice %40 {offsets = [3, 0], sizes = [8, 60], strides = [1, 1]} : vector<12x60xf32> to vector<8x60xf32>
    %c3_46 = arith.constant 3 : index
    %c0_47 = arith.constant 0 : index
    %c0_48 = arith.constant 0 : index
    %59 = vector.load %arg8[%c3_46, %c0_47, %c0_48] : memref<5x60x80xf32, #tpu.memory_space<vmem>>, vector<1x60x80xf32>
    %60 = vector.shape_cast %59 : vector<1x60x80xf32> to vector<60x80xf32>
    %cst_49 = arith.constant dense<0.000000e+00> : vector<8x80xf32>
    %61 = tpu.matmul %58, %60, %cst_49 {dimension_numbers = #tpu.dot_dimension_numbers<[1], [0], [0], [1], [0, 0, 1, 1], [], []>} : vector<8x60xf32>, vector<60x80xf32>, vector<8x80xf32> -> vector<8x80xf32>
    %62 = arith.addf %57, %61 : vector<8x80xf32>
    %63 = vector.extract_strided_slice %40 {offsets = [4, 0], sizes = [8, 60], strides = [1, 1]} : vector<12x60xf32> to vector<8x60xf32>
    %c4_50 = arith.constant 4 : index
    %c0_51 = arith.constant 0 : index
    %c0_52 = arith.constant 0 : index
    %64 = vector.load %arg8[%c4_50, %c0_51, %c0_52] : memref<5x60x80xf32, #tpu.memory_space<vmem>>, vector<1x60x80xf32>
    %65 = vector.shape_cast %64 : vector<1x60x80xf32> to vector<60x80xf32>
    %cst_53 = arith.constant dense<0.000000e+00> : vector<8x80xf32>
    %66 = tpu.matmul %63, %65, %cst_53 {dimension_numbers = #tpu.dot_dimension_numbers<[1], [0], [0], [1], [0, 0, 1, 1], [], []>} : vector<8x60xf32>, vector<60x80xf32>, vector<8x80xf32> -> vector<8x80xf32>
    %67 = arith.addf %62, %66 : vector<8x80xf32>
    %cst_54 = arith.constant 0.000000e+00 : f32
    %68 = vector.broadcast %cst_54 : f32 to vector<8x80xf32>
    %69 = arith.maximumf %67, %68 : vector<8x80xf32>
    %c0_55 = arith.constant 0 : index
    %c0_56 = arith.constant 0 : index
    %70 = vector.load %arg10[%c0_55, %c0_56] : memref<80x40xf32, #tpu.memory_space<vmem>>, vector<80x40xf32>
    %cst_57 = arith.constant dense<0.000000e+00> : vector<8x40xf32>
    %71 = tpu.matmul %69, %70, %cst_57 {dimension_numbers = #tpu.dot_dimension_numbers<[1], [0], [0], [1], [0, 0, 1, 1], [], []>} : vector<8x80xf32>, vector<80x40xf32>, vector<8x40xf32> -> vector<8x40xf32>
    %c0_58 = arith.constant 0 : index
    %c0_59 = arith.constant 0 : index
    %72 = vector.load %arg11[%c0_58, %c0_59] : memref<80x40xf32, #tpu.memory_space<vmem>>, vector<80x40xf32>
    %cst_60 = arith.constant dense<0.000000e+00> : vector<8x40xf32>
    %73 = tpu.matmul %69, %72, %cst_60 {dimension_numbers = #tpu.dot_dimension_numbers<[1], [0], [0], [1], [0, 0, 1, 1], [], []>} : vector<8x80xf32>, vector<80x40xf32>, vector<8x40xf32> -> vector<8x40xf32>
    %74 = arith.maximumf %71, %73 : vector<8x40xf32>
    %c0_61 = arith.constant 0 : index
    %c0_62 = arith.constant 0 : index
    %75 = vector.load %arg12[%c0_61, %c0_62] : memref<4x8xf32, #tpu.memory_space<vmem>>, vector<4x8xf32>
    %cst_63 = arith.constant dense<0.000000e+00> : vector<4x40xf32>
    %76 = tpu.matmul %75, %74, %cst_63 {dimension_numbers = #tpu.dot_dimension_numbers<[1], [0], [0], [1], [0, 0, 1, 1], [], []>} : vector<4x8xf32>, vector<8x40xf32>, vector<4x40xf32> -> vector<4x40xf32>
    %c0_64 = arith.constant 0 : index
    %c0_65 = arith.constant 0 : index
    %77 = vector.load %arg13[%c0_64, %c0_65] : memref<4x8xf32, #tpu.memory_space<vmem>>, vector<4x8xf32>
    %cst_66 = arith.constant dense<0.000000e+00> : vector<4x40xf32>
    %78 = tpu.matmul %77, %74, %cst_66 {dimension_numbers = #tpu.dot_dimension_numbers<[1], [0], [0], [1], [0, 0, 1, 1], [], []>} : vector<4x8xf32>, vector<8x40xf32>, vector<4x40xf32> -> vector<4x40xf32>
    %79 = arith.maximumf %76, %78 : vector<4x40xf32>
    %c0_67 = arith.constant 0 : index
    %c0_68 = arith.constant 0 : index
    %80 = vector.load %arg15[%c0_67, %c0_68] : memref<1x128xf32, #tpu.memory_space<vmem>>, vector<1x128xf32>
    %81 = vector.extract_strided_slice %79 {offsets = [0, 0], sizes = [1, 40], strides = [1, 1]} : vector<4x40xf32> to vector<1x40xf32>
    %c0_69 = arith.constant 0 : index
    %c0_70 = arith.constant 0 : index
    %c0_71 = arith.constant 0 : index
    %82 = vector.load %arg14[%c0_69, %c0_70, %c0_71] : memref<4x40x128xf32, #tpu.memory_space<vmem>>, vector<1x40x128xf32>
    %83 = vector.shape_cast %82 : vector<1x40x128xf32> to vector<40x128xf32>
    %cst_72 = arith.constant dense<0.000000e+00> : vector<1x128xf32>
    %84 = tpu.matmul %81, %83, %cst_72 {dimension_numbers = #tpu.dot_dimension_numbers<[1], [0], [0], [1], [0, 0, 1, 1], [], []>} : vector<1x40xf32>, vector<40x128xf32>, vector<1x128xf32> -> vector<1x128xf32>
    %85 = arith.addf %80, %84 : vector<1x128xf32>
    %86 = vector.extract_strided_slice %79 {offsets = [1, 0], sizes = [1, 40], strides = [1, 1]} : vector<4x40xf32> to vector<1x40xf32>
    %c1_73 = arith.constant 1 : index
    %c0_74 = arith.constant 0 : index
    %c0_75 = arith.constant 0 : index
    %87 = vector.load %arg14[%c1_73, %c0_74, %c0_75] : memref<4x40x128xf32, #tpu.memory_space<vmem>>, vector<1x40x128xf32>
    %88 = vector.shape_cast %87 : vector<1x40x128xf32> to vector<40x128xf32>
    %cst_76 = arith.constant dense<0.000000e+00> : vector<1x128xf32>
    %89 = tpu.matmul %86, %88, %cst_76 {dimension_numbers = #tpu.dot_dimension_numbers<[1], [0], [0], [1], [0, 0, 1, 1], [], []>} : vector<1x40xf32>, vector<40x128xf32>, vector<1x128xf32> -> vector<1x128xf32>
    %90 = arith.addf %85, %89 : vector<1x128xf32>
    %91 = vector.extract_strided_slice %79 {offsets = [2, 0], sizes = [1, 40], strides = [1, 1]} : vector<4x40xf32> to vector<1x40xf32>
    %c2_77 = arith.constant 2 : index
    %c0_78 = arith.constant 0 : index
    %c0_79 = arith.constant 0 : index
    %92 = vector.load %arg14[%c2_77, %c0_78, %c0_79] : memref<4x40x128xf32, #tpu.memory_space<vmem>>, vector<1x40x128xf32>
    %93 = vector.shape_cast %92 : vector<1x40x128xf32> to vector<40x128xf32>
    %cst_80 = arith.constant dense<0.000000e+00> : vector<1x128xf32>
    %94 = tpu.matmul %91, %93, %cst_80 {dimension_numbers = #tpu.dot_dimension_numbers<[1], [0], [0], [1], [0, 0, 1, 1], [], []>} : vector<1x40xf32>, vector<40x128xf32>, vector<1x128xf32> -> vector<1x128xf32>
    %95 = arith.addf %90, %94 : vector<1x128xf32>
    %96 = vector.extract_strided_slice %79 {offsets = [3, 0], sizes = [1, 40], strides = [1, 1]} : vector<4x40xf32> to vector<1x40xf32>
    %c3_81 = arith.constant 3 : index
    %c0_82 = arith.constant 0 : index
    %c0_83 = arith.constant 0 : index
    %97 = vector.load %arg14[%c3_81, %c0_82, %c0_83] : memref<4x40x128xf32, #tpu.memory_space<vmem>>, vector<1x40x128xf32>
    %98 = vector.shape_cast %97 : vector<1x40x128xf32> to vector<40x128xf32>
    %cst_84 = arith.constant dense<0.000000e+00> : vector<1x128xf32>
    %99 = tpu.matmul %96, %98, %cst_84 {dimension_numbers = #tpu.dot_dimension_numbers<[1], [0], [0], [1], [0, 0, 1, 1], [], []>} : vector<1x40xf32>, vector<40x128xf32>, vector<1x128xf32> -> vector<1x128xf32>
    %100 = arith.addf %95, %99 : vector<1x128xf32>
    %101 = arith.negf %100 : vector<1x128xf32>
    %102 = math.exp %101 : vector<1x128xf32>
    %cst_85 = arith.constant 1.000000e+00 : f32
    %103 = vector.broadcast %cst_85 : f32 to vector<1x128xf32>
    %104 = arith.addf %103, %102 : vector<1x128xf32>
    %105 = arith.divf %103, %104 : vector<1x128xf32>
    %c0_86 = arith.constant 0 : index
    %c0_87 = arith.constant 0 : index
    %106 = vector.load %arg16[%c0_86, %c0_87] : memref<128x10xf32, #tpu.memory_space<vmem>>, vector<128x10xf32>
    %cst_88 = arith.constant dense<0.000000e+00> : vector<1x10xf32>
    %107 = tpu.matmul %105, %106, %cst_88 {dimension_numbers = #tpu.dot_dimension_numbers<[1], [0], [0], [1], [0, 0, 1, 1], [], []>} : vector<1x128xf32>, vector<128x10xf32>, vector<1x10xf32> -> vector<1x10xf32>
    %c0_89 = arith.constant 0 : index
    %c0_90 = arith.constant 0 : index
    %108 = vector.load %arg17[%c0_89, %c0_90] : memref<1x10xf32, #tpu.memory_space<vmem>>, vector<1x10xf32>
    %109 = arith.addf %107, %108 : vector<1x10xf32>
    %110 = arith.negf %109 : vector<1x10xf32>
    %111 = math.exp %110 : vector<1x10xf32>
    %cst_91 = arith.constant 1.000000e+00 : f32
    %112 = vector.broadcast %cst_91 : f32 to vector<1x10xf32>
    %113 = arith.addf %112, %111 : vector<1x10xf32>
    %114 = arith.divf %112, %113 : vector<1x10xf32>
    %c0_92 = arith.constant 0 : index
    %c0_93 = arith.constant 0 : index
    %c0_94 = arith.constant 0 : index
    %115 = vector.load %arg18[%c0_92, %c0_93, %c0_94] : memref<1x1x10xf32, #tpu.memory_space<vmem>>, vector<1x1x10xf32>
    %116 = vector.shape_cast %115 : vector<1x1x10xf32> to vector<1x10xf32>
    %117 = vector.shape_cast %114 : vector<1x10xf32> to vector<1x1x10xf32>
    tpu.vector_store %arg18[%c0_92, %c0_93, %c0_94], %117 {strides = array<i32>} : memref<1x1x10xf32, #tpu.memory_space<vmem>>, vector<1x1x10xf32>,
    return
  }
  func.func @transform_0(%arg0: i32) -> (i32, i32, i32) {
    %c0_i32 = arith.constant 0 : i32
    %c0_i32_0 = arith.constant 0 : i32
    %c0_i32_1 = arith.constant 0 : i32
    return %arg0, %c0_i32, %c0_i32_0 : i32, i32, i32
  }
  func.func @transform_1(%arg0: i32) -> (i32, i32, i32) {
    %c0_i32 = arith.constant 0 : i32
    %c0_i32_0 = arith.constant 0 : i32
    %c0_i32_1 = arith.constant 0 : i32
    %c0_i32_2 = arith.constant 0 : i32
    return %c0_i32, %c0_i32_0, %c0_i32_1 : i32, i32, i32
  }
  func.func @transform_2(%arg0: i32) -> (i32, i32) {
    %c0_i32 = arith.constant 0 : i32
    %c0_i32_0 = arith.constant 0 : i32
    %c0_i32_1 = arith.constant 0 : i32
    return %c0_i32, %c0_i32_0 : i32, i32
  }
  func.func @transform_3(%arg0: i32) -> (i32, i32) {
    %c0_i32 = arith.constant 0 : i32
    %c0_i32_0 = arith.constant 0 : i32
    %c0_i32_1 = arith.constant 0 : i32
    return %c0_i32, %c0_i32_0 : i32, i32
  }
  func.func @transform_4(%arg0: i32) -> (i32, i32) {
    %c0_i32 = arith.constant 0 : i32
    %c0_i32_0 = arith.constant 0 : i32
    %c0_i32_1 = arith.constant 0 : i32
    return %c0_i32, %c0_i32_0 : i32, i32
  }
  func.func @transform_5(%arg0: i32) -> (i32, i32) {
    %c0_i32 = arith.constant 0 : i32
    %c0_i32_0 = arith.constant 0 : i32
    %c0_i32_1 = arith.constant 0 : i32
    return %c0_i32, %c0_i32_0 : i32, i32
  }
  func.func @transform_6(%arg0: i32) -> (i32, i32) {
    %c0_i32 = arith.constant 0 : i32
    %c0_i32_0 = arith.constant 0 : i32
    %c0_i32_1 = arith.constant 0 : i32
    return %c0_i32, %c0_i32_0 : i32, i32
  }
  func.func @transform_7(%arg0: i32) -> (i32, i32, i32) {
    %c0_i32 = arith.constant 0 : i32
    %c0_i32_0 = arith.constant 0 : i32
    %c0_i32_1 = arith.constant 0 : i32
    %c0_i32_2 = arith.constant 0 : i32
    return %c0_i32, %c0_i32_0, %c0_i32_1 : i32, i32, i32
  }
  func.func @transform_8(%arg0: i32) -> (i32, i32) {
    %c0_i32 = arith.constant 0 : i32
    %c0_i32_0 = arith.constant 0 : i32
    %c0_i32_1 = arith.constant 0 : i32
    return %c0_i32, %c0_i32_0 : i32, i32
  }
  func.func @transform_9(%arg0: i32) -> (i32, i32) {
    %c0_i32 = arith.constant 0 : i32
    %c0_i32_0 = arith.constant 0 : i32
    %c0_i32_1 = arith.constant 0 : i32
    return %c0_i32, %c0_i32_0 : i32, i32
  }
  func.func @transform_10(%arg0: i32) -> (i32, i32) {
    %c0_i32 = arith.constant 0 : i32
    %c0_i32_0 = arith.constant 0 : i32
    %c0_i32_1 = arith.constant 0 : i32
    return %c0_i32, %c0_i32_0 : i32, i32
  }
  func.func @transform_11(%arg0: i32) -> (i32, i32) {
    %c0_i32 = arith.constant 0 : i32
    %c0_i32_0 = arith.constant 0 : i32
    %c0_i32_1 = arith.constant 0 : i32
    return %c0_i32, %c0_i32_0 : i32, i32
  }
  func.func @transform_12(%arg0: i32) -> (i32, i32) {
    %c0_i32 = arith.constant 0 : i32
    %c0_i32_0 = arith.constant 0 : i32
    %c0_i32_1 = arith.constant 0 : i32
    return %c0_i32, %c0_i32_0 : i32, i32
  }
  func.func @transform_13(%arg0: i32) -> (i32, i32, i32) {
    %c0_i32 = arith.constant 0 : i32
    %c0_i32_0 = arith.constant 0 : i32
    %c0_i32_1 = arith.constant 0 : i32
    %c0_i32_2 = arith.constant 0 : i32
    return %c0_i32, %c0_i32_0, %c0_i32_1 : i32, i32, i32
  }
  func.func @transform_14(%arg0: i32) -> (i32, i32) {
    %c0_i32 = arith.constant 0 : i32
    %c0_i32_0 = arith.constant 0 : i32
    %c0_i32_1 = arith.constant 0 : i32
    return %c0_i32, %c0_i32_0 : i32, i32
  }
  func.func @transform_15(%arg0: i32) -> (i32, i32) {
    %c0_i32 = arith.constant 0 : i32
    %c0_i32_0 = arith.constant 0 : i32
    %c0_i32_1 = arith.constant 0 : i32
    return %c0_i32, %c0_i32_0 : i32, i32
  }
  func.func @transform_16(%arg0: i32) -> (i32, i32) {
    %c0_i32 = arith.constant 0 : i32
    %c0_i32_0 = arith.constant 0 : i32
    %c0_i32_1 = arith.constant 0 : i32
    return %c0_i32, %c0_i32_0 : i32, i32
  }
  func.func @transform_17(%arg0: i32) -> (i32, i32, i32) {
    %c0_i32 = arith.constant 0 : i32
    %c0_i32_0 = arith.constant 0 : i32
    %c0_i32_1 = arith.constant 0 : i32
    return %arg0, %c0_i32, %c0_i32_0 : i32, i32, i32
  }
}

</mosaic_0001>

<llo_original>
// kernel: mnist_classifier_forward.1
$region0: #{mnist_classifier_forward.1}
  #allocation0 [shape = 'u32[]', space=smem, size = 0x4, offset = 0x4, fixed_abs, tag = 'smem constant byte address 0x4 - core index']
  #allocation1 [shape = 'u32[144,128]{1,0:T(1,128)}', space=vmem, size = 0x12000, scoped, tag = 'internal scratch']
  %s0 = inlined_call_operand.vmem [shape: f32[2,28,28], index: 0, kind: input, shape index: {}]
  %s1 = inlined_call_operand.vmem [shape: f32[5,28,120], index: 1, kind: input, shape index: {}]
  %s2 = inlined_call_operand.vmem [shape: f32[1,120], index: 2, kind: input, shape index: {}]
  %s3 = inlined_call_operand.vmem [shape: f32[120,60], index: 3, kind: input, shape index: {}]
  %s4 = inlined_call_operand.vmem [shape: f32[120,60], index: 4, kind: input, shape index: {}]
  %s5 = inlined_call_operand.vmem [shape: f32[12,24], index: 5, kind: input, shape index: {}]
  %s6 = inlined_call_operand.vmem [shape: f32[12,24], index: 6, kind: input, shape index: {}]
  %s7 = inlined_call_operand.vmem [shape: f32[5,60,80], index: 7, kind: input, shape index: {}]
  %s8 = inlined_call_operand.hbm [shape: f32[1,80], index: 8, kind: input, shape index: {}]
  %s9 = inlined_call_operand.vmem [shape: f32[80,40], index: 9, kind: input, shape index: {}]
  %s10 = inlined_call_operand.vmem [shape: f32[80,40], index: 10, kind: input, shape index: {}]
  %s11 = inlined_call_operand.hbm [shape: f32[4,8], index: 11, kind: input, shape index: {}]
  %s12 = inlined_call_operand.hbm [shape: f32[4,8], index: 12, kind: input, shape index: {}]
  %s13 = inlined_call_operand.vmem [shape: f32[4,40,128], index: 13, kind: input, shape index: {}]
  %s14 = inlined_call_operand.vmem [shape: f32[1,128], index: 14, kind: input, shape index: {}]
  %s15 = inlined_call_operand.vmem [shape: f32[128,10], index: 15, kind: input, shape index: {}]
  %s16 = inlined_call_operand.vmem [shape: f32[1,10], index: 16, kind: input, shape index: {}]
  %s17 = inlined_call_operand.hbm [shape: f32[2,1,10], index: 17, kind: output, shape index: {}]
  %s18 = sld [smem:[#allocation0]]
  $region113: #{mnist_classifier_forward.1} parent=0
    _
  %s20 = ssub.s32 1, %s18
  %s21 = scalar_select 0, %s20, %s18
  $region1: #{mnist_classifier_forward.1} parent=0
    #allocation2 [shape = 'u8[512]{0}', space=vmem, size = 0x400, scoped, tag = 'input window, operand 8, single buffered']
    #allocation3 [shape = 's32[2]{0}', space=sflag, size = 0x8, scoped, tag = 'scoped memory for mnist_classifier_forward.1']
    #allocation4 [shape = 's32[2]{0}', space=sflag, size = 0x8, scoped, tag = 'scoped memory for mnist_classifier_forward.1']
    #allocation5 [shape = 'u8[2048]{0}', space=vmem, size = 0x800, scoped, tag = 'input window, operand 11, single buffered']
    #allocation6 [shape = 's32[1]{0}', space=sflag, size = 0x4, scoped, tag = 'scoped memory for mnist_classifier_forward.1']
    #allocation7 [shape = 'u8[2048]{0}', space=vmem, size = 0x800, scoped, tag = 'input window, operand 12, single buffered']
    #allocation8 [shape = 'u8[1024]{0}', space=vmem, size = 0x400, scoped, tag = 'output window, operand 0']
    %22 = vsyncpa [#allocation3], 0
    %23 = vsyncpa [#allocation6], 0
    %24 = vsyncpa [#allocation4], 0
    %s25 = scalar_lea.sflag [#allocation4], 1
    %26 = vsyncpa %s25, 0
    loop: start=0, step=1, limit=4
    $region2: #{mnist_classifier_forward.1} parent=1 // loop_pre_header
      _
    $region3: #{mnist_classifier_forward.1} parent=1 // loop_header
      %s28 = sphi 0, %s32
      %p29 = scmp.ge.s32.totalorder %s28, 4
      %s38 = sphi 0, %s40
      %s41 = sphi 0, %s38
      %s42 = sphi 0, %s41
      %s58 = sphi 0, %s42
      %s62 = sphi 0, %s62
      %s64 = sphi 0, %s62
      %s65 = sphi 0, %s64
      %s79 = sphi 0, %s65
      %s83 = sphi 0, %s83
      %s85 = sphi 0, %s83
      %s86 = sphi 0, %s85
      %s100 = sphi 0, %s86
      %s104 = sphi 0, %s104
      %s106 = sphi 0, %s104
      %s107 = sphi 0, %s106
      %s121 = sphi 0, %s107
      %s125 = sphi 0, %s125
      %s127 = sphi 0, %s125
      %s128 = sphi 0, %s127
      %s142 = sphi 0, %s128
      %s146 = sphi 0, %s146
      %s148 = sphi 0, %s146
      %s149 = sphi 0, %s148
      %s163 = sphi 0, %s149
      %s167 = sphi 0, %s167
      %s169 = sphi 0, %s167
      %s170 = sphi 0, %s169
      %s184 = sphi 0, %s170
      %s188 = sphi 0, %s188
      %s190 = sphi 0, %s188
      %s191 = sphi 0, %s190
      %s205 = sphi 0, %s191
      %s209 = sphi 0, %s209
      %s211 = sphi 0, %s209
      %s212 = sphi 0, %s211
      %s226 = sphi 0, %s212
      %s230 = sphi 0, %s230
      %s232 = sphi 0, %s230
      %s233 = sphi 0, %s232
      %s247 = sphi 0, %s233
      %s251 = sphi 0, %s251
      %s253 = sphi 0, %s251
      %s254 = sphi 0, %s253
      %s268 = sphi 0, %s254
      %s272 = sphi 0, %s272
      %s274 = sphi 0, %s272
      %s275 = sphi 0, %s274
      %s289 = sphi 0, %s275
      %s293 = sphi 0, %s293
      %s295 = sphi 0, %s293
      %s296 = sphi 0, %s295
      %s310 = sphi 0, %s296
      %s314 = sphi 0, %s314
      %s316 = sphi 0, %s314
      %s317 = sphi 0, %s316
      %s331 = sphi 0, %s317
      %s335 = sphi 0, %s335
      %s337 = sphi 0, %s335
      %s338 = sphi 0, %s337
      %s352 = sphi 0, %s338
      %s356 = sphi 0, %s356
      %s358 = sphi 0, %s356
      %s359 = sphi 0, %s358
      %s373 = sphi 0, %s359
      %s377 = sphi 0, %s377
      %s379 = sphi 0, %s377
      %s380 = sphi 0, %s379
      %s394 = sphi 0, %s380
      %s400 = sphi 0, %s402
      %s403 = sphi 0, %s400
      %s404 = sphi 0, %s403
      %s420 = sphi 0, %s404
    $region4: #{mnist_classifier_forward.1} parent=1 // loop_header_branch
      %31 = sbr.rel (%p29) target = $region8
    $region5: #{mnist_classifier_forward.1} parent=1 // loop_body
      %s33 = ssub.s32 %s28, 1
      %s34 = ssub.s32 %s28, 2
      %s35 = sadd.s32 %s28, 1
      %s36 = ssub.s32 %s28, %s35
      %p37 = scmp.eq.s32.totalorder %s36, 0
      %s39 = sadd.s32 %s38, 1
      %s40 = scalar_select %p37, %s38, %s39
      %p43 = pneg %p37
      %p44 = scmp.eq.s32.totalorder %s28, 1
      %p45 = por %p43, %p44
      %p46 = scmp.ne.s32.totalorder %s38, %s41
      %p47 = scmp.eq.s32.totalorder %s28, 0
      %p48 = por %p46, %p47
      %p49 = scmp.ne.s32.totalorder %s38, %s41
      %p50 = scmp.eq.s32.totalorder %s33, 1
      %p51 = por %p49, %p50
      %p52 = scmp.ne.s32.totalorder %s41, %s42
      %p53 = scmp.eq.s32.totalorder %s33, 0
      %p54 = por %p52, %p53
      %p55 = scmp.ne.s32.totalorder %s41, %s42
      %p56 = scmp.eq.s32.totalorder %s34, 1
      %p57 = por %p55, %p56
      %p59 = scmp.ne.s32.totalorder %s42, %s58
      %p60 = scmp.eq.s32.totalorder %s34, 0
      %p61 = por %p59, %p60
      %s63 = sadd.s32 %s62, 1
      %p66 = scmp.eq.s32.totalorder %s28, 1
      %p67 = scmp.ne.s32.totalorder %s62, %s64
      %p68 = scmp.eq.s32.totalorder %s28, 0
      %p69 = por %p67, %p68
      %p70 = scmp.ne.s32.totalorder %s62, %s64
      %p71 = scmp.eq.s32.totalorder %s33, 1
      %p72 = por %p70, %p71
      %p73 = scmp.ne.s32.totalorder %s64, %s65
      %p74 = scmp.eq.s32.totalorder %s33, 0
      %p75 = por %p73, %p74
      %p76 = scmp.ne.s32.totalorder %s64, %s65
      %p77 = scmp.eq.s32.totalorder %s34, 1
      %p78 = por %p76, %p77
      %p80 = scmp.ne.s32.totalorder %s65, %s79
      %p81 = scmp.eq.s32.totalorder %s34, 0
      %p82 = por %p80, %p81
      %s84 = sadd.s32 %s83, 1
      %p87 = scmp.eq.s32.totalorder %s28, 1
      %p88 = scmp.ne.s32.totalorder %s83, %s85
      %p89 = scmp.eq.s32.totalorder %s28, 0
      %p90 = por %p88, %p89
      %p91 = scmp.ne.s32.totalorder %s83, %s85
      %p92 = scmp.eq.s32.totalorder %s33, 1
      %p93 = por %p91, %p92
      %p94 = scmp.ne.s32.totalorder %s85, %s86
      %p95 = scmp.eq.s32.totalorder %s33, 0
      %p96 = por %p94, %p95
      %p97 = scmp.ne.s32.totalorder %s85, %s86
      %p98 = scmp.eq.s32.totalorder %s34, 1
      %p99 = por %p97, %p98
      %p101 = scmp.ne.s32.totalorder %s86, %s100
      %p102 = scmp.eq.s32.totalorder %s34, 0
      %p103 = por %p101, %p102
      %s105 = sadd.s32 %s104, 1
      %p108 = scmp.eq.s32.totalorder %s28, 1
      %p109 = scmp.ne.s32.totalorder %s104, %s106
      %p110 = scmp.eq.s32.totalorder %s28, 0
      %p111 = por %p109, %p110
      %p112 = scmp.ne.s32.totalorder %s104, %s106
      %p113 = scmp.eq.s32.totalorder %s33, 1
      %p114 = por %p112, %p113
      %p115 = scmp.ne.s32.totalorder %s106, %s107
      %p116 = scmp.eq.s32.totalorder %s33, 0
      %p117 = por %p115, %p116
      %p118 = scmp.ne.s32.totalorder %s106, %s107
      %p119 = scmp.eq.s32.totalorder %s34, 1
      %p120 = por %p118, %p119
      %p122 = scmp.ne.s32.totalorder %s107, %s121
      %p123 = scmp.eq.s32.totalorder %s34, 0
      %p124 = por %p122, %p123
      %s126 = sadd.s32 %s125, 1
      %p129 = scmp.eq.s32.totalorder %s28, 1
      %p130 = scmp.ne.s32.totalorder %s125, %s127
      %p131 = scmp.eq.s32.totalorder %s28, 0
      %p132 = por %p130, %p131
      %p133 = scmp.ne.s32.totalorder %s125, %s127
      %p134 = scmp.eq.s32.totalorder %s33, 1
      %p135 = por %p133, %p134
      %p136 = scmp.ne.s32.totalorder %s127, %s128
      %p137 = scmp.eq.s32.totalorder %s33, 0
      %p138 = por %p136, %p137
      %p139 = scmp.ne.s32.totalorder %s127, %s128
      %p140 = scmp.eq.s32.totalorder %s34, 1
      %p141 = por %p139, %p140
      %p143 = scmp.ne.s32.totalorder %s128, %s142
      %p144 = scmp.eq.s32.totalorder %s34, 0
      %p145 = por %p143, %p144
      %s147 = sadd.s32 %s146, 1
      %p150 = scmp.eq.s32.totalorder %s28, 1
      %p151 = scmp.ne.s32.totalorder %s146, %s148
      %p152 = scmp.eq.s32.totalorder %s28, 0
      %p153 = por %p151, %p152
      %p154 = scmp.ne.s32.totalorder %s146, %s148
      %p155 = scmp.eq.s32.totalorder %s33, 1
      %p156 = por %p154, %p155
      %p157 = scmp.ne.s32.totalorder %s148, %s149
      %p158 = scmp.eq.s32.totalorder %s33, 0
      %p159 = por %p157, %p158
      %p160 = scmp.ne.s32.totalorder %s148, %s149
      %p161 = scmp.eq.s32.totalorder %s34, 1
      %p162 = por %p160, %p161
      %p164 = scmp.ne.s32.totalorder %s149, %s163
      %p165 = scmp.eq.s32.totalorder %s34, 0
      %p166 = por %p164, %p165
      %s168 = sadd.s32 %s167, 1
      %p171 = scmp.eq.s32.totalorder %s28, 1
      %p172 = scmp.ne.s32.totalorder %s167, %s169
      %p173 = scmp.eq.s32.totalorder %s28, 0
      %p174 = por %p172, %p173
      %p175 = scmp.ne.s32.totalorder %s167, %s169
      %p176 = scmp.eq.s32.totalorder %s33, 1
      %p177 = por %p175, %p176
      %p178 = scmp.ne.s32.totalorder %s169, %s170
      %p179 = scmp.eq.s32.totalorder %s33, 0
      %p180 = por %p178, %p179
      %p181 = scmp.ne.s32.totalorder %s169, %s170
      %p182 = scmp.eq.s32.totalorder %s34, 1
      %p183 = por %p181, %p182
      %p185 = scmp.ne.s32.totalorder %s170, %s184
      %p186 = scmp.eq.s32.totalorder %s34, 0
      %p187 = por %p185, %p186
      %s189 = sadd.s32 %s188, 1
      %p192 = scmp.eq.s32.totalorder %s28, 1
      %p193 = scmp.ne.s32.totalorder %s188, %s190
      %p194 = scmp.eq.s32.totalorder %s28, 0
      %p195 = por %p193, %p194
      %p196 = scmp.ne.s32.totalorder %s188, %s190
      %p197 = scmp.eq.s32.totalorder %s33, 1
      %p198 = por %p196, %p197
      %p199 = scmp.ne.s32.totalorder %s190, %s191
      %p200 = scmp.eq.s32.totalorder %s33, 0
      %p201 = por %p199, %p200
      %p202 = scmp.ne.s32.totalorder %s190, %s191
      %p203 = scmp.eq.s32.totalorder %s34, 1
      %p204 = por %p202, %p203
      %p206 = scmp.ne.s32.totalorder %s191, %s205
      %p207 = scmp.eq.s32.totalorder %s34, 0
      %p208 = por %p206, %p207
      %s210 = sadd.s32 %s209, 1
      %p213 = scmp.eq.s32.totalorder %s28, 1
      %p214 = scmp.ne.s32.totalorder %s209, %s211
      %p215 = scmp.eq.s32.totalorder %s28, 0
      %p216 = por %p214, %p215
      %p217 = scmp.ne.s32.totalorder %s209, %s211
      %p218 = scmp.eq.s32.totalorder %s33, 1
      %p219 = por %p217, %p218
      %p220 = scmp.ne.s32.totalorder %s211, %s212
      %p221 = scmp.eq.s32.totalorder %s33, 0
      %p222 = por %p220, %p221
      %p223 = scmp.ne.s32.totalorder %s211, %s212
      %p224 = scmp.eq.s32.totalorder %s34, 1
      %p225 = por %p223, %p224
      %p227 = scmp.ne.s32.totalorder %s212, %s226
      %p228 = scmp.eq.s32.totalorder %s34, 0
      %p229 = por %p227, %p228
      %s231 = sadd.s32 %s230, 1
      %p234 = scmp.eq.s32.totalorder %s28, 1
      %p235 = scmp.ne.s32.totalorder %s230, %s232
      %p236 = scmp.eq.s32.totalorder %s28, 0
      %p237 = por %p235, %p236
      %p238 = scmp.ne.s32.totalorder %s230, %s232
      %p239 = scmp.eq.s32.totalorder %s33, 1
      %p240 = por %p238, %p239
      %p241 = scmp.ne.s32.totalorder %s232, %s233
      %p242 = scmp.eq.s32.totalorder %s33, 0
      %p243 = por %p241, %p242
      %p244 = scmp.ne.s32.totalorder %s232, %s233
      %p245 = scmp.eq.s32.totalorder %s34, 1
      %p246 = por %p244, %p245
      %p248 = scmp.ne.s32.totalorder %s233, %s247
      %p249 = scmp.eq.s32.totalorder %s34, 0
      %p250 = por %p248, %p249
      %s252 = sadd.s32 %s251, 1
      %p255 = scmp.eq.s32.totalorder %s28, 1
      %p256 = scmp.ne.s32.totalorder %s251, %s253
      %p257 = scmp.eq.s32.totalorder %s28, 0
      %p258 = por %p256, %p257
      %p259 = scmp.ne.s32.totalorder %s251, %s253
      %p260 = scmp.eq.s32.totalorder %s33, 1
      %p261 = por %p259, %p260
      %p262 = scmp.ne.s32.totalorder %s253, %s254
      %p263 = scmp.eq.s32.totalorder %s33, 0
      %p264 = por %p262, %p263
      %p265 = scmp.ne.s32.totalorder %s253, %s254
      %p266 = scmp.eq.s32.totalorder %s34, 1
      %p267 = por %p265, %p266
      %p269 = scmp.ne.s32.totalorder %s254, %s268
      %p270 = scmp.eq.s32.totalorder %s34, 0
      %p271 = por %p269, %p270
      %s273 = sadd.s32 %s272, 1
      %p276 = scmp.eq.s32.totalorder %s28, 1
      %p277 = scmp.ne.s32.totalorder %s272, %s274
      %p278 = scmp.eq.s32.totalorder %s28, 0
      %p279 = por %p277, %p278
      %p280 = scmp.ne.s32.totalorder %s272, %s274
      %p281 = scmp.eq.s32.totalorder %s33, 1
      %p282 = por %p280, %p281
      %p283 = scmp.ne.s32.totalorder %s274, %s275
      %p284 = scmp.eq.s32.totalorder %s33, 0
      %p285 = por %p283, %p284
      %p286 = scmp.ne.s32.totalorder %s274, %s275
      %p287 = scmp.eq.s32.totalorder %s34, 1
      %p288 = por %p286, %p287
      %p290 = scmp.ne.s32.totalorder %s275, %s289
      %p291 = scmp.eq.s32.totalorder %s34, 0
      %p292 = por %p290, %p291
      %s294 = sadd.s32 %s293, 1
      %p297 = scmp.eq.s32.totalorder %s28, 1
      %p298 = scmp.ne.s32.totalorder %s293, %s295
      %p299 = scmp.eq.s32.totalorder %s28, 0
      %p300 = por %p298, %p299
      %p301 = scmp.ne.s32.totalorder %s293, %s295
      %p302 = scmp.eq.s32.totalorder %s33, 1
      %p303 = por %p301, %p302
      %p304 = scmp.ne.s32.totalorder %s295, %s296
      %p305 = scmp.eq.s32.totalorder %s33, 0
      %p306 = por %p304, %p305
      %p307 = scmp.ne.s32.totalorder %s295, %s296
      %p308 = scmp.eq.s32.totalorder %s34, 1
      %p309 = por %p307, %p308
      %p311 = scmp.ne.s32.totalorder %s296, %s310
      %p312 = scmp.eq.s32.totalorder %s34, 0
      %p313 = por %p311, %p312
      %s315 = sadd.s32 %s314, 1
      %p318 = scmp.eq.s32.totalorder %s28, 1
      %p319 = scmp.ne.s32.totalorder %s314, %s316
      %p320 = scmp.eq.s32.totalorder %s28, 0
      %p321 = por %p319, %p320
      %p322 = scmp.ne.s32.totalorder %s314, %s316
      %p323 = scmp.eq.s32.totalorder %s33, 1
      %p324 = por %p322, %p323
      %p325 = scmp.ne.s32.totalorder %s316, %s317
      %p326 = scmp.eq.s32.totalorder %s33, 0
      %p327 = por %p325, %p326
      %p328 = scmp.ne.s32.totalorder %s316, %s317
      %p329 = scmp.eq.s32.totalorder %s34, 1
      %p330 = por %p328, %p329
      %p332 = scmp.ne.s32.totalorder %s317, %s331
      %p333 = scmp.eq.s32.totalorder %s34, 0
      %p334 = por %p332, %p333
      %s336 = sadd.s32 %s335, 1
      %p339 = scmp.eq.s32.totalorder %s28, 1
      %p340 = scmp.ne.s32.totalorder %s335, %s337
      %p341 = scmp.eq.s32.totalorder %s28, 0
      %p342 = por %p340, %p341
      %p343 = scmp.ne.s32.totalorder %s335, %s337
      %p344 = scmp.eq.s32.totalorder %s33, 1
      %p345 = por %p343, %p344
      %p346 = scmp.ne.s32.totalorder %s337, %s338
      %p347 = scmp.eq.s32.totalorder %s33, 0
      %p348 = por %p346, %p347
      %p349 = scmp.ne.s32.totalorder %s337, %s338
      %p350 = scmp.eq.s32.totalorder %s34, 1
      %p351 = por %p349, %p350
      %p353 = scmp.ne.s32.totalorder %s338, %s352
      %p354 = scmp.eq.s32.totalorder %s34, 0
      %p355 = por %p353, %p354
      %s357 = sadd.s32 %s356, 1
      %p360 = scmp.eq.s32.totalorder %s28, 1
      %p361 = scmp.ne.s32.totalorder %s356, %s358
      %p362 = scmp.eq.s32.totalorder %s28, 0
      %p363 = por %p361, %p362
      %p364 = scmp.ne.s32.totalorder %s356, %s358
      %p365 = scmp.eq.s32.totalorder %s33, 1
      %p366 = por %p364, %p365
      %p367 = scmp.ne.s32.totalorder %s358, %s359
      %p368 = scmp.eq.s32.totalorder %s33, 0
      %p369 = por %p367, %p368
      %p370 = scmp.ne.s32.totalorder %s358, %s359
      %p371 = scmp.eq.s32.totalorder %s34, 1
      %p372 = por %p370, %p371
      %p374 = scmp.ne.s32.totalorder %s359, %s373
      %p375 = scmp.eq.s32.totalorder %s34, 0
      %p376 = por %p374, %p375
      %s378 = sadd.s32 %s377, 1
      %p381 = scmp.eq.s32.totalorder %s28, 1
      %p382 = scmp.ne.s32.totalorder %s377, %s379
      %p383 = scmp.eq.s32.totalorder %s28, 0
      %p384 = por %p382, %p383
      %p385 = scmp.ne.s32.totalorder %s377, %s379
      %p386 = scmp.eq.s32.totalorder %s33, 1
      %p387 = por %p385, %p386
      %p388 = scmp.ne.s32.totalorder %s379, %s380
      %p389 = scmp.eq.s32.totalorder %s33, 0
      %p390 = por %p388, %p389
      %p391 = scmp.ne.s32.totalorder %s379, %s380
      %p392 = scmp.eq.s32.totalorder %s34, 1
      %p393 = por %p391, %p392
      %p395 = scmp.ne.s32.totalorder %s380, %s394
      %p396 = scmp.eq.s32.totalorder %s34, 0
      %p397 = por %p395, %p396
      %s398 = ssub.s32 %s28, %s35
      %p399 = scmp.eq.s32.totalorder %s398, 0
      %s401 = sadd.s32 %s400, 1
      %s402 = scalar_select %p399, %s400, %s401
      %p405 = pneg %p399
      %p406 = scmp.eq.s32.totalorder %s28, 1
      %p407 = por %p405, %p406
      %p408 = scmp.ne.s32.totalorder %s400, %s403
      %p409 = scmp.eq.s32.totalorder %s28, 0
      %p410 = por %p408, %p409
      %p411 = scmp.ne.s32.totalorder %s400, %s403
      %p412 = scmp.eq.s32.totalorder %s33, 1
      %p413 = por %p411, %p412
      %p414 = scmp.ne.s32.totalorder %s403, %s404
      %p415 = scmp.eq.s32.totalorder %s33, 0
      %p416 = por %p414, %p415
      %p417 = scmp.ne.s32.totalorder %s403, %s404
      %p418 = scmp.eq.s32.totalorder %s34, 1
      %p419 = por %p417, %p418
      %p421 = scmp.ne.s32.totalorder %s404, %s420
      %p422 = scmp.eq.s32.totalorder %s34, 0
      %p423 = por %p421, %p422
      %p424 = scmp.le.s32.totalorder 1, %s28
      %p425 = scmp.lt.s32.totalorder %s28, 3
      %p426 = pnand %p424, %p425
      %p427 = pneg %p426
      // Predicated region
      $region9: #{mnist_classifier_forward.1} parent=5 // pred_check
        _
      $region10: #{mnist_classifier_forward.1} parent=5 // pred_check_branch
        %429 = sbr.rel (%p426) target = $region12
      $region11: #{mnist_classifier_forward.1} parent=5 // pred_region
        %s430 = ssub.s32 %s28, 1
        // Predicated region
        $region13: #{mnist_classifier_forward.1} parent=11 // pred_check
          %p431 = pneg %p75
        $region14: #{mnist_classifier_forward.1} parent=11 // pred_check_branch
          %433 = sbr.rel (%p431) target = $region16
        $region15: #{mnist_classifier_forward.1} parent=11 // pred_region
          _
        $region16: #{mnist_classifier_forward.1} parent=11 // pred_fallthru
          _
        // Predicated region
        $region17: #{mnist_classifier_forward.1} parent=11 // pred_check
          %p434 = pneg %p96
        $region18: #{mnist_classifier_forward.1} parent=11 // pred_check_branch
          %436 = sbr.rel (%p434) target = $region20
        $region19: #{mnist_classifier_forward.1} parent=11 // pred_region
          _
        $region20: #{mnist_classifier_forward.1} parent=11 // pred_fallthru
          _
        // Predicated region
        $region21: #{mnist_classifier_forward.1} parent=11 // pred_check
          %p437 = pneg %p117
        $region22: #{mnist_classifier_forward.1} parent=11 // pred_check_branch
          %439 = sbr.rel (%p437) target = $region24
        $region23: #{mnist_classifier_forward.1} parent=11 // pred_region
          _
        $region24: #{mnist_classifier_forward.1} parent=11 // pred_fallthru
          _
        // Predicated region
        $region25: #{mnist_classifier_forward.1} parent=11 // pred_check
          %p440 = pneg %p138
        $region26: #{mnist_classifier_forward.1} parent=11 // pred_check_branch
          %442 = sbr.rel (%p440) target = $region28
        $region27: #{mnist_classifier_forward.1} parent=11 // pred_region
          _
        $region28: #{mnist_classifier_forward.1} parent=11 // pred_fallthru
          _
        // Predicated region
        $region29: #{mnist_classifier_forward.1} parent=11 // pred_check
          %p443 = pneg %p159
        $region30: #{mnist_classifier_forward.1} parent=11 // pred_check_branch
          %445 = sbr.rel (%p443) target = $region32
        $region31: #{mnist_classifier_forward.1} parent=11 // pred_region
          _
        $region32: #{mnist_classifier_forward.1} parent=11 // pred_fallthru
          _
        // Predicated region
        $region33: #{mnist_classifier_forward.1} parent=11 // pred_check
          %p446 = pneg %p180
        $region34: #{mnist_classifier_forward.1} parent=11 // pred_check_branch
          %448 = sbr.rel (%p446) target = $region36
        $region35: #{mnist_classifier_forward.1} parent=11 // pred_region
          _
        $region36: #{mnist_classifier_forward.1} parent=11 // pred_fallthru
          _
        // Predicated region
        $region37: #{mnist_classifier_forward.1} parent=11 // pred_check
          %p449 = pneg %p201
        $region38: #{mnist_classifier_forward.1} parent=11 // pred_check_branch
          %451 = sbr.rel (%p449) target = $region40
        $region39: #{mnist_classifier_forward.1} parent=11 // pred_region
          _
        $region40: #{mnist_classifier_forward.1} parent=11 // pred_fallthru
          _
        // Predicated region
        $region41: #{mnist_classifier_forward.1} parent=11 // pred_check
          %p452 = pneg %p222
        $region42: #{mnist_classifier_forward.1} parent=11 // pred_check_branch
          %454 = sbr.rel (%p452) target = $region44
        $region43: #{mnist_classifier_forward.1} parent=11 // pred_region
          %s456 = ssub.s32 16, 16
          %457 = vsyncadd [#allocation3], %s456
          %s459 = sshll.u32 [#allocation2], 4
          %s460 = int_to_ptr.vmem [resolvable:$true] %s459
          %462 = dma.hbm_to_vmem [thread:$0]  %s8, 16, %s460, [#allocation3]
        $region44: #{mnist_classifier_forward.1} parent=11 // pred_fallthru
          _
        // Predicated region
        $region45: #{mnist_classifier_forward.1} parent=11 // pred_check
          %p463 = pneg %p243
        $region46: #{mnist_classifier_forward.1} parent=11 // pred_check_branch
          %465 = sbr.rel (%p463) target = $region48
        $region47: #{mnist_classifier_forward.1} parent=11 // pred_region
          _
        $region48: #{mnist_classifier_forward.1} parent=11 // pred_fallthru
          _
        // Predicated region
        $region49: #{mnist_classifier_forward.1} parent=11 // pred_check
          %p466 = pneg %p264
        $region50: #{mnist_classifier_forward.1} parent=11 // pred_check_branch
          %468 = sbr.rel (%p466) target = $region52
        $region51: #{mnist_classifier_forward.1} parent=11 // pred_region
          _
        $region52: #{mnist_classifier_forward.1} parent=11 // pred_fallthru
          _
        // Predicated region
        $region53: #{mnist_classifier_forward.1} parent=11 // pred_check
          %p469 = pneg %p285
        $region54: #{mnist_classifier_forward.1} parent=11 // pred_check_branch
          %471 = sbr.rel (%p469) target = $region56
        $region55: #{mnist_classifier_forward.1} parent=11 // pred_region
          %s473 = ssub.s32 64, 64
          %474 = vsyncadd [#allocation6], %s473
          %s476 = sshll.u32 [#allocation5], 4
          %s477 = int_to_ptr.vmem [resolvable:$true] %s476
          %479 = dma.hbm_to_vmem [thread:$0]  %s11, 64, %s477, [#allocation6]
        $region56: #{mnist_classifier_forward.1} parent=11 // pred_fallthru
          _
        // Predicated region
        $region57: #{mnist_classifier_forward.1} parent=11 // pred_check
          %p480 = pneg %p306
        $region58: #{mnist_classifier_forward.1} parent=11 // pred_check_branch
          %482 = sbr.rel (%p480) target = $region60
        $region59: #{mnist_classifier_forward.1} parent=11 // pred_region
          %s484 = ssub.s32 64, 64
          %485 = vsyncadd [#allocation6], %s484
          %s487 = sshll.u32 [#allocation7], 4
          %s488 = int_to_ptr.vmem [resolvable:$true] %s487
          %490 = dma.hbm_to_vmem [thread:$0]  %s12, 64, %s488, [#allocation6]
        $region60: #{mnist_classifier_forward.1} parent=11 // pred_fallthru
          _
        // Predicated region
        $region61: #{mnist_classifier_forward.1} parent=11 // pred_check
          %p491 = pneg %p327
        $region62: #{mnist_classifier_forward.1} parent=11 // pred_check_branch
          %493 = sbr.rel (%p491) target = $region64
        $region63: #{mnist_classifier_forward.1} parent=11 // pred_region
          _
        $region64: #{mnist_classifier_forward.1} parent=11 // pred_fallthru
          _
        // Predicated region
        $region65: #{mnist_classifier_forward.1} parent=11 // pred_check
          %p494 = pneg %p348
        $region66: #{mnist_classifier_forward.1} parent=11 // pred_check_branch
          %496 = sbr.rel (%p494) target = $region68
        $region67: #{mnist_classifier_forward.1} parent=11 // pred_region
          _
        $region68: #{mnist_classifier_forward.1} parent=11 // pred_fallthru
          _
        // Predicated region
        $region69: #{mnist_classifier_forward.1} parent=11 // pred_check
          %p497 = pneg %p369
        $region70: #{mnist_classifier_forward.1} parent=11 // pred_check_branch
          %499 = sbr.rel (%p497) target = $region72
        $region71: #{mnist_classifier_forward.1} parent=11 // pred_region
          _
        $region72: #{mnist_classifier_forward.1} parent=11 // pred_fallthru
          _
        // Predicated region
        $region73: #{mnist_classifier_forward.1} parent=11 // pred_check
          %p500 = pneg %p390
        $region74: #{mnist_classifier_forward.1} parent=11 // pred_check_branch
          %502 = sbr.rel (%p500) target = $region76
        $region75: #{mnist_classifier_forward.1} parent=11 // pred_region
          _
        $region76: #{mnist_classifier_forward.1} parent=11 // pred_fallthru
          _
      $region12: #{mnist_classifier_forward.1} parent=5 // pred_fallthru
        _
      %p503 = scmp.lt.s32.totalorder %s28, 2
      // Predicated region
      $region77: #{mnist_classifier_forward.1} parent=5 // pred_check
        %p504 = pneg %p503
      $region78: #{mnist_classifier_forward.1} parent=5 // pred_check_branch
        %506 = sbr.rel (%p504) target = $region80
      $region79: #{mnist_classifier_forward.1} parent=5 // pred_region
        // Predicated region
        $region81: #{mnist_classifier_forward.1} parent=79 // pred_check
          %p507 = pneg %p48
        $region82: #{mnist_classifier_forward.1} parent=79 // pred_check_branch
          %509 = sbr.rel (%p507) target = $region84
        $region83: #{mnist_classifier_forward.1} parent=79 // pred_region
          %p510 = scmp.lt.s32.totalorder %s28, 1
          %s511 = scalar_select %p510, %s28, 1
          %s512 = smul.addr %s511, 4
          %s513 = smul.addr %s512, 8
          %s514 = scalar_lea.vmem %s0, %s513
        $region84: #{mnist_classifier_forward.1} parent=79 // pred_fallthru
          _
      $region80: #{mnist_classifier_forward.1} parent=5 // pred_fallthru
        _
      %p515 = scmp.le.s32.totalorder 1, %s28
      %p516 = scmp.lt.s32.totalorder %s28, 3
      %p517 = pnand %p515, %p516
      %p518 = pneg %p517
      // Predicated region
      $region85: #{mnist_classifier_forward.1} parent=5 // pred_check
        _
      $region86: #{mnist_classifier_forward.1} parent=5 // pred_check_branch
        %520 = sbr.rel (%p517) target = $region88
      $region87: #{mnist_classifier_forward.1} parent=5 // pred_region
        %s521 = ssub.s32 %s28, 1
        // Predicated region
        $region89: #{mnist_classifier_forward.1} parent=87 // pred_check
          %p522 = pneg %p222
        $region90: #{mnist_classifier_forward.1} parent=87 // pred_check_branch
          %524 = sbr.rel (%p522) target = $region92
        $region91: #{mnist_classifier_forward.1} parent=87 // pred_region
          %525 = dma.done [#allocation3], 16
        $region92: #{mnist_classifier_forward.1} parent=87 // pred_fallthru
          _
        // Predicated region
        $region93: #{mnist_classifier_forward.1} parent=87 // pred_check
          %p526 = pneg %p285
        $region94: #{mnist_classifier_forward.1} parent=87 // pred_check_branch
          %528 = sbr.rel (%p526) target = $region96
        $region95: #{mnist_classifier_forward.1} parent=87 // pred_region
          %529 = dma.done [#allocation6], 64
        $region96: #{mnist_classifier_forward.1} parent=87 // pred_fallthru
          _
        // Predicated region
        $region97: #{mnist_classifier_forward.1} parent=87 // pred_check
          %p530 = pneg %p306
        $region98: #{mnist_classifier_forward.1} parent=87 // pred_check_branch
          %532 = sbr.rel (%p530) target = $region100
        $region99: #{mnist_classifier_forward.1} parent=87 // pred_region
          %533 = dma.done [#allocation6], 64
        $region100: #{mnist_classifier_forward.1} parent=87 // pred_fallthru
          _
        %p534 = scmp.lt.s32.totalorder %s33, 1
        %s535 = scalar_select %p534, %s33, 1
        %s536 = smul.addr %s535, 4
        %s537 = smul.addr %s536, 8
        %s538 = scalar_lea.vmem %s0, %s537
        %p539 = pneg %p54
        %p540 = pneg %p51
        %p541 = pneg %p75
        %p542 = pneg %p72
        %p543 = pneg %p96
        %p544 = pneg %p93
        %p545 = pneg %p117
        %p546 = pneg %p114
        %p547 = pneg %p138
        %p548 = pneg %p135
        %p549 = pneg %p159
        %p550 = pneg %p156
        %p551 = pneg %p180
        %p552 = pneg %p177
        %p553 = pneg %p201
        %p554 = pneg %p198
        %p555 = pneg %p222
        %p556 = pneg %p219
        %p557 = pneg %p243
        %p558 = pneg %p240
        %p559 = pneg %p264
        %p560 = pneg %p261
        %p561 = pneg %p285
        %p562 = pneg %p282
        %p563 = pneg %p306
        %p564 = pneg %p303
        %p565 = pneg %p327
        %p566 = pneg %p324
        %p567 = pneg %p348
        %p568 = pneg %p345
        %p569 = pneg %p369
        %p570 = pneg %p366
        %p571 = pneg %p390
        %p572 = pneg %p387
        %p573 = pneg %p416
        %p574 = pneg %p413
        %s575 = sand.u32 %s403, 1
        %s576 = scalar_lea.sflag [#allocation4], %s575
        %s577 = sand.u32 %s403, 1
        %s578 = scalar_lea.vmem [#allocation8], %s577
        %p579 = scmp.lt.s32.totalorder %s33, 1
        %s580 = scalar_select %p579, %s33, 1
        %s581 = smul.addr %s580, 4
        %s582 = smul.addr %s581, 8
        %s583 = scalar_lea.vmem %s0, %s582
        %v584 = vld [vmem:[%s583] sm:$0xff]
        %v585 = vld [vmem:[%s583 + $0x8] sm:$0xff]
        %v586 = vld [vmem:[%s583 + $0x10] sm:$0xff]
        %v587 = vld [vmem:[%s583 + $0x18] sm:$0xf]
        %v588 = vld [vmem:[%s2] sm:$0x1]
        %v589 = vld [vmem:[%s1] sm:$0xff]
        %v590 = vld [vmem:[%s1 + $0x8] sm:$0xff]
        %v591 = vld [vmem:[%s1 + $0x10] sm:$0xff]
        %v592 = vld [vmem:[%s1 + $0x18] sm:$0xf]
        %vm593 = vcmask 228352
        %v595 = vsel %vm593, %v584, 0
        %v598 = vsel %vm593, %v585, 0
        %v601 = vsel %vm593, %v586, 0
        %vm603 = vcmask 1043456
        %v605 = vsel %vm603, %v592, 0
        %607 = vmatprep.subr.mxu0 0.0
        %608 = vmatpush1.msra.mxu0 %v589
        %609 = vmatprep.subr.mxu0 0.0
        %610 = vmatpush1.msra.mxu0 %v590
        %611 = vmatprep.subr.mxu0 0.0
        %612 = vmatpush1.msra.mxu0 %v591
        %613 = vmatprep.subr.mxu0 0.0
        %614 = vmatpush1.msra.mxu0 %v605
        %615 = vmatprep.subr.mxu0 0.0
        %616 = vmatpush1.msra.mxu0 0.0
        %617 = vmatprep.subr.mxu0 0.0
        %618 = vmatpush1.msra.mxu0 0.0
        %619 = vmatprep.subr.mxu0 0.0
        %620 = vmatpush1.msra.mxu0 0.0
        %621 = vmatprep.subr.mxu0 0.0
        %622 = vmatpush1.msra.mxu0 0.0
        %623 = vmatprep.subr.mxu0 0.0
        %624 = vmatpush1.msra.mxu0 0.0
        %625 = vmatprep.subr.mxu0 0.0
        %626 = vmatpush1.msra.mxu0 0.0
        %627 = vmatprep.subr.mxu0 0.0
        %628 = vmatpush1.msra.mxu0 0.0
        %629 = vmatprep.subr.mxu0 0.0
        %630 = vmatpush1.msra.mxu0 0.0
        %631 = vmatprep.subr.mxu0 0.0
        %632 = vmatpush1.msra.mxu0 0.0
        %633 = vmatprep.subr.mxu0 0.0
        %634 = vmatpush1.msra.mxu0 0.0
        %635 = vmatprep.subr.mxu0 0.0
        %636 = vmatpush1.msra.mxu0 0.0
        %637 = vmatprep.subr.mxu0 0.0
        %638 = vmatpush1.msra.mxu0 0.0
        %639 = vmatprep.subr.mxu0 0.0
        %640 = vmatpush1.msra.mxu0 0.0
        %641 = vmatprep.subr.mxu0 0.0
        %642 = vmatpush1.msra.mxu0 0.0
        %643 = vmatprep.subr.mxu0 0.0
        %644 = vmatpush1.msra.mxu0 0.0
        %645 = vmatprep.subr.mxu0 0.0
        %646 = vmatpush1.msra.mxu0 0.0
        %647 = vmatprep.subr.mxu0 0.0
        %648 = vmatpush1.msra.mxu0 0.0
        %649 = vmatprep.subr.mxu0 0.0
        %650 = vmatpush1.msra.mxu0 0.0
        %651 = vmatprep.subr.mxu0 0.0
        %652 = vmatpush1.msra.mxu0 0.0
        %653 = vmatprep.subr.mxu0 0.0
        %654 = vmatpush1.msra.mxu0 0.0
        %655 = vmatprep.subr.mxu0 0.0
        %656 = vmatpush1.msra.mxu0 0.0
        %657 = vmatprep.subr.mxu0 0.0
        %658 = vmatpush1.msra.mxu0 0.0
        %659 = vmatprep.subr.mxu0 0.0
        %660 = vmatpush1.msra.mxu0 0.0
        %661 = vmatprep.subr.mxu0 0.0
        %662 = vmatpush1.msra.mxu0 0.0
        %663 = vmatprep.subr.mxu0 0.0
        %664 = vmatpush1.msra.mxu0 0.0
        %665 = vmatprep.subr.mxu0 0.0
        %666 = vmatpush1.msra.mxu0 0.0
        %667 = vmatprep.subr.mxu0 0.0
        %668 = vmatpush1.msra.mxu0 0.0
        %669 = vmatprep.subr.mxu0 0.0
        %670 = vmatpush1.msra.mxu0 0.0
        %671 = vmatprep.mubr.f32.mxu0 0.0
        %672 = vmatmul.mubr.f32.gmra.mrb[0].mxu0 %v595
        %v673 = vpop.f32.mrb[0].mxu0
        %v674 = vadd.f32 0.0, %v673
        %v675 = vpop.f32.mrb[0].mxu0
        %676 = vmatprep.mubr.f32.mxu0 0.0
        %677 = vmatmul.mubr.f32.gmra.mrb[0].mxu0 %v598
        %v678 = vpop.f32.mrb[0].mxu0
        %v679 = vadd.f32 0.0, %v678
        %v680 = vpop.f32.mrb[0].mxu0
        %681 = vmatprep.mubr.f32.mxu0 0.0
        %682 = vmatmul.mubr.f32.gmra.mrb[0].mxu0 %v601
        %v683 = vpop.f32.mrb[0].mxu0
        %v684 = vadd.f32 0.0, %v683
        %v685 = vpop.f32.mrb[0].mxu0
        %686 = vdwg.mxu0
        %v688 = vlaneseq
        %v689 = vshrl.u32 %v688, 7
        %v690 = vsub.s32 0, %v689
        %v691 = vrot.slane %v588, %v690
        %v693 = vadd.f32 %v691, %v674
        %v694 = vadd.f32 %v691, %v679
        %v695 = vadd.f32 %v691, %v684
        %s696 = scalar_lea.vmem %s1, 32
        %v697 = vld [vmem:[%s696] sm:$0xff]
        %v698 = vld [vmem:[%s696 + $0x8] sm:$0xff]
        %v699 = vld [vmem:[%s696 + $0x10] sm:$0xff]
        %v700 = vld [vmem:[%s696 + $0x18] sm:$0xf]
        %vm702 = vcmask 1046528
        %v703 = vrot.slane %v584, 1
        %v704 = vrot.slane %v585, 1
        %v705 = vsel %vm702, %v703, %v704
        %v706 = vrot.slane %v586, 1
        %v707 = vsel %vm702, %v704, %v706
        %v708 = vrot.slane %v587, 1
        %v709 = vsel %vm702, %v706, %v708
        %v710 = vsel %vm593, %v705, 0
        %v712 = vsel %vm593, %v707, 0
        %v714 = vsel %vm593, %v709, 0
        %v717 = vsel %vm603, %v700, 0
        %719 = vmatprep.subr.mxu0 0.0
        %720 = vmatpush1.msra.mxu0 %v697
        %721 = vmatprep.subr.mxu0 0.0
        %722 = vmatpush1.msra.mxu0 %v698
        %723 = vmatprep.subr.mxu0 0.0
        %724 = vmatpush1.msra.mxu0 %v699
        %725 = vmatprep.subr.mxu0 0.0
        %726 = vmatpush1.msra.mxu0 %v717
        %727 = vmatprep.subr.mxu0 0.0
        %728 = vmatpush1.msra.mxu0 0.0
        %729 = vmatprep.subr.mxu0 0.0
        %730 = vmatpush1.msra.mxu0 0.0
        %731 = vmatprep.subr.mxu0 0.0
        %732 = vmatpush1.msra.mxu0 0.0
        %733 = vmatprep.subr.mxu0 0.0
        %734 = vmatpush1.msra.mxu0 0.0
        %735 = vmatprep.subr.mxu0 0.0
        %736 = vmatpush1.msra.mxu0 0.0
        %737 = vmatprep.subr.mxu0 0.0
        %738 = vmatpush1.msra.mxu0 0.0
        %739 = vmatprep.subr.mxu0 0.0
        %740 = vmatpush1.msra.mxu0 0.0
        %741 = vmatprep.subr.mxu0 0.0
        %742 = vmatpush1.msra.mxu0 0.0
        %743 = vmatprep.subr.mxu0 0.0
        %744 = vmatpush1.msra.mxu0 0.0
        %745 = vmatprep.subr.mxu0 0.0
        %746 = vmatpush1.msra.mxu0 0.0
        %747 = vmatprep.subr.mxu0 0.0
        %748 = vmatpush1.msra.mxu0 0.0
        %749 = vmatprep.subr.mxu0 0.0
        %750 = vmatpush1.msra.mxu0 0.0
        %751 = vmatprep.subr.mxu0 0.0
        %752 = vmatpush1.msra.mxu0 0.0
        %753 = vmatprep.subr.mxu0 0.0
        %754 = vmatpush1.msra.mxu0 0.0
        %755 = vmatprep.subr.mxu0 0.0
        %756 = vmatpush1.msra.mxu0 0.0
        %757 = vmatprep.subr.mxu0 0.0
        %758 = vmatpush1.msra.mxu0 0.0
        %759 = vmatprep.subr.mxu0 0.0
        %760 = vmatpush1.msra.mxu0 0.0
        %761 = vmatprep.subr.mxu0 0.0
        %762 = vmatpush1.msra.mxu0 0.0
        %763 = vmatprep.subr.mxu0 0.0
        %764 = vmatpush1.msra.mxu0 0.0
        %765 = vmatprep.subr.mxu0 0.0
        %766 = vmatpush1.msra.mxu0 0.0
        %767 = vmatprep.subr.mxu0 0.0
        %768 = vmatpush1.msra.mxu0 0.0
        %769 = vmatprep.subr.mxu0 0.0
        %770 = vmatpush1.msra.mxu0 0.0
        %771 = vmatprep.subr.mxu0 0.0
        %772 = vmatpush1.msra.mxu0 0.0
        %773 = vmatprep.subr.mxu0 0.0
        %774 = vmatpush1.msra.mxu0 0.0
        %775 = vmatprep.subr.mxu0 0.0
        %776 = vmatpush1.msra.mxu0 0.0
        %777 = vmatprep.subr.mxu0 0.0
        %778 = vmatpush1.msra.mxu0 0.0
        %779 = vmatprep.subr.mxu0 0.0
        %780 = vmatpush1.msra.mxu0 0.0
        %781 = vmatprep.subr.mxu0 0.0
        %782 = vmatpush1.msra.mxu0 0.0
        %783 = vmatprep.mubr.f32.mxu0 0.0
        %784 = vmatmul.mubr.f32.gmra.mrb[0].mxu0 %v710
        %v785 = vpop.f32.mrb[0].mxu0
        %v786 = vadd.f32 0.0, %v785
        %v787 = vpop.f32.mrb[0].mxu0
        %788 = vmatprep.mubr.f32.mxu0 0.0
        %789 = vmatmul.mubr.f32.gmra.mrb[0].mxu0 %v712
        %v790 = vpop.f32.mrb[0].mxu0
        %v791 = vadd.f32 0.0, %v790
        %v792 = vpop.f32.mrb[0].mxu0
        %793 = vmatprep.mubr.f32.mxu0 0.0
        %794 = vmatmul.mubr.f32.gmra.mrb[0].mxu0 %v714
        %v795 = vpop.f32.mrb[0].mxu0
        %v796 = vadd.f32 0.0, %v795
        %v797 = vpop.f32.mrb[0].mxu0
        %798 = vdwg.mxu0
        %v799 = vadd.f32 %v693, %v786
        %v800 = vadd.f32 %v694, %v791
        %v801 = vadd.f32 %v695, %v796
        %s802 = scalar_lea.vmem %s1, 64
        %v803 = vld [vmem:[%s802] sm:$0xff]
        %v804 = vld [vmem:[%s802 + $0x8] sm:$0xff]
        %v805 = vld [vmem:[%s802 + $0x10] sm:$0xff]
        %v806 = vld [vmem:[%s802 + $0x18] sm:$0xf]
        %vm807 = vcmask 1045504
        %v808 = vrot.slane %v584, 2
        %v809 = vrot.slane %v585, 2
        %v810 = vsel %vm807, %v808, %v809
        %v811 = vrot.slane %v586, 2
        %v812 = vsel %vm807, %v809, %v811
        %v813 = vrot.slane %v587, 2
        %v814 = vsel %vm807, %v811, %v813
        %v815 = vsel %vm593, %v810, 0
        %v817 = vsel %vm593, %v812, 0
        %v819 = vsel %vm593, %v814, 0
        %v822 = vsel %vm603, %v806, 0
        %824 = vmatprep.subr.mxu0 0.0
        %825 = vmatpush1.msra.mxu0 %v803
        %826 = vmatprep.subr.mxu0 0.0
        %827 = vmatpush1.msra.mxu0 %v804
        %828 = vmatprep.subr.mxu0 0.0
        %829 = vmatpush1.msra.mxu0 %v805
        %830 = vmatprep.subr.mxu0 0.0
        %831 = vmatpush1.msra.mxu0 %v822
        %832 = vmatprep.subr.mxu0 0.0
        %833 = vmatpush1.msra.mxu0 0.0
        %834 = vmatprep.subr.mxu0 0.0
        %835 = vmatpush1.msra.mxu0 0.0
        %836 = vmatprep.subr.mxu0 0.0
        %837 = vmatpush1.msra.mxu0 0.0
        %838 = vmatprep.subr.mxu0 0.0
        %839 = vmatpush1.msra.mxu0 0.0
        %840 = vmatprep.subr.mxu0 0.0
        %841 = vmatpush1.msra.mxu0 0.0
        %842 = vmatprep.subr.mxu0 0.0
        %843 = vmatpush1.msra.mxu0 0.0
        %844 = vmatprep.subr.mxu0 0.0
        %845 = vmatpush1.msra.mxu0 0.0
        %846 = vmatprep.subr.mxu0 0.0
        %847 = vmatpush1.msra.mxu0 0.0
        %848 = vmatprep.subr.mxu0 0.0
        %849 = vmatpush1.msra.mxu0 0.0
        %850 = vmatprep.subr.mxu0 0.0
        %851 = vmatpush1.msra.mxu0 0.0
        %852 = vmatprep.subr.mxu0 0.0
        %853 = vmatpush1.msra.mxu0 0.0
        %854 = vmatprep.subr.mxu0 0.0
        %855 = vmatpush1.msra.mxu0 0.0
        %856 = vmatprep.subr.mxu0 0.0
        %857 = vmatpush1.msra.mxu0 0.0
        %858 = vmatprep.subr.mxu0 0.0
        %859 = vmatpush1.msra.mxu0 0.0
        %860 = vmatprep.subr.mxu0 0.0
        %861 = vmatpush1.msra.mxu0 0.0
        %862 = vmatprep.subr.mxu0 0.0
        %863 = vmatpush1.msra.mxu0 0.0
        %864 = vmatprep.subr.mxu0 0.0
        %865 = vmatpush1.msra.mxu0 0.0
        %866 = vmatprep.subr.mxu0 0.0
        %867 = vmatpush1.msra.mxu0 0.0
        %868 = vmatprep.subr.mxu0 0.0
        %869 = vmatpush1.msra.mxu0 0.0
        %870 = vmatprep.subr.mxu0 0.0
        %871 = vmatpush1.msra.mxu0 0.0
        %872 = vmatprep.subr.mxu0 0.0
        %873 = vmatpush1.msra.mxu0 0.0
        %874 = vmatprep.subr.mxu0 0.0
        %875 = vmatpush1.msra.mxu0 0.0
        %876 = vmatprep.subr.mxu0 0.0
        %877 = vmatpush1.msra.mxu0 0.0
        %878 = vmatprep.subr.mxu0 0.0
        %879 = vmatpush1.msra.mxu0 0.0
        %880 = vmatprep.subr.mxu0 0.0
        %881 = vmatpush1.msra.mxu0 0.0
        %882 = vmatprep.subr.mxu0 0.0
        %883 = vmatpush1.msra.mxu0 0.0
        %884 = vmatprep.subr.mxu0 0.0
        %885 = vmatpush1.msra.mxu0 0.0
        %886 = vmatprep.subr.mxu0 0.0
        %887 = vmatpush1.msra.mxu0 0.0
        %888 = vmatprep.mubr.f32.mxu0 0.0
        %889 = vmatmul.mubr.f32.gmra.mrb[0].mxu0 %v815
        %v890 = vpop.f32.mrb[0].mxu0
        %v891 = vadd.f32 0.0, %v890
        %v892 = vpop.f32.mrb[0].mxu0
        %893 = vmatprep.mubr.f32.mxu0 0.0
        %894 = vmatmul.mubr.f32.gmra.mrb[0].mxu0 %v817
        %v895 = vpop.f32.mrb[0].mxu0
        %v896 = vadd.f32 0.0, %v895
        %v897 = vpop.f32.mrb[0].mxu0
        %898 = vmatprep.mubr.f32.mxu0 0.0
        %899 = vmatmul.mubr.f32.gmra.mrb[0].mxu0 %v819
        %v900 = vpop.f32.mrb[0].mxu0
        %v901 = vadd.f32 0.0, %v900
        %v902 = vpop.f32.mrb[0].mxu0
        %903 = vdwg.mxu0
        %v904 = vadd.f32 %v799, %v891
        %v905 = vadd.f32 %v800, %v896
        %v906 = vadd.f32 %v801, %v901
        %s907 = scalar_lea.vmem %s1, 96
        %v908 = vld [vmem:[%s907] sm:$0xff]
        %v909 = vld [vmem:[%s907 + $0x8] sm:$0xff]
        %v910 = vld [vmem:[%s907 + $0x10] sm:$0xff]
        %v911 = vld [vmem:[%s907 + $0x18] sm:$0xf]
        %vm912 = vcmask 1044480
        %v913 = vrot.slane %v584, 3
        %v914 = vrot.slane %v585, 3
        %v915 = vsel %vm912, %v913, %v914
        %v916 = vrot.slane %v586, 3
        %v917 = vsel %vm912, %v914, %v916
        %v918 = vrot.slane %v587, 3
        %v919 = vsel %vm912, %v916, %v918
        %v920 = vsel %vm593, %v915, 0
        %v922 = vsel %vm593, %v917, 0
        %v924 = vsel %vm593, %v919, 0
        %v927 = vsel %vm603, %v911, 0
        %929 = vmatprep.subr.mxu0 0.0
        %930 = vmatpush1.msra.mxu0 %v908
        %931 = vmatprep.subr.mxu0 0.0
        %932 = vmatpush1.msra.mxu0 %v909
        %933 = vmatprep.subr.mxu0 0.0
        %934 = vmatpush1.msra.mxu0 %v910
        %935 = vmatprep.subr.mxu0 0.0
        %936 = vmatpush1.msra.mxu0 %v927
        %937 = vmatprep.subr.mxu0 0.0
        %938 = vmatpush1.msra.mxu0 0.0
        %939 = vmatprep.subr.mxu0 0.0
        %940 = vmatpush1.msra.mxu0 0.0
        %941 = vmatprep.subr.mxu0 0.0
        %942 = vmatpush1.msra.mxu0 0.0
        %943 = vmatprep.subr.mxu0 0.0
        %944 = vmatpush1.msra.mxu0 0.0
        %945 = vmatprep.subr.mxu0 0.0
        %946 = vmatpush1.msra.mxu0 0.0
        %947 = vmatprep.subr.mxu0 0.0
        %948 = vmatpush1.msra.mxu0 0.0
        %949 = vmatprep.subr.mxu0 0.0
        %950 = vmatpush1.msra.mxu0 0.0
        %951 = vmatprep.subr.mxu0 0.0
        %952 = vmatpush1.msra.mxu0 0.0
        %953 = vmatprep.subr.mxu0 0.0
        %954 = vmatpush1.msra.mxu0 0.0
        %955 = vmatprep.subr.mxu0 0.0
        %956 = vmatpush1.msra.mxu0 0.0
        %957 = vmatprep.subr.mxu0 0.0
        %958 = vmatpush1.msra.mxu0 0.0
        %959 = vmatprep.subr.mxu0 0.0
        %960 = vmatpush1.msra.mxu0 0.0
        %961 = vmatprep.subr.mxu0 0.0
        %962 = vmatpush1.msra.mxu0 0.0
        %963 = vmatprep.subr.mxu0 0.0
        %964 = vmatpush1.msra.mxu0 0.0
        %965 = vmatprep.subr.mxu0 0.0
        %966 = vmatpush1.msra.mxu0 0.0
        %967 = vmatprep.subr.mxu0 0.0
        %968 = vmatpush1.msra.mxu0 0.0
        %969 = vmatprep.subr.mxu0 0.0
        %970 = vmatpush1.msra.mxu0 0.0
        %971 = vmatprep.subr.mxu0 0.0
        %972 = vmatpush1.msra.mxu0 0.0
        %973 = vmatprep.subr.mxu0 0.0
        %974 = vmatpush1.msra.mxu0 0.0
        %975 = vmatprep.subr.mxu0 0.0
        %976 = vmatpush1.msra.mxu0 0.0
        %977 = vmatprep.subr.mxu0 0.0
        %978 = vmatpush1.msra.mxu0 0.0
        %979 = vmatprep.subr.mxu0 0.0
        %980 = vmatpush1.msra.mxu0 0.0
        %981 = vmatprep.subr.mxu0 0.0
        %982 = vmatpush1.msra.mxu0 0.0
        %983 = vmatprep.subr.mxu0 0.0
        %984 = vmatpush1.msra.mxu0 0.0
        %985 = vmatprep.subr.mxu0 0.0
        %986 = vmatpush1.msra.mxu0 0.0
        %987 = vmatprep.subr.mxu0 0.0
        %988 = vmatpush1.msra.mxu0 0.0
        %989 = vmatprep.subr.mxu0 0.0
        %990 = vmatpush1.msra.mxu0 0.0
        %991 = vmatprep.subr.mxu0 0.0
        %992 = vmatpush1.msra.mxu0 0.0
        %993 = vmatprep.mubr.f32.mxu0 0.0
        %994 = vmatmul.mubr.f32.gmra.mrb[0].mxu0 %v920
        %v995 = vpop.f32.mrb[0].mxu0
        %v996 = vadd.f32 0.0, %v995
        %v997 = vpop.f32.mrb[0].mxu0
        %998 = vmatprep.mubr.f32.mxu0 0.0
        %999 = vmatmul.mubr.f32.gmra.mrb[0].mxu0 %v922
        %v1000 = vpop.f32.mrb[0].mxu0
        %v1001 = vadd.f32 0.0, %v1000
        %v1002 = vpop.f32.mrb[0].mxu0
        %1003 = vmatprep.mubr.f32.mxu0 0.0
        %1004 = vmatmul.mubr.f32.gmra.mrb[0].mxu0 %v924
        %v1005 = vpop.f32.mrb[0].mxu0
        %v1006 = vadd.f32 0.0, %v1005
        %v1007 = vpop.f32.mrb[0].mxu0
        %1008 = vdwg.mxu0
        %v1009 = vadd.f32 %v904, %v996
        %v1010 = vadd.f32 %v905, %v1001
        %v1011 = vadd.f32 %v906, %v1006
        %s1012 = scalar_lea.vmem %s1, 128
        %v1013 = vld [vmem:[%s1012] sm:$0xff]
        %v1014 = vld [vmem:[%s1012 + $0x8] sm:$0xff]
        %v1015 = vld [vmem:[%s1012 + $0x10] sm:$0xff]
        %v1016 = vld [vmem:[%s1012 + $0x18] sm:$0xf]
        %v1017 = vrot.slane %v584, 4
        %v1018 = vrot.slane %v585, 4
        %v1019 = vsel %vm603, %v1017, %v1018
        %v1020 = vrot.slane %v586, 4
        %v1021 = vsel %vm603, %v1018, %v1020
        %v1022 = vrot.slane %v587, 4
        %v1023 = vsel %vm603, %v1020, %v1022
        %v1024 = vsel %vm593, %v1019, 0
        %v1026 = vsel %vm593, %v1021, 0
        %v1028 = vsel %vm593, %v1023, 0
        %v1031 = vsel %vm603, %v1016, 0
        %1033 = vmatprep.subr.mxu0 0.0
        %1034 = vmatpush1.msra.mxu0 %v1013
        %1035 = vmatprep.subr.mxu0 0.0
        %1036 = vmatpush1.msra.mxu0 %v1014
        %1037 = vmatprep.subr.mxu0 0.0
        %1038 = vmatpush1.msra.mxu0 %v1015
        %1039 = vmatprep.subr.mxu0 0.0
        %1040 = vmatpush1.msra.mxu0 %v1031
        %1041 = vmatprep.subr.mxu0 0.0
        %1042 = vmatpush1.msra.mxu0 0.0
        %1043 = vmatprep.subr.mxu0 0.0
        %1044 = vmatpush1.msra.mxu0 0.0
        %1045 = vmatprep.subr.mxu0 0.0
        %1046 = vmatpush1.msra.mxu0 0.0
        %1047 = vmatprep.subr.mxu0 0.0
        %1048 = vmatpush1.msra.mxu0 0.0
        %1049 = vmatprep.subr.mxu0 0.0
        %1050 = vmatpush1.msra.mxu0 0.0
        %1051 = vmatprep.subr.mxu0 0.0
        %1052 = vmatpush1.msra.mxu0 0.0
        %1053 = vmatprep.subr.mxu0 0.0
        %1054 = vmatpush1.msra.mxu0 0.0
        %1055 = vmatprep.subr.mxu0 0.0
        %1056 = vmatpush1.msra.mxu0 0.0
        %1057 = vmatprep.subr.mxu0 0.0
        %1058 = vmatpush1.msra.mxu0 0.0
        %1059 = vmatprep.subr.mxu0 0.0
        %1060 = vmatpush1.msra.mxu0 0.0
        %1061 = vmatprep.subr.mxu0 0.0
        %1062 = vmatpush1.msra.mxu0 0.0
        %1063 = vmatprep.subr.mxu0 0.0
        %1064 = vmatpush1.msra.mxu0 0.0
        %1065 = vmatprep.subr.mxu0 0.0
        %1066 = vmatpush1.msra.mxu0 0.0
        %1067 = vmatprep.subr.mxu0 0.0
        %1068 = vmatpush1.msra.mxu0 0.0
        %1069 = vmatprep.subr.mxu0 0.0
        %1070 = vmatpush1.msra.mxu0 0.0
        %1071 = vmatprep.subr.mxu0 0.0
        %1072 = vmatpush1.msra.mxu0 0.0
        %1073 = vmatprep.subr.mxu0 0.0
        %1074 = vmatpush1.msra.mxu0 0.0
        %1075 = vmatprep.subr.mxu0 0.0
        %1076 = vmatpush1.msra.mxu0 0.0
        %1077 = vmatprep.subr.mxu0 0.0
        %1078 = vmatpush1.msra.mxu0 0.0
        %1079 = vmatprep.subr.mxu0 0.0
        %1080 = vmatpush1.msra.mxu0 0.0
        %1081 = vmatprep.subr.mxu0 0.0
        %1082 = vmatpush1.msra.mxu0 0.0
        %1083 = vmatprep.subr.mxu0 0.0
        %1084 = vmatpush1.msra.mxu0 0.0
        %1085 = vmatprep.subr.mxu0 0.0
        %1086 = vmatpush1.msra.mxu0 0.0
        %1087 = vmatprep.subr.mxu0 0.0
        %1088 = vmatpush1.msra.mxu0 0.0
        %1089 = vmatprep.subr.mxu0 0.0
        %1090 = vmatpush1.msra.mxu0 0.0
        %1091 = vmatprep.subr.mxu0 0.0
        %1092 = vmatpush1.msra.mxu0 0.0
        %1093 = vmatprep.subr.mxu0 0.0
        %1094 = vmatpush1.msra.mxu0 0.0
        %1095 = vmatprep.subr.mxu0 0.0
        %1096 = vmatpush1.msra.mxu0 0.0
        %1097 = vmatprep.mubr.f32.mxu0 0.0
        %1098 = vmatmul.mubr.f32.gmra.mrb[0].mxu0 %v1024
        %v1099 = vpop.f32.mrb[0].mxu0
        %v1100 = vadd.f32 0.0, %v1099
        %v1101 = vpop.f32.mrb[0].mxu0
        %1102 = vmatprep.mubr.f32.mxu0 0.0
        %1103 = vmatmul.mubr.f32.gmra.mrb[0].mxu0 %v1026
        %v1104 = vpop.f32.mrb[0].mxu0
        %v1105 = vadd.f32 0.0, %v1104
        %v1106 = vpop.f32.mrb[0].mxu0
        %1107 = vmatprep.mubr.f32.mxu0 0.0
        %1108 = vmatmul.mubr.f32.gmra.mrb[0].mxu0 %v1028
        %v1109 = vpop.f32.mrb[0].mxu0
        %v1110 = vadd.f32 0.0, %v1109
        %v1111 = vpop.f32.mrb[0].mxu0
        %1112 = vdwg.mxu0
        %v1113 = vadd.f32 %v1009, %v1100
        %v1114 = vadd.f32 %v1010, %v1105
        %v1115 = vadd.f32 %v1011, %v1110
        %v1116 = vmax.f32 %v1113, 0.0
        %v1117 = vmax.f32 %v1114, 0.0
        %v1118 = vmax.f32 %v1115, 0.0
        %v1119 = vld [vmem:[%s3] sm:$0xff]
        %v1120 = vld [vmem:[%s3 + $0x8] sm:$0xff]
        %v1121 = vld [vmem:[%s3 + $0x10] sm:$0xff]
        %v1122 = vld [vmem:[%s3 + $0x18] sm:$0xff]
        %v1123 = vld [vmem:[%s3 + $0x20] sm:$0xff]
        %v1124 = vld [vmem:[%s3 + $0x28] sm:$0xff]
        %v1125 = vld [vmem:[%s3 + $0x30] sm:$0xff]
        %v1126 = vld [vmem:[%s3 + $0x38] sm:$0xff]
        %v1127 = vld [vmem:[%s3 + $0x40] sm:$0xff]
        %v1128 = vld [vmem:[%s3 + $0x48] sm:$0xff]
        %v1129 = vld [vmem:[%s3 + $0x50] sm:$0xff]
        %v1130 = vld [vmem:[%s3 + $0x58] sm:$0xff]
        %v1131 = vld [vmem:[%s3 + $0x60] sm:$0xff]
        %v1132 = vld [vmem:[%s3 + $0x68] sm:$0xff]
        %v1133 = vld [vmem:[%s3 + $0x70] sm:$0xff]
        %vm1134 = vcmask 982016
        %v1136 = vsel %vm1134, %v1116, 0
        %v1139 = vsel %vm1134, %v1117, 0
        %v1142 = vsel %vm1134, %v1118, 0
        %1144 = vmatprep.subr.mxu0 0.0
        %1145 = vmatpush1.msra.mxu0 %v1119
        %1146 = vmatprep.subr.mxu0 0.0
        %1147 = vmatpush1.msra.mxu0 %v1120
        %1148 = vmatprep.subr.mxu0 0.0
        %1149 = vmatpush1.msra.mxu0 %v1121
        %1150 = vmatprep.subr.mxu0 0.0
        %1151 = vmatpush1.msra.mxu0 %v1122
        %1152 = vmatprep.subr.mxu0 0.0
        %1153 = vmatpush1.msra.mxu0 %v1123
        %1154 = vmatprep.subr.mxu0 0.0
        %1155 = vmatpush1.msra.mxu0 %v1124
        %1156 = vmatprep.subr.mxu0 0.0
        %1157 = vmatpush1.msra.mxu0 %v1125
        %1158 = vmatprep.subr.mxu0 0.0
        %1159 = vmatpush1.msra.mxu0 %v1126
        %1160 = vmatprep.subr.mxu0 0.0
        %1161 = vmatpush1.msra.mxu0 %v1127
        %1162 = vmatprep.subr.mxu0 0.0
        %1163 = vmatpush1.msra.mxu0 %v1128
        %1164 = vmatprep.subr.mxu0 0.0
        %1165 = vmatpush1.msra.mxu0 %v1129
        %1166 = vmatprep.subr.mxu0 0.0
        %1167 = vmatpush1.msra.mxu0 %v1130
        %1168 = vmatprep.subr.mxu0 0.0
        %1169 = vmatpush1.msra.mxu0 %v1131
        %1170 = vmatprep.subr.mxu0 0.0
        %1171 = vmatpush1.msra.mxu0 %v1132
        %1172 = vmatprep.subr.mxu0 0.0
        %1173 = vmatpush1.msra.mxu0 %v1133
        %1174 = vmatprep.subr.mxu0 0.0
        %1175 = vmatpush1.msra.mxu0 0.0
        %1176 = vmatprep.subr.mxu0 0.0
        %1177 = vmatpush1.msra.mxu0 0.0
        %1178 = vmatprep.subr.mxu0 0.0
        %1179 = vmatpush1.msra.mxu0 0.0
        %1180 = vmatprep.subr.mxu0 0.0
        %1181 = vmatpush1.msra.mxu0 0.0
        %1182 = vmatprep.subr.mxu0 0.0
        %1183 = vmatpush1.msra.mxu0 0.0
        %1184 = vmatprep.subr.mxu0 0.0
        %1185 = vmatpush1.msra.mxu0 0.0
        %1186 = vmatprep.subr.mxu0 0.0
        %1187 = vmatpush1.msra.mxu0 0.0
        %1188 = vmatprep.subr.mxu0 0.0
        %1189 = vmatpush1.msra.mxu0 0.0
        %1190 = vmatprep.subr.mxu0 0.0
        %1191 = vmatpush1.msra.mxu0 0.0
        %1192 = vmatprep.subr.mxu0 0.0
        %1193 = vmatpush1.msra.mxu0 0.0
        %1194 = vmatprep.subr.mxu0 0.0
        %1195 = vmatpush1.msra.mxu0 0.0
        %1196 = vmatprep.subr.mxu0 0.0
        %1197 = vmatpush1.msra.mxu0 0.0
        %1198 = vmatprep.subr.mxu0 0.0
        %1199 = vmatpush1.msra.mxu0 0.0
        %1200 = vmatprep.subr.mxu0 0.0
        %1201 = vmatpush1.msra.mxu0 0.0
        %1202 = vmatprep.subr.mxu0 0.0
        %1203 = vmatpush1.msra.mxu0 0.0
        %1204 = vmatprep.subr.mxu0 0.0
        %1205 = vmatpush1.msra.mxu0 0.0
        %1206 = vmatprep.subr.mxu0 0.0
        %1207 = vmatpush1.msra.mxu0 0.0
        %1208 = vmatprep.mubr.f32.mxu0 0.0
        %1209 = vmatmul.mubr.f32.gmra.mrb[0].mxu0 %v1136
        %v1210 = vpop.f32.mrb[0].mxu0
        %v1211 = vadd.f32 0.0, %v1210
        %v1212 = vpop.f32.mrb[0].mxu0
        %1213 = vmatprep.mubr.f32.mxu0 0.0
        %1214 = vmatmul.mubr.f32.gmra.mrb[0].mxu0 %v1139
        %v1215 = vpop.f32.mrb[0].mxu0
        %v1216 = vadd.f32 0.0, %v1215
        %v1217 = vpop.f32.mrb[0].mxu0
        %1218 = vmatprep.mubr.f32.mxu0 0.0
        %1219 = vmatmul.mubr.f32.gmra.mrb[0].mxu0 %v1142
        %v1220 = vpop.f32.mrb[0].mxu0
        %v1221 = vadd.f32 0.0, %v1220
        %v1222 = vpop.f32.mrb[0].mxu0
        %1223 = vdwg.mxu0
        %v1224 = vld [vmem:[%s4] sm:$0xff]
        %v1225 = vld [vmem:[%s4 + $0x8] sm:$0xff]
        %v1226 = vld [vmem:[%s4 + $0x10] sm:$0xff]
        %v1227 = vld [vmem:[%s4 + $0x18] sm:$0xff]
        %v1228 = vld [vmem:[%s4 + $0x20] sm:$0xff]
        %v1229 = vld [vmem:[%s4 + $0x28] sm:$0xff]
        %v1230 = vld [vmem:[%s4 + $0x30] sm:$0xff]
        %v1231 = vld [vmem:[%s4 + $0x38] sm:$0xff]
        %v1232 = vld [vmem:[%s4 + $0x40] sm:$0xff]
        %v1233 = vld [vmem:[%s4 + $0x48] sm:$0xff]
        %v1234 = vld [vmem:[%s4 + $0x50] sm:$0xff]
        %v1235 = vld [vmem:[%s4 + $0x58] sm:$0xff]
        %v1236 = vld [vmem:[%s4 + $0x60] sm:$0xff]
        %v1237 = vld [vmem:[%s4 + $0x68] sm:$0xff]
        %v1238 = vld [vmem:[%s4 + $0x70] sm:$0xff]
        %1239 = vmatprep.subr.mxu0 0.0
        %1240 = vmatpush1.msra.mxu0 %v1224
        %1241 = vmatprep.subr.mxu0 0.0
        %1242 = vmatpush1.msra.mxu0 %v1225
        %1243 = vmatprep.subr.mxu0 0.0
        %1244 = vmatpush1.msra.mxu0 %v1226
        %1245 = vmatprep.subr.mxu0 0.0
        %1246 = vmatpush1.msra.mxu0 %v1227
        %1247 = vmatprep.subr.mxu0 0.0
        %1248 = vmatpush1.msra.mxu0 %v1228
        %1249 = vmatprep.subr.mxu0 0.0
        %1250 = vmatpush1.msra.mxu0 %v1229
        %1251 = vmatprep.subr.mxu0 0.0
        %1252 = vmatpush1.msra.mxu0 %v1230
        %1253 = vmatprep.subr.mxu0 0.0
        %1254 = vmatpush1.msra.mxu0 %v1231
        %1255 = vmatprep.subr.mxu0 0.0
        %1256 = vmatpush1.msra.mxu0 %v1232
        %1257 = vmatprep.subr.mxu0 0.0
        %1258 = vmatpush1.msra.mxu0 %v1233
        %1259 = vmatprep.subr.mxu0 0.0
        %1260 = vmatpush1.msra.mxu0 %v1234
        %1261 = vmatprep.subr.mxu0 0.0
        %1262 = vmatpush1.msra.mxu0 %v1235
        %1263 = vmatprep.subr.mxu0 0.0
        %1264 = vmatpush1.msra.mxu0 %v1236
        %1265 = vmatprep.subr.mxu0 0.0
        %1266 = vmatpush1.msra.mxu0 %v1237
        %1267 = vmatprep.subr.mxu0 0.0
        %1268 = vmatpush1.msra.mxu0 %v1238
        %1269 = vmatprep.subr.mxu0 0.0
        %1270 = vmatpush1.msra.mxu0 0.0
        %1271 = vmatprep.subr.mxu0 0.0
        %1272 = vmatpush1.msra.mxu0 0.0
        %1273 = vmatprep.subr.mxu0 0.0
        %1274 = vmatpush1.msra.mxu0 0.0
        %1275 = vmatprep.subr.mxu0 0.0
        %1276 = vmatpush1.msra.mxu0 0.0
        %1277 = vmatprep.subr.mxu0 0.0
        %1278 = vmatpush1.msra.mxu0 0.0
        %1279 = vmatprep.subr.mxu0 0.0
        %1280 = vmatpush1.msra.mxu0 0.0
        %1281 = vmatprep.subr.mxu0 0.0
        %1282 = vmatpush1.msra.mxu0 0.0
        %1283 = vmatprep.subr.mxu0 0.0
        %1284 = vmatpush1.msra.mxu0 0.0
        %1285 = vmatprep.subr.mxu0 0.0
        %1286 = vmatpush1.msra.mxu0 0.0
        %1287 = vmatprep.subr.mxu0 0.0
        %1288 = vmatpush1.msra.mxu0 0.0
        %1289 = vmatprep.subr.mxu0 0.0
        %1290 = vmatpush1.msra.mxu0 0.0
        %1291 = vmatprep.subr.mxu0 0.0
        %1292 = vmatpush1.msra.mxu0 0.0
        %1293 = vmatprep.subr.mxu0 0.0
        %1294 = vmatpush1.msra.mxu0 0.0
        %1295 = vmatprep.subr.mxu0 0.0
        %1296 = vmatpush1.msra.mxu0 0.0
        %1297 = vmatprep.subr.mxu0 0.0
        %1298 = vmatpush1.msra.mxu0 0.0
        %1299 = vmatprep.subr.mxu0 0.0
        %1300 = vmatpush1.msra.mxu0 0.0
        %1301 = vmatprep.subr.mxu0 0.0
        %1302 = vmatpush1.msra.mxu0 0.0
        %1303 = vmatprep.mubr.f32.mxu0 0.0
        %1304 = vmatmul.mubr.f32.gmra.mrb[0].mxu0 %v1136
        %v1305 = vpop.f32.mrb[0].mxu0
        %v1306 = vadd.f32 0.0, %v1305
        %v1307 = vpop.f32.mrb[0].mxu0
        %1308 = vmatprep.mubr.f32.mxu0 0.0
        %1309 = vmatmul.mubr.f32.gmra.mrb[0].mxu0 %v1139
        %v1310 = vpop.f32.mrb[0].mxu0
        %v1311 = vadd.f32 0.0, %v1310
        %v1312 = vpop.f32.mrb[0].mxu0
        %1313 = vmatprep.mubr.f32.mxu0 0.0
        %1314 = vmatmul.mubr.f32.gmra.mrb[0].mxu0 %v1142
        %v1315 = vpop.f32.mrb[0].mxu0
        %v1316 = vadd.f32 0.0, %v1315
        %v1317 = vpop.f32.mrb[0].mxu0
        %1318 = vdwg.mxu0
        %v1319 = vmax.f32 %v1211, %v1306
        %v1320 = vmax.f32 %v1216, %v1311
        %v1321 = vmax.f32 %v1221, %v1316
        %v1322 = vld [vmem:[%s5] sm:$0xff]
        %v1323 = vld [vmem:[%s5 + $0x8] sm:$0xf]
        %vm1324 = vcmask 195584
        %v1326 = vsel %vm1324, %v1322, 0
        %v1329 = vsel %vm1324, %v1323, 0
        %1331 = vmatprep.subr.mxu0 0.0
        %1332 = vmatpush1.msra.mxu0 %v1319
        %1333 = vmatprep.subr.mxu0 0.0
        %1334 = vmatpush1.msra.mxu0 %v1320
        %1335 = vmatprep.subr.mxu0 0.0
        %1336 = vmatpush1.msra.mxu0 %v1321
        %1337 = vmatprep.subr.mxu0 0.0
        %1338 = vmatpush1.msra.mxu0 0.0
        %1339 = vmatprep.subr.mxu0 0.0
        %1340 = vmatpush1.msra.mxu0 0.0
        %1341 = vmatprep.subr.mxu0 0.0
        %1342 = vmatpush1.msra.mxu0 0.0
        %1343 = vmatprep.subr.mxu0 0.0
        %1344 = vmatpush1.msra.mxu0 0.0
        %1345 = vmatprep.subr.mxu0 0.0
        %1346 = vmatpush1.msra.mxu0 0.0
        %1347 = vmatprep.subr.mxu0 0.0
        %1348 = vmatpush1.msra.mxu0 0.0
        %1349 = vmatprep.subr.mxu0 0.0
        %1350 = vmatpush1.msra.mxu0 0.0
        %1351 = vmatprep.subr.mxu0 0.0
        %1352 = vmatpush1.msra.mxu0 0.0
        %1353 = vmatprep.subr.mxu0 0.0
        %1354 = vmatpush1.msra.mxu0 0.0
        %1355 = vmatprep.subr.mxu0 0.0
        %1356 = vmatpush1.msra.mxu0 0.0
        %1357 = vmatprep.subr.mxu0 0.0
        %1358 = vmatpush1.msra.mxu0 0.0
        %1359 = vmatprep.subr.mxu0 0.0
        %1360 = vmatpush1.msra.mxu0 0.0
        %1361 = vmatprep.subr.mxu0 0.0
        %1362 = vmatpush1.msra.mxu0 0.0
        %1363 = vmatprep.subr.mxu0 0.0
        %1364 = vmatpush1.msra.mxu0 0.0
        %1365 = vmatprep.subr.mxu0 0.0
        %1366 = vmatpush1.msra.mxu0 0.0
        %1367 = vmatprep.subr.mxu0 0.0
        %1368 = vmatpush1.msra.mxu0 0.0
        %1369 = vmatprep.subr.mxu0 0.0
        %1370 = vmatpush1.msra.mxu0 0.0
        %1371 = vmatprep.subr.mxu0 0.0
        %1372 = vmatpush1.msra.mxu0 0.0
        %1373 = vmatprep.subr.mxu0 0.0
        %1374 = vmatpush1.msra.mxu0 0.0
        %1375 = vmatprep.subr.mxu0 0.0
        %1376 = vmatpush1.msra.mxu0 0.0
        %1377 = vmatprep.subr.mxu0 0.0
        %1378 = vmatpush1.msra.mxu0 0.0
        %1379 = vmatprep.subr.mxu0 0.0
        %1380 = vmatpush1.msra.mxu0 0.0
        %1381 = vmatprep.subr.mxu0 0.0
        %1382 = vmatpush1.msra.mxu0 0.0
        %1383 = vmatprep.subr.mxu0 0.0
        %1384 = vmatpush1.msra.mxu0 0.0
        %1385 = vmatprep.subr.mxu0 0.0
        %1386 = vmatpush1.msra.mxu0 0.0
        %1387 = vmatprep.subr.mxu0 0.0
        %1388 = vmatpush1.msra.mxu0 0.0
        %1389 = vmatprep.subr.mxu0 0.0
        %1390 = vmatpush1.msra.mxu0 0.0
        %1391 = vmatprep.subr.mxu0 0.0
        %1392 = vmatpush1.msra.mxu0 0.0
        %1393 = vmatprep.subr.mxu0 0.0
        %1394 = vmatpush1.msra.mxu0 0.0
        %1395 = vmatprep.mubr.f32.mxu0 0.0
        %1396 = vmatmul.mubr.f32.gmra.mrb[0].mxu0 %v1326
        %v1397 = vpop.f32.mrb[0].mxu0
        %v1398 = vadd.f32 0.0, %v1397
        %v1399 = vpop.f32.mrb[0].mxu0
        %1400 = vmatprep.mubr.f32.mxu0 0.0
        %1401 = vmatmul.mubr.f32.gmra.mrb[0].mxu0 %v1329
        %v1402 = vpop.f32.mrb[0].mxu0
        %v1403 = vadd.f32 0.0, %v1402
        %v1404 = vpop.f32.mrb[0].mxu0
        %1405 = vdwg.mxu0
        %v1406 = vld [vmem:[%s6] sm:$0xff]
        %v1407 = vld [vmem:[%s6 + $0x8] sm:$0xf]
        %v1409 = vsel %vm1324, %v1406, 0
        %v1412 = vsel %vm1324, %v1407, 0
        %1414 = vmatprep.subr.mxu0 0.0
        %1415 = vmatpush1.msra.mxu0 %v1319
        %1416 = vmatprep.subr.mxu0 0.0
        %1417 = vmatpush1.msra.mxu0 %v1320
        %1418 = vmatprep.subr.mxu0 0.0
        %1419 = vmatpush1.msra.mxu0 %v1321
        %1420 = vmatprep.subr.mxu0 0.0
        %1421 = vmatpush1.msra.mxu0 0.0
        %1422 = vmatprep.subr.mxu0 0.0
        %1423 = vmatpush1.msra.mxu0 0.0
        %1424 = vmatprep.subr.mxu0 0.0
        %1425 = vmatpush1.msra.mxu0 0.0
        %1426 = vmatprep.subr.mxu0 0.0
        %1427 = vmatpush1.msra.mxu0 0.0
        %1428 = vmatprep.subr.mxu0 0.0
        %1429 = vmatpush1.msra.mxu0 0.0
        %1430 = vmatprep.subr.mxu0 0.0
        %1431 = vmatpush1.msra.mxu0 0.0
        %1432 = vmatprep.subr.mxu0 0.0
        %1433 = vmatpush1.msra.mxu0 0.0
        %1434 = vmatprep.subr.mxu0 0.0
        %1435 = vmatpush1.msra.mxu0 0.0
        %1436 = vmatprep.subr.mxu0 0.0
        %1437 = vmatpush1.msra.mxu0 0.0
        %1438 = vmatprep.subr.mxu0 0.0
        %1439 = vmatpush1.msra.mxu0 0.0
        %1440 = vmatprep.subr.mxu0 0.0
        %1441 = vmatpush1.msra.mxu0 0.0
        %1442 = vmatprep.subr.mxu0 0.0
        %1443 = vmatpush1.msra.mxu0 0.0
        %1444 = vmatprep.subr.mxu0 0.0
        %1445 = vmatpush1.msra.mxu0 0.0
        %1446 = vmatprep.subr.mxu0 0.0
        %1447 = vmatpush1.msra.mxu0 0.0
        %1448 = vmatprep.subr.mxu0 0.0
        %1449 = vmatpush1.msra.mxu0 0.0
        %1450 = vmatprep.subr.mxu0 0.0
        %1451 = vmatpush1.msra.mxu0 0.0
        %1452 = vmatprep.subr.mxu0 0.0
        %1453 = vmatpush1.msra.mxu0 0.0
        %1454 = vmatprep.subr.mxu0 0.0
        %1455 = vmatpush1.msra.mxu0 0.0
        %1456 = vmatprep.subr.mxu0 0.0
        %1457 = vmatpush1.msra.mxu0 0.0
        %1458 = vmatprep.subr.mxu0 0.0
        %1459 = vmatpush1.msra.mxu0 0.0
        %1460 = vmatprep.subr.mxu0 0.0
        %1461 = vmatpush1.msra.mxu0 0.0
        %1462 = vmatprep.subr.mxu0 0.0
        %1463 = vmatpush1.msra.mxu0 0.0
        %1464 = vmatprep.subr.mxu0 0.0
        %1465 = vmatpush1.msra.mxu0 0.0
        %1466 = vmatprep.subr.mxu0 0.0
        %1467 = vmatpush1.msra.mxu0 0.0
        %1468 = vmatprep.subr.mxu0 0.0
        %1469 = vmatpush1.msra.mxu0 0.0
        %1470 = vmatprep.subr.mxu0 0.0
        %1471 = vmatpush1.msra.mxu0 0.0
        %1472 = vmatprep.subr.mxu0 0.0
        %1473 = vmatpush1.msra.mxu0 0.0
        %1474 = vmatprep.subr.mxu0 0.0
        %1475 = vmatpush1.msra.mxu0 0.0
        %1476 = vmatprep.subr.mxu0 0.0
        %1477 = vmatpush1.msra.mxu0 0.0
        %1478 = vmatprep.mubr.f32.mxu0 0.0
        %1479 = vmatmul.mubr.f32.gmra.mrb[0].mxu0 %v1409
        %v1480 = vpop.f32.mrb[0].mxu0
        %v1481 = vadd.f32 0.0, %v1480
        %v1482 = vpop.f32.mrb[0].mxu0
        %1483 = vmatprep.mubr.f32.mxu0 0.0
        %1484 = vmatmul.mubr.f32.gmra.mrb[0].mxu0 %v1412
        %v1485 = vpop.f32.mrb[0].mxu0
        %v1486 = vadd.f32 0.0, %v1485
        %v1487 = vpop.f32.mrb[0].mxu0
        %1488 = vdwg.mxu0
        %v1489 = vmax.f32 %v1398, %v1481
        %v1490 = vmax.f32 %v1403, %v1486
        %v1491 = vld [vmem:[#allocation2] sm:$0x1]
        %v1492 = vld [vmem:[%s7] sm:$0xff]
        %v1493 = vld [vmem:[%s7 + $0x8] sm:$0xff]
        %v1494 = vld [vmem:[%s7 + $0x10] sm:$0xff]
        %v1495 = vld [vmem:[%s7 + $0x18] sm:$0xff]
        %v1496 = vld [vmem:[%s7 + $0x20] sm:$0xff]
        %v1497 = vld [vmem:[%s7 + $0x28] sm:$0xff]
        %v1498 = vld [vmem:[%s7 + $0x30] sm:$0xff]
        %v1499 = vld [vmem:[%s7 + $0x38] sm:$0xf]
        %vm1500 = vcmask 490496
        %v1502 = vsel %vm1500, %v1489, 0
        %v1505 = vsel %vm603, %v1499, 0
        %1507 = vmatprep.subr.mxu0 0.0
        %1508 = vmatpush1.msra.mxu0 %v1492
        %1509 = vmatprep.subr.mxu0 0.0
        %1510 = vmatpush1.msra.mxu0 %v1493
        %1511 = vmatprep.subr.mxu0 0.0
        %1512 = vmatpush1.msra.mxu0 %v1494
        %1513 = vmatprep.subr.mxu0 0.0
        %1514 = vmatpush1.msra.mxu0 %v1495
        %1515 = vmatprep.subr.mxu0 0.0
        %1516 = vmatpush1.msra.mxu0 %v1496
        %1517 = vmatprep.subr.mxu0 0.0
        %1518 = vmatpush1.msra.mxu0 %v1497
        %1519 = vmatprep.subr.mxu0 0.0
        %1520 = vmatpush1.msra.mxu0 %v1498
        %1521 = vmatprep.subr.mxu0 0.0
        %1522 = vmatpush1.msra.mxu0 %v1505
        %1523 = vmatprep.subr.mxu0 0.0
        %1524 = vmatpush1.msra.mxu0 0.0
        %1525 = vmatprep.subr.mxu0 0.0
        %1526 = vmatpush1.msra.mxu0 0.0
        %1527 = vmatprep.subr.mxu0 0.0
        %1528 = vmatpush1.msra.mxu0 0.0
        %1529 = vmatprep.subr.mxu0 0.0
        %1530 = vmatpush1.msra.mxu0 0.0
        %1531 = vmatprep.subr.mxu0 0.0
        %1532 = vmatpush1.msra.mxu0 0.0
        %1533 = vmatprep.subr.mxu0 0.0
        %1534 = vmatpush1.msra.mxu0 0.0
        %1535 = vmatprep.subr.mxu0 0.0
        %1536 = vmatpush1.msra.mxu0 0.0
        %1537 = vmatprep.subr.mxu0 0.0
        %1538 = vmatpush1.msra.mxu0 0.0
        %1539 = vmatprep.subr.mxu0 0.0
        %1540 = vmatpush1.msra.mxu0 0.0
        %1541 = vmatprep.subr.mxu0 0.0
        %1542 = vmatpush1.msra.mxu0 0.0
        %1543 = vmatprep.subr.mxu0 0.0
        %1544 = vmatpush1.msra.mxu0 0.0
        %1545 = vmatprep.subr.mxu0 0.0
        %1546 = vmatpush1.msra.mxu0 0.0
        %1547 = vmatprep.subr.mxu0 0.0
        %1548 = vmatpush1.msra.mxu0 0.0
        %1549 = vmatprep.subr.mxu0 0.0
        %1550 = vmatpush1.msra.mxu0 0.0
        %1551 = vmatprep.subr.mxu0 0.0
        %1552 = vmatpush1.msra.mxu0 0.0
        %1553 = vmatprep.subr.mxu0 0.0
        %1554 = vmatpush1.msra.mxu0 0.0
        %1555 = vmatprep.subr.mxu0 0.0
        %1556 = vmatpush1.msra.mxu0 0.0
        %1557 = vmatprep.subr.mxu0 0.0
        %1558 = vmatpush1.msra.mxu0 0.0
        %1559 = vmatprep.subr.mxu0 0.0
        %1560 = vmatpush1.msra.mxu0 0.0
        %1561 = vmatprep.subr.mxu0 0.0
        %1562 = vmatpush1.msra.mxu0 0.0
        %1563 = vmatprep.subr.mxu0 0.0
        %1564 = vmatpush1.msra.mxu0 0.0
        %1565 = vmatprep.subr.mxu0 0.0
        %1566 = vmatpush1.msra.mxu0 0.0
        %1567 = vmatprep.subr.mxu0 0.0
        %1568 = vmatpush1.msra.mxu0 0.0
        %1569 = vmatprep.subr.mxu0 0.0
        %1570 = vmatpush1.msra.mxu0 0.0
        %1571 = vmatprep.mubr.f32.mxu0 0.0
        %1572 = vmatmul.mubr.f32.gmra.mrb[0].mxu0 %v1502
        %v1573 = vpop.f32.mrb[0].mxu0
        %v1574 = vadd.f32 0.0, %v1573
        %v1575 = vpop.f32.mrb[0].mxu0
        %1576 = vdwg.mxu0
        %v1578 = vlaneseq
        %v1579 = vshrl.u32 %v1578, 7
        %v1580 = vsub.s32 0, %v1579
        %v1581 = vrot.slane %v1491, %v1580
        %v1583 = vadd.f32 %v1581, %v1574
        %s1584 = scalar_lea.vmem %s7, 64
        %v1585 = vld [vmem:[%s1584] sm:$0xff]
        %v1586 = vld [vmem:[%s1584 + $0x8] sm:$0xff]
        %v1587 = vld [vmem:[%s1584 + $0x10] sm:$0xff]
        %v1588 = vld [vmem:[%s1584 + $0x18] sm:$0xff]
        %v1589 = vld [vmem:[%s1584 + $0x20] sm:$0xff]
        %v1590 = vld [vmem:[%s1584 + $0x28] sm:$0xff]
        %v1591 = vld [vmem:[%s1584 + $0x30] sm:$0xff]
        %v1592 = vld [vmem:[%s1584 + $0x38] sm:$0xf]
        %v1594 = vrot.slane %v1489, 1
        %v1595 = vrot.slane %v1490, 1
        %v1596 = vsel %vm702, %v1594, %v1595
        %v1597 = vsel %vm1500, %v1596, 0
        %v1600 = vsel %vm603, %v1592, 0
        %1602 = vmatprep.subr.mxu0 0.0
        %1603 = vmatpush1.msra.mxu0 %v1585
        %1604 = vmatprep.subr.mxu0 0.0
        %1605 = vmatpush1.msra.mxu0 %v1586
        %1606 = vmatprep.subr.mxu0 0.0
        %1607 = vmatpush1.msra.mxu0 %v1587
        %1608 = vmatprep.subr.mxu0 0.0
        %1609 = vmatpush1.msra.mxu0 %v1588
        %1610 = vmatprep.subr.mxu0 0.0
        %1611 = vmatpush1.msra.mxu0 %v1589
        %1612 = vmatprep.subr.mxu0 0.0
        %1613 = vmatpush1.msra.mxu0 %v1590
        %1614 = vmatprep.subr.mxu0 0.0
        %1615 = vmatpush1.msra.mxu0 %v1591
        %1616 = vmatprep.subr.mxu0 0.0
        %1617 = vmatpush1.msra.mxu0 %v1600
        %1618 = vmatprep.subr.mxu0 0.0
        %1619 = vmatpush1.msra.mxu0 0.0
        %1620 = vmatprep.subr.mxu0 0.0
        %1621 = vmatpush1.msra.mxu0 0.0
        %1622 = vmatprep.subr.mxu0 0.0
        %1623 = vmatpush1.msra.mxu0 0.0
        %1624 = vmatprep.subr.mxu0 0.0
        %1625 = vmatpush1.msra.mxu0 0.0
        %1626 = vmatprep.subr.mxu0 0.0
        %1627 = vmatpush1.msra.mxu0 0.0
        %1628 = vmatprep.subr.mxu0 0.0
        %1629 = vmatpush1.msra.mxu0 0.0
        %1630 = vmatprep.subr.mxu0 0.0
        %1631 = vmatpush1.msra.mxu0 0.0
        %1632 = vmatprep.subr.mxu0 0.0
        %1633 = vmatpush1.msra.mxu0 0.0
        %1634 = vmatprep.subr.mxu0 0.0
        %1635 = vmatpush1.msra.mxu0 0.0
        %1636 = vmatprep.subr.mxu0 0.0
        %1637 = vmatpush1.msra.mxu0 0.0
        %1638 = vmatprep.subr.mxu0 0.0
        %1639 = vmatpush1.msra.mxu0 0.0
        %1640 = vmatprep.subr.mxu0 0.0
        %1641 = vmatpush1.msra.mxu0 0.0
        %1642 = vmatprep.subr.mxu0 0.0
        %1643 = vmatpush1.msra.mxu0 0.0
        %1644 = vmatprep.subr.mxu0 0.0
        %1645 = vmatpush1.msra.mxu0 0.0
        %1646 = vmatprep.subr.mxu0 0.0
        %1647 = vmatpush1.msra.mxu0 0.0
        %1648 = vmatprep.subr.mxu0 0.0
        %1649 = vmatpush1.msra.mxu0 0.0
        %1650 = vmatprep.subr.mxu0 0.0
        %1651 = vmatpush1.msra.mxu0 0.0
        %1652 = vmatprep.subr.mxu0 0.0
        %1653 = vmatpush1.msra.mxu0 0.0
        %1654 = vmatprep.subr.mxu0 0.0
        %1655 = vmatpush1.msra.mxu0 0.0
        %1656 = vmatprep.subr.mxu0 0.0
        %1657 = vmatpush1.msra.mxu0 0.0
        %1658 = vmatprep.subr.mxu0 0.0
        %1659 = vmatpush1.msra.mxu0 0.0
        %1660 = vmatprep.subr.mxu0 0.0
        %1661 = vmatpush1.msra.mxu0 0.0
        %1662 = vmatprep.subr.mxu0 0.0
        %1663 = vmatpush1.msra.mxu0 0.0
        %1664 = vmatprep.subr.mxu0 0.0
        %1665 = vmatpush1.msra.mxu0 0.0
        %1666 = vmatprep.mubr.f32.mxu0 0.0
        %1667 = vmatmul.mubr.f32.gmra.mrb[0].mxu0 %v1597
        %v1668 = vpop.f32.mrb[0].mxu0
        %v1669 = vadd.f32 0.0, %v1668
        %v1670 = vpop.f32.mrb[0].mxu0
        %1671 = vdwg.mxu0
        %v1672 = vadd.f32 %v1583, %v1669
        %s1673 = scalar_lea.vmem %s7, 128
        %v1674 = vld [vmem:[%s1673] sm:$0xff]
        %v1675 = vld [vmem:[%s1673 + $0x8] sm:$0xff]
        %v1676 = vld [vmem:[%s1673 + $0x10] sm:$0xff]
        %v1677 = vld [vmem:[%s1673 + $0x18] sm:$0xff]
        %v1678 = vld [vmem:[%s1673 + $0x20] sm:$0xff]
        %v1679 = vld [vmem:[%s1673 + $0x28] sm:$0xff]
        %v1680 = vld [vmem:[%s1673 + $0x30] sm:$0xff]
        %v1681 = vld [vmem:[%s1673 + $0x38] sm:$0xf]
        %v1682 = vrot.slane %v1489, 2
        %v1683 = vrot.slane %v1490, 2
        %v1684 = vsel %vm807, %v1682, %v1683
        %v1685 = vsel %vm1500, %v1684, 0
        %v1688 = vsel %vm603, %v1681, 0
        %1690 = vmatprep.subr.mxu0 0.0
        %1691 = vmatpush1.msra.mxu0 %v1674
        %1692 = vmatprep.subr.mxu0 0.0
        %1693 = vmatpush1.msra.mxu0 %v1675
        %1694 = vmatprep.subr.mxu0 0.0
        %1695 = vmatpush1.msra.mxu0 %v1676
        %1696 = vmatprep.subr.mxu0 0.0
        %1697 = vmatpush1.msra.mxu0 %v1677
        %1698 = vmatprep.subr.mxu0 0.0
        %1699 = vmatpush1.msra.mxu0 %v1678
        %1700 = vmatprep.subr.mxu0 0.0
        %1701 = vmatpush1.msra.mxu0 %v1679
        %1702 = vmatprep.subr.mxu0 0.0
        %1703 = vmatpush1.msra.mxu0 %v1680
        %1704 = vmatprep.subr.mxu0 0.0
        %1705 = vmatpush1.msra.mxu0 %v1688
        %1706 = vmatprep.subr.mxu0 0.0
        %1707 = vmatpush1.msra.mxu0 0.0
        %1708 = vmatprep.subr.mxu0 0.0
        %1709 = vmatpush1.msra.mxu0 0.0
        %1710 = vmatprep.subr.mxu0 0.0
        %1711 = vmatpush1.msra.mxu0 0.0
        %1712 = vmatprep.subr.mxu0 0.0
        %1713 = vmatpush1.msra.mxu0 0.0
        %1714 = vmatprep.subr.mxu0 0.0
        %1715 = vmatpush1.msra.mxu0 0.0
        %1716 = vmatprep.subr.mxu0 0.0
        %1717 = vmatpush1.msra.mxu0 0.0
        %1718 = vmatprep.subr.mxu0 0.0
        %1719 = vmatpush1.msra.mxu0 0.0
        %1720 = vmatprep.subr.mxu0 0.0
        %1721 = vmatpush1.msra.mxu0 0.0
        %1722 = vmatprep.subr.mxu0 0.0
        %1723 = vmatpush1.msra.mxu0 0.0
        %1724 = vmatprep.subr.mxu0 0.0
        %1725 = vmatpush1.msra.mxu0 0.0
        %1726 = vmatprep.subr.mxu0 0.0
        %1727 = vmatpush1.msra.mxu0 0.0
        %1728 = vmatprep.subr.mxu0 0.0
        %1729 = vmatpush1.msra.mxu0 0.0
        %1730 = vmatprep.subr.mxu0 0.0
        %1731 = vmatpush1.msra.mxu0 0.0
        %1732 = vmatprep.subr.mxu0 0.0
        %1733 = vmatpush1.msra.mxu0 0.0
        %1734 = vmatprep.subr.mxu0 0.0
        %1735 = vmatpush1.msra.mxu0 0.0
        %1736 = vmatprep.subr.mxu0 0.0
        %1737 = vmatpush1.msra.mxu0 0.0
        %1738 = vmatprep.subr.mxu0 0.0
        %1739 = vmatpush1.msra.mxu0 0.0
        %1740 = vmatprep.subr.mxu0 0.0
        %1741 = vmatpush1.msra.mxu0 0.0
        %1742 = vmatprep.subr.mxu0 0.0
        %1743 = vmatpush1.msra.mxu0 0.0
        %1744 = vmatprep.subr.mxu0 0.0
        %1745 = vmatpush1.msra.mxu0 0.0
        %1746 = vmatprep.subr.mxu0 0.0
        %1747 = vmatpush1.msra.mxu0 0.0
        %1748 = vmatprep.subr.mxu0 0.0
        %1749 = vmatpush1.msra.mxu0 0.0
        %1750 = vmatprep.subr.mxu0 0.0
        %1751 = vmatpush1.msra.mxu0 0.0
        %1752 = vmatprep.subr.mxu0 0.0
        %1753 = vmatpush1.msra.mxu0 0.0
        %1754 = vmatprep.mubr.f32.mxu0 0.0
        %1755 = vmatmul.mubr.f32.gmra.mrb[0].mxu0 %v1685
        %v1756 = vpop.f32.mrb[0].mxu0
        %v1757 = vadd.f32 0.0, %v1756
        %v1758 = vpop.f32.mrb[0].mxu0
        %1759 = vdwg.mxu0
        %v1760 = vadd.f32 %v1672, %v1757
        %s1761 = scalar_lea.vmem %s7, 192
        %v1762 = vld [vmem:[%s1761] sm:$0xff]
        %v1763 = vld [vmem:[%s1761 + $0x8] sm:$0xff]
        %v1764 = vld [vmem:[%s1761 + $0x10] sm:$0xff]
        %v1765 = vld [vmem:[%s1761 + $0x18] sm:$0xff]
        %v1766 = vld [vmem:[%s1761 + $0x20] sm:$0xff]
        %v1767 = vld [vmem:[%s1761 + $0x28] sm:$0xff]
        %v1768 = vld [vmem:[%s1761 + $0x30] sm:$0xff]
        %v1769 = vld [vmem:[%s1761 + $0x38] sm:$0xf]
        %v1770 = vrot.slane %v1489, 3
        %v1771 = vrot.slane %v1490, 3
        %v1772 = vsel %vm912, %v1770, %v1771
        %v1773 = vsel %vm1500, %v1772, 0
        %v1776 = vsel %vm603, %v1769, 0
        %1778 = vmatprep.subr.mxu0 0.0
        %1779 = vmatpush1.msra.mxu0 %v1762
        %1780 = vmatprep.subr.mxu0 0.0
        %1781 = vmatpush1.msra.mxu0 %v1763
        %1782 = vmatprep.subr.mxu0 0.0
        %1783 = vmatpush1.msra.mxu0 %v1764
        %1784 = vmatprep.subr.mxu0 0.0
        %1785 = vmatpush1.msra.mxu0 %v1765
        %1786 = vmatprep.subr.mxu0 0.0
        %1787 = vmatpush1.msra.mxu0 %v1766
        %1788 = vmatprep.subr.mxu0 0.0
        %1789 = vmatpush1.msra.mxu0 %v1767
        %1790 = vmatprep.subr.mxu0 0.0
        %1791 = vmatpush1.msra.mxu0 %v1768
        %1792 = vmatprep.subr.mxu0 0.0
        %1793 = vmatpush1.msra.mxu0 %v1776
        %1794 = vmatprep.subr.mxu0 0.0
        %1795 = vmatpush1.msra.mxu0 0.0
        %1796 = vmatprep.subr.mxu0 0.0
        %1797 = vmatpush1.msra.mxu0 0.0
        %1798 = vmatprep.subr.mxu0 0.0
        %1799 = vmatpush1.msra.mxu0 0.0
        %1800 = vmatprep.subr.mxu0 0.0
        %1801 = vmatpush1.msra.mxu0 0.0
        %1802 = vmatprep.subr.mxu0 0.0
        %1803 = vmatpush1.msra.mxu0 0.0
        %1804 = vmatprep.subr.mxu0 0.0
        %1805 = vmatpush1.msra.mxu0 0.0
        %1806 = vmatprep.subr.mxu0 0.0
        %1807 = vmatpush1.msra.mxu0 0.0
        %1808 = vmatprep.subr.mxu0 0.0
        %1809 = vmatpush1.msra.mxu0 0.0
        %1810 = vmatprep.subr.mxu0 0.0
        %1811 = vmatpush1.msra.mxu0 0.0
        %1812 = vmatprep.subr.mxu0 0.0
        %1813 = vmatpush1.msra.mxu0 0.0
        %1814 = vmatprep.subr.mxu0 0.0
        %1815 = vmatpush1.msra.mxu0 0.0
        %1816 = vmatprep.subr.mxu0 0.0
        %1817 = vmatpush1.msra.mxu0 0.0
        %1818 = vmatprep.subr.mxu0 0.0
        %1819 = vmatpush1.msra.mxu0 0.0
        %1820 = vmatprep.subr.mxu0 0.0
        %1821 = vmatpush1.msra.mxu0 0.0
        %1822 = vmatprep.subr.mxu0 0.0
        %1823 = vmatpush1.msra.mxu0 0.0
        %1824 = vmatprep.subr.mxu0 0.0
        %1825 = vmatpush1.msra.mxu0 0.0
        %1826 = vmatprep.subr.mxu0 0.0
        %1827 = vmatpush1.msra.mxu0 0.0
        %1828 = vmatprep.subr.mxu0 0.0
        %1829 = vmatpush1.msra.mxu0 0.0
        %1830 = vmatprep.subr.mxu0 0.0
        %1831 = vmatpush1.msra.mxu0 0.0
        %1832 = vmatprep.subr.mxu0 0.0
        %1833 = vmatpush1.msra.mxu0 0.0
        %1834 = vmatprep.subr.mxu0 0.0
        %1835 = vmatpush1.msra.mxu0 0.0
        %1836 = vmatprep.subr.mxu0 0.0
        %1837 = vmatpush1.msra.mxu0 0.0
        %1838 = vmatprep.subr.mxu0 0.0
        %1839 = vmatpush1.msra.mxu0 0.0
        %1840 = vmatprep.subr.mxu0 0.0
        %1841 = vmatpush1.msra.mxu0 0.0
        %1842 = vmatprep.mubr.f32.mxu0 0.0
        %1843 = vmatmul.mubr.f32.gmra.mrb[0].mxu0 %v1773
        %v1844 = vpop.f32.mrb[0].mxu0
        %v1845 = vadd.f32 0.0, %v1844
        %v1846 = vpop.f32.mrb[0].mxu0
        %1847 = vdwg.mxu0
        %v1848 = vadd.f32 %v1760, %v1845
        %s1849 = scalar_lea.vmem %s7, 256
        %v1850 = vld [vmem:[%s1849] sm:$0xff]
        %v1851 = vld [vmem:[%s1849 + $0x8] sm:$0xff]
        %v1852 = vld [vmem:[%s1849 + $0x10] sm:$0xff]
        %v1853 = vld [vmem:[%s1849 + $0x18] sm:$0xff]
        %v1854 = vld [vmem:[%s1849 + $0x20] sm:$0xff]
        %v1855 = vld [vmem:[%s1849 + $0x28] sm:$0xff]
        %v1856 = vld [vmem:[%s1849 + $0x30] sm:$0xff]
        %v1857 = vld [vmem:[%s1849 + $0x38] sm:$0xf]
        %v1858 = vrot.slane %v1489, 4
        %v1859 = vrot.slane %v1490, 4
        %v1860 = vsel %vm603, %v1858, %v1859
        %v1861 = vsel %vm1500, %v1860, 0
        %v1864 = vsel %vm603, %v1857, 0
        %1866 = vmatprep.subr.mxu0 0.0
        %1867 = vmatpush1.msra.mxu0 %v1850
        %1868 = vmatprep.subr.mxu0 0.0
        %1869 = vmatpush1.msra.mxu0 %v1851
        %1870 = vmatprep.subr.mxu0 0.0
        %1871 = vmatpush1.msra.mxu0 %v1852
        %1872 = vmatprep.subr.mxu0 0.0
        %1873 = vmatpush1.msra.mxu0 %v1853
        %1874 = vmatprep.subr.mxu0 0.0
        %1875 = vmatpush1.msra.mxu0 %v1854
        %1876 = vmatprep.subr.mxu0 0.0
        %1877 = vmatpush1.msra.mxu0 %v1855
        %1878 = vmatprep.subr.mxu0 0.0
        %1879 = vmatpush1.msra.mxu0 %v1856
        %1880 = vmatprep.subr.mxu0 0.0
        %1881 = vmatpush1.msra.mxu0 %v1864
        %1882 = vmatprep.subr.mxu0 0.0
        %1883 = vmatpush1.msra.mxu0 0.0
        %1884 = vmatprep.subr.mxu0 0.0
        %1885 = vmatpush1.msra.mxu0 0.0
        %1886 = vmatprep.subr.mxu0 0.0
        %1887 = vmatpush1.msra.mxu0 0.0
        %1888 = vmatprep.subr.mxu0 0.0
        %1889 = vmatpush1.msra.mxu0 0.0
        %1890 = vmatprep.subr.mxu0 0.0
        %1891 = vmatpush1.msra.mxu0 0.0
        %1892 = vmatprep.subr.mxu0 0.0
        %1893 = vmatpush1.msra.mxu0 0.0
        %1894 = vmatprep.subr.mxu0 0.0
        %1895 = vmatpush1.msra.mxu0 0.0
        %1896 = vmatprep.subr.mxu0 0.0
        %1897 = vmatpush1.msra.mxu0 0.0
        %1898 = vmatprep.subr.mxu0 0.0
        %1899 = vmatpush1.msra.mxu0 0.0
        %1900 = vmatprep.subr.mxu0 0.0
        %1901 = vmatpush1.msra.mxu0 0.0
        %1902 = vmatprep.subr.mxu0 0.0
        %1903 = vmatpush1.msra.mxu0 0.0
        %1904 = vmatprep.subr.mxu0 0.0
        %1905 = vmatpush1.msra.mxu0 0.0
        %1906 = vmatprep.subr.mxu0 0.0
        %1907 = vmatpush1.msra.mxu0 0.0
        %1908 = vmatprep.subr.mxu0 0.0
        %1909 = vmatpush1.msra.mxu0 0.0
        %1910 = vmatprep.subr.mxu0 0.0
        %1911 = vmatpush1.msra.mxu0 0.0
        %1912 = vmatprep.subr.mxu0 0.0
        %1913 = vmatpush1.msra.mxu0 0.0
        %1914 = vmatprep.subr.mxu0 0.0
        %1915 = vmatpush1.msra.mxu0 0.0
        %1916 = vmatprep.subr.mxu0 0.0
        %1917 = vmatpush1.msra.mxu0 0.0
        %1918 = vmatprep.subr.mxu0 0.0
        %1919 = vmatpush1.msra.mxu0 0.0
        %1920 = vmatprep.subr.mxu0 0.0
        %1921 = vmatpush1.msra.mxu0 0.0
        %1922 = vmatprep.subr.mxu0 0.0
        %1923 = vmatpush1.msra.mxu0 0.0
        %1924 = vmatprep.subr.mxu0 0.0
        %1925 = vmatpush1.msra.mxu0 0.0
        %1926 = vmatprep.subr.mxu0 0.0
        %1927 = vmatpush1.msra.mxu0 0.0
        %1928 = vmatprep.subr.mxu0 0.0
        %1929 = vmatpush1.msra.mxu0 0.0
        %1930 = vmatprep.mubr.f32.mxu0 0.0
        %1931 = vmatmul.mubr.f32.gmra.mrb[0].mxu0 %v1861
        %v1932 = vpop.f32.mrb[0].mxu0
        %v1933 = vadd.f32 0.0, %v1932
        %v1934 = vpop.f32.mrb[0].mxu0
        %1935 = vdwg.mxu0
        %v1936 = vadd.f32 %v1848, %v1933
        %v1937 = vmax.f32 %v1936, 0.0
        %v1938 = vld [vmem:[%s9] sm:$0xff]
        %v1939 = vld [vmem:[%s9 + $0x8] sm:$0xff]
        %v1940 = vld [vmem:[%s9 + $0x10] sm:$0xff]
        %v1941 = vld [vmem:[%s9 + $0x18] sm:$0xff]
        %v1942 = vld [vmem:[%s9 + $0x20] sm:$0xff]
        %v1943 = vld [vmem:[%s9 + $0x28] sm:$0xff]
        %v1944 = vld [vmem:[%s9 + $0x30] sm:$0xff]
        %v1945 = vld [vmem:[%s9 + $0x38] sm:$0xff]
        %v1946 = vld [vmem:[%s9 + $0x40] sm:$0xff]
        %v1947 = vld [vmem:[%s9 + $0x48] sm:$0xff]
        %vm1948 = vcmask 654336
        %v1950 = vsel %vm1948, %v1937, 0
        %1952 = vmatprep.subr.mxu0 0.0
        %1953 = vmatpush1.msra.mxu0 %v1938
        %1954 = vmatprep.subr.mxu0 0.0
        %1955 = vmatpush1.msra.mxu0 %v1939
        %1956 = vmatprep.subr.mxu0 0.0
        %1957 = vmatpush1.msra.mxu0 %v1940
        %1958 = vmatprep.subr.mxu0 0.0
        %1959 = vmatpush1.msra.mxu0 %v1941
        %1960 = vmatprep.subr.mxu0 0.0
        %1961 = vmatpush1.msra.mxu0 %v1942
        %1962 = vmatprep.subr.mxu0 0.0
        %1963 = vmatpush1.msra.mxu0 %v1943
        %1964 = vmatprep.subr.mxu0 0.0
        %1965 = vmatpush1.msra.mxu0 %v1944
        %1966 = vmatprep.subr.mxu0 0.0
        %1967 = vmatpush1.msra.mxu0 %v1945
        %1968 = vmatprep.subr.mxu0 0.0
        %1969 = vmatpush1.msra.mxu0 %v1946
        %1970 = vmatprep.subr.mxu0 0.0
        %1971 = vmatpush1.msra.mxu0 %v1947
        %1972 = vmatprep.subr.mxu0 0.0
        %1973 = vmatpush1.msra.mxu0 0.0
        %1974 = vmatprep.subr.mxu0 0.0
        %1975 = vmatpush1.msra.mxu0 0.0
        %1976 = vmatprep.subr.mxu0 0.0
        %1977 = vmatpush1.msra.mxu0 0.0
        %1978 = vmatprep.subr.mxu0 0.0
        %1979 = vmatpush1.msra.mxu0 0.0
        %1980 = vmatprep.subr.mxu0 0.0
        %1981 = vmatpush1.msra.mxu0 0.0
        %1982 = vmatprep.subr.mxu0 0.0
        %1983 = vmatpush1.msra.mxu0 0.0
        %1984 = vmatprep.subr.mxu0 0.0
        %1985 = vmatpush1.msra.mxu0 0.0
        %1986 = vmatprep.subr.mxu0 0.0
        %1987 = vmatpush1.msra.mxu0 0.0
        %1988 = vmatprep.subr.mxu0 0.0
        %1989 = vmatpush1.msra.mxu0 0.0
        %1990 = vmatprep.subr.mxu0 0.0
        %1991 = vmatpush1.msra.mxu0 0.0
        %1992 = vmatprep.subr.mxu0 0.0
        %1993 = vmatpush1.msra.mxu0 0.0
        %1994 = vmatprep.subr.mxu0 0.0
        %1995 = vmatpush1.msra.mxu0 0.0
        %1996 = vmatprep.subr.mxu0 0.0
        %1997 = vmatpush1.msra.mxu0 0.0
        %1998 = vmatprep.subr.mxu0 0.0
        %1999 = vmatpush1.msra.mxu0 0.0
        %2000 = vmatprep.subr.mxu0 0.0
        %2001 = vmatpush1.msra.mxu0 0.0
        %2002 = vmatprep.subr.mxu0 0.0
        %2003 = vmatpush1.msra.mxu0 0.0
        %2004 = vmatprep.subr.mxu0 0.0
        %2005 = vmatpush1.msra.mxu0 0.0
        %2006 = vmatprep.subr.mxu0 0.0
        %2007 = vmatpush1.msra.mxu0 0.0
        %2008 = vmatprep.subr.mxu0 0.0
        %2009 = vmatpush1.msra.mxu0 0.0
        %2010 = vmatprep.subr.mxu0 0.0
        %2011 = vmatpush1.msra.mxu0 0.0
        %2012 = vmatprep.subr.mxu0 0.0
        %2013 = vmatpush1.msra.mxu0 0.0
        %2014 = vmatprep.subr.mxu0 0.0
        %2015 = vmatpush1.msra.mxu0 0.0
        %2016 = vmatprep.mubr.f32.mxu0 0.0
        %2017 = vmatmul.mubr.f32.gmra.mrb[0].mxu0 %v1950
        %v2018 = vpop.f32.mrb[0].mxu0
        %v2019 = vadd.f32 0.0, %v2018
        %v2020 = vpop.f32.mrb[0].mxu0
        %2021 = vdwg.mxu0
        %v2022 = vld [vmem:[%s10] sm:$0xff]
        %v2023 = vld [vmem:[%s10 + $0x8] sm:$0xff]
        %v2024 = vld [vmem:[%s10 + $0x10] sm:$0xff]
        %v2025 = vld [vmem:[%s10 + $0x18] sm:$0xff]
        %v2026 = vld [vmem:[%s10 + $0x20] sm:$0xff]
        %v2027 = vld [vmem:[%s10 + $0x28] sm:$0xff]
        %v2028 = vld [vmem:[%s10 + $0x30] sm:$0xff]
        %v2029 = vld [vmem:[%s10 + $0x38] sm:$0xff]
        %v2030 = vld [vmem:[%s10 + $0x40] sm:$0xff]
        %v2031 = vld [vmem:[%s10 + $0x48] sm:$0xff]
        %2032 = vmatprep.subr.mxu0 0.0
        %2033 = vmatpush1.msra.mxu0 %v2022
        %2034 = vmatprep.subr.mxu0 0.0
        %2035 = vmatpush1.msra.mxu0 %v2023
        %2036 = vmatprep.subr.mxu0 0.0
        %2037 = vmatpush1.msra.mxu0 %v2024
        %2038 = vmatprep.subr.mxu0 0.0
        %2039 = vmatpush1.msra.mxu0 %v2025
        %2040 = vmatprep.subr.mxu0 0.0
        %2041 = vmatpush1.msra.mxu0 %v2026
        %2042 = vmatprep.subr.mxu0 0.0
        %2043 = vmatpush1.msra.mxu0 %v2027
        %2044 = vmatprep.subr.mxu0 0.0
        %2045 = vmatpush1.msra.mxu0 %v2028
        %2046 = vmatprep.subr.mxu0 0.0
        %2047 = vmatpush1.msra.mxu0 %v2029
        %2048 = vmatprep.subr.mxu0 0.0
        %2049 = vmatpush1.msra.mxu0 %v2030
        %2050 = vmatprep.subr.mxu0 0.0
        %2051 = vmatpush1.msra.mxu0 %v2031
        %2052 = vmatprep.subr.mxu0 0.0
        %2053 = vmatpush1.msra.mxu0 0.0
        %2054 = vmatprep.subr.mxu0 0.0
        %2055 = vmatpush1.msra.mxu0 0.0
        %2056 = vmatprep.subr.mxu0 0.0
        %2057 = vmatpush1.msra.mxu0 0.0
        %2058 = vmatprep.subr.mxu0 0.0
        %2059 = vmatpush1.msra.mxu0 0.0
        %2060 = vmatprep.subr.mxu0 0.0
        %2061 = vmatpush1.msra.mxu0 0.0
        %2062 = vmatprep.subr.mxu0 0.0
        %2063 = vmatpush1.msra.mxu0 0.0
        %2064 = vmatprep.subr.mxu0 0.0
        %2065 = vmatpush1.msra.mxu0 0.0
        %2066 = vmatprep.subr.mxu0 0.0
        %2067 = vmatpush1.msra.mxu0 0.0
        %2068 = vmatprep.subr.mxu0 0.0
        %2069 = vmatpush1.msra.mxu0 0.0
        %2070 = vmatprep.subr.mxu0 0.0
        %2071 = vmatpush1.msra.mxu0 0.0
        %2072 = vmatprep.subr.mxu0 0.0
        %2073 = vmatpush1.msra.mxu0 0.0
        %2074 = vmatprep.subr.mxu0 0.0
        %2075 = vmatpush1.msra.mxu0 0.0
        %2076 = vmatprep.subr.mxu0 0.0
        %2077 = vmatpush1.msra.mxu0 0.0
        %2078 = vmatprep.subr.mxu0 0.0
        %2079 = vmatpush1.msra.mxu0 0.0
        %2080 = vmatprep.subr.mxu0 0.0
        %2081 = vmatpush1.msra.mxu0 0.0
        %2082 = vmatprep.subr.mxu0 0.0
        %2083 = vmatpush1.msra.mxu0 0.0
        %2084 = vmatprep.subr.mxu0 0.0
        %2085 = vmatpush1.msra.mxu0 0.0
        %2086 = vmatprep.subr.mxu0 0.0
        %2087 = vmatpush1.msra.mxu0 0.0
        %2088 = vmatprep.subr.mxu0 0.0
        %2089 = vmatpush1.msra.mxu0 0.0
        %2090 = vmatprep.subr.mxu0 0.0
        %2091 = vmatpush1.msra.mxu0 0.0
        %2092 = vmatprep.subr.mxu0 0.0
        %2093 = vmatpush1.msra.mxu0 0.0
        %2094 = vmatprep.subr.mxu0 0.0
        %2095 = vmatpush1.msra.mxu0 0.0
        %2096 = vmatprep.mubr.f32.mxu0 0.0
        %2097 = vmatmul.mubr.f32.gmra.mrb[0].mxu0 %v1950
        %v2098 = vpop.f32.mrb[0].mxu0
        %v2099 = vadd.f32 0.0, %v2098
        %v2100 = vpop.f32.mrb[0].mxu0
        %2101 = vdwg.mxu0
        %v2102 = vmax.f32 %v2019, %v2099
        %v2103 = vld [vmem:[#allocation5] sm:$0xf]
        %vm2104 = vcmask 64512
        %v2106 = vsel %vm2104, %v2103, 0
        %2108 = vmatprep.subr.mxu0 0.0
        %2109 = vmatpush1.msra.mxu0 %v2102
        %2110 = vmatprep.subr.mxu0 0.0
        %2111 = vmatpush1.msra.mxu0 0.0
        %2112 = vmatprep.subr.mxu0 0.0
        %2113 = vmatpush1.msra.mxu0 0.0
        %2114 = vmatprep.subr.mxu0 0.0
        %2115 = vmatpush1.msra.mxu0 0.0
        %2116 = vmatprep.subr.mxu0 0.0
        %2117 = vmatpush1.msra.mxu0 0.0
        %2118 = vmatprep.subr.mxu0 0.0
        %2119 = vmatpush1.msra.mxu0 0.0
        %2120 = vmatprep.subr.mxu0 0.0
        %2121 = vmatpush1.msra.mxu0 0.0
        %2122 = vmatprep.subr.mxu0 0.0
        %2123 = vmatpush1.msra.mxu0 0.0
        %2124 = vmatprep.subr.mxu0 0.0
        %2125 = vmatpush1.msra.mxu0 0.0
        %2126 = vmatprep.subr.mxu0 0.0
        %2127 = vmatpush1.msra.mxu0 0.0
        %2128 = vmatprep.subr.mxu0 0.0
        %2129 = vmatpush1.msra.mxu0 0.0
        %2130 = vmatprep.subr.mxu0 0.0
        %2131 = vmatpush1.msra.mxu0 0.0
        %2132 = vmatprep.subr.mxu0 0.0
        %2133 = vmatpush1.msra.mxu0 0.0
        %2134 = vmatprep.subr.mxu0 0.0
        %2135 = vmatpush1.msra.mxu0 0.0
        %2136 = vmatprep.subr.mxu0 0.0
        %2137 = vmatpush1.msra.mxu0 0.0
        %2138 = vmatprep.subr.mxu0 0.0
        %2139 = vmatpush1.msra.mxu0 0.0
        %2140 = vmatprep.subr.mxu0 0.0
        %2141 = vmatpush1.msra.mxu0 0.0
        %2142 = vmatprep.subr.mxu0 0.0
        %2143 = vmatpush1.msra.mxu0 0.0
        %2144 = vmatprep.subr.mxu0 0.0
        %2145 = vmatpush1.msra.mxu0 0.0
        %2146 = vmatprep.subr.mxu0 0.0
        %2147 = vmatpush1.msra.mxu0 0.0
        %2148 = vmatprep.subr.mxu0 0.0
        %2149 = vmatpush1.msra.mxu0 0.0
        %2150 = vmatprep.subr.mxu0 0.0
        %2151 = vmatpush1.msra.mxu0 0.0
        %2152 = vmatprep.subr.mxu0 0.0
        %2153 = vmatpush1.msra.mxu0 0.0
        %2154 = vmatprep.subr.mxu0 0.0
        %2155 = vmatpush1.msra.mxu0 0.0
        %2156 = vmatprep.subr.mxu0 0.0
        %2157 = vmatpush1.msra.mxu0 0.0
        %2158 = vmatprep.subr.mxu0 0.0
        %2159 = vmatpush1.msra.mxu0 0.0
        %2160 = vmatprep.subr.mxu0 0.0
        %2161 = vmatpush1.msra.mxu0 0.0
        %2162 = vmatprep.subr.mxu0 0.0
        %2163 = vmatpush1.msra.mxu0 0.0
        %2164 = vmatprep.subr.mxu0 0.0
        %2165 = vmatpush1.msra.mxu0 0.0
        %2166 = vmatprep.subr.mxu0 0.0
        %2167 = vmatpush1.msra.mxu0 0.0
        %2168 = vmatprep.subr.mxu0 0.0
        %2169 = vmatpush1.msra.mxu0 0.0
        %2170 = vmatprep.subr.mxu0 0.0
        %2171 = vmatpush1.msra.mxu0 0.0
        %2172 = vmatprep.mubr.f32.mxu0 0.0
        %2173 = vmatmul.mubr.f32.gmra.mrb[0].mxu0 %v2106
        %v2174 = vpop.f32.mrb[0].mxu0
        %v2175 = vadd.f32 0.0, %v2174
        %v2176 = vpop.f32.mrb[0].mxu0
        %2177 = vdwg.mxu0
        %v2178 = vld [vmem:[#allocation7] sm:$0xf]
        %v2180 = vsel %vm2104, %v2178, 0
        %2182 = vmatprep.subr.mxu0 0.0
        %2183 = vmatpush1.msra.mxu0 %v2102
        %2184 = vmatprep.subr.mxu0 0.0
        %2185 = vmatpush1.msra.mxu0 0.0
        %2186 = vmatprep.subr.mxu0 0.0
        %2187 = vmatpush1.msra.mxu0 0.0
        %2188 = vmatprep.subr.mxu0 0.0
        %2189 = vmatpush1.msra.mxu0 0.0
        %2190 = vmatprep.subr.mxu0 0.0
        %2191 = vmatpush1.msra.mxu0 0.0
        %2192 = vmatprep.subr.mxu0 0.0
        %2193 = vmatpush1.msra.mxu0 0.0
        %2194 = vmatprep.subr.mxu0 0.0
        %2195 = vmatpush1.msra.mxu0 0.0
        %2196 = vmatprep.subr.mxu0 0.0
        %2197 = vmatpush1.msra.mxu0 0.0
        %2198 = vmatprep.subr.mxu0 0.0
        %2199 = vmatpush1.msra.mxu0 0.0
        %2200 = vmatprep.subr.mxu0 0.0
        %2201 = vmatpush1.msra.mxu0 0.0
        %2202 = vmatprep.subr.mxu0 0.0
        %2203 = vmatpush1.msra.mxu0 0.0
        %2204 = vmatprep.subr.mxu0 0.0
        %2205 = vmatpush1.msra.mxu0 0.0
        %2206 = vmatprep.subr.mxu0 0.0
        %2207 = vmatpush1.msra.mxu0 0.0
        %2208 = vmatprep.subr.mxu0 0.0
        %2209 = vmatpush1.msra.mxu0 0.0
        %2210 = vmatprep.subr.mxu0 0.0
        %2211 = vmatpush1.msra.mxu0 0.0
        %2212 = vmatprep.subr.mxu0 0.0
        %2213 = vmatpush1.msra.mxu0 0.0
        %2214 = vmatprep.subr.mxu0 0.0
        %2215 = vmatpush1.msra.mxu0 0.0
        %2216 = vmatprep.subr.mxu0 0.0
        %2217 = vmatpush1.msra.mxu0 0.0
        %2218 = vmatprep.subr.mxu0 0.0
        %2219 = vmatpush1.msra.mxu0 0.0
        %2220 = vmatprep.subr.mxu0 0.0
        %2221 = vmatpush1.msra.mxu0 0.0
        %2222 = vmatprep.subr.mxu0 0.0
        %2223 = vmatpush1.msra.mxu0 0.0
        %2224 = vmatprep.subr.mxu0 0.0
        %2225 = vmatpush1.msra.mxu0 0.0
        %2226 = vmatprep.subr.mxu0 0.0
        %2227 = vmatpush1.msra.mxu0 0.0
        %2228 = vmatprep.subr.mxu0 0.0
        %2229 = vmatpush1.msra.mxu0 0.0
        %2230 = vmatprep.subr.mxu0 0.0
        %2231 = vmatpush1.msra.mxu0 0.0
        %2232 = vmatprep.subr.mxu0 0.0
        %2233 = vmatpush1.msra.mxu0 0.0
        %2234 = vmatprep.subr.mxu0 0.0
        %2235 = vmatpush1.msra.mxu0 0.0
        %2236 = vmatprep.subr.mxu0 0.0
        %2237 = vmatpush1.msra.mxu0 0.0
        %2238 = vmatprep.subr.mxu0 0.0
        %2239 = vmatpush1.msra.mxu0 0.0
        %2240 = vmatprep.subr.mxu0 0.0
        %2241 = vmatpush1.msra.mxu0 0.0
        %2242 = vmatprep.subr.mxu0 0.0
        %2243 = vmatpush1.msra.mxu0 0.0
        %2244 = vmatprep.subr.mxu0 0.0
        %2245 = vmatpush1.msra.mxu0 0.0
        %2246 = vmatprep.mubr.f32.mxu0 0.0
        %2247 = vmatmul.mubr.f32.gmra.mrb[0].mxu0 %v2180
        %v2248 = vpop.f32.mrb[0].mxu0
        %v2249 = vadd.f32 0.0, %v2248
        %v2250 = vpop.f32.mrb[0].mxu0
        %2251 = vdwg.mxu0
        %v2252 = vmax.f32 %v2175, %v2249
        %v2253 = vld [vmem:[%s14] sm:$0x1]
        %v2254 = vld [vmem:[%s13] sm:$0xff]
        %v2255 = vld [vmem:[%s13 + $0x8] sm:$0xff]
        %v2256 = vld [vmem:[%s13 + $0x10] sm:$0xff]
        %v2257 = vld [vmem:[%s13 + $0x18] sm:$0xff]
        %v2258 = vld [vmem:[%s13 + $0x20] sm:$0xff]
        %vm2259 = vcmask 326656
        %v2261 = vsel %vm2259, %v2252, 0
        %2263 = vmatprep.subr.mxu0 0.0
        %2264 = vmatpush1.msra.mxu0 %v2254
        %2265 = vmatprep.subr.mxu0 0.0
        %2266 = vmatpush1.msra.mxu0 %v2255
        %2267 = vmatprep.subr.mxu0 0.0
        %2268 = vmatpush1.msra.mxu0 %v2256
        %2269 = vmatprep.subr.mxu0 0.0
        %2270 = vmatpush1.msra.mxu0 %v2257
        %2271 = vmatprep.subr.mxu0 0.0
        %2272 = vmatpush1.msra.mxu0 %v2258
        %2273 = vmatprep.subr.mxu0 0.0
        %2274 = vmatpush1.msra.mxu0 0.0
        %2275 = vmatprep.subr.mxu0 0.0
        %2276 = vmatpush1.msra.mxu0 0.0
        %2277 = vmatprep.subr.mxu0 0.0
        %2278 = vmatpush1.msra.mxu0 0.0
        %2279 = vmatprep.subr.mxu0 0.0
        %2280 = vmatpush1.msra.mxu0 0.0
        %2281 = vmatprep.subr.mxu0 0.0
        %2282 = vmatpush1.msra.mxu0 0.0
        %2283 = vmatprep.subr.mxu0 0.0
        %2284 = vmatpush1.msra.mxu0 0.0
        %2285 = vmatprep.subr.mxu0 0.0
        %2286 = vmatpush1.msra.mxu0 0.0
        %2287 = vmatprep.subr.mxu0 0.0
        %2288 = vmatpush1.msra.mxu0 0.0
        %2289 = vmatprep.subr.mxu0 0.0
        %2290 = vmatpush1.msra.mxu0 0.0
        %2291 = vmatprep.subr.mxu0 0.0
        %2292 = vmatpush1.msra.mxu0 0.0
        %2293 = vmatprep.subr.mxu0 0.0
        %2294 = vmatpush1.msra.mxu0 0.0
        %2295 = vmatprep.subr.mxu0 0.0
        %2296 = vmatpush1.msra.mxu0 0.0
        %2297 = vmatprep.subr.mxu0 0.0
        %2298 = vmatpush1.msra.mxu0 0.0
        %2299 = vmatprep.subr.mxu0 0.0
        %2300 = vmatpush1.msra.mxu0 0.0
        %2301 = vmatprep.subr.mxu0 0.0
        %2302 = vmatpush1.msra.mxu0 0.0
        %2303 = vmatprep.subr.mxu0 0.0
        %2304 = vmatpush1.msra.mxu0 0.0
        %2305 = vmatprep.subr.mxu0 0.0
        %2306 = vmatpush1.msra.mxu0 0.0
        %2307 = vmatprep.subr.mxu0 0.0
        %2308 = vmatpush1.msra.mxu0 0.0
        %2309 = vmatprep.subr.mxu0 0.0
        %2310 = vmatpush1.msra.mxu0 0.0
        %2311 = vmatprep.subr.mxu0 0.0
        %2312 = vmatpush1.msra.mxu0 0.0
        %2313 = vmatprep.subr.mxu0 0.0
        %2314 = vmatpush1.msra.mxu0 0.0
        %2315 = vmatprep.subr.mxu0 0.0
        %2316 = vmatpush1.msra.mxu0 0.0
        %2317 = vmatprep.subr.mxu0 0.0
        %2318 = vmatpush1.msra.mxu0 0.0
        %2319 = vmatprep.subr.mxu0 0.0
        %2320 = vmatpush1.msra.mxu0 0.0
        %2321 = vmatprep.subr.mxu0 0.0
        %2322 = vmatpush1.msra.mxu0 0.0
        %2323 = vmatprep.subr.mxu0 0.0
        %2324 = vmatpush1.msra.mxu0 0.0
        %2325 = vmatprep.subr.mxu0 0.0
        %2326 = vmatpush1.msra.mxu0 0.0
        %2327 = vmatprep.mubr.f32.mxu0 0.0
        %2328 = vmatmul.mubr.f32.gmra.mrb[0].mxu0 %v2261
        %v2329 = vpop.f32.mrb[0].mxu0
        %v2330 = vadd.f32 0.0, %v2329
        %v2331 = vpop.f32.mrb[0].mxu0
        %2332 = vdwg.mxu0
        %v2333 = vadd.f32 %v2253, %v2330
        %s2334 = scalar_lea.vmem %s13, 40
        %v2335 = vld [vmem:[%s2334] sm:$0xff]
        %v2336 = vld [vmem:[%s2334 + $0x8] sm:$0xff]
        %v2337 = vld [vmem:[%s2334 + $0x10] sm:$0xff]
        %v2338 = vld [vmem:[%s2334 + $0x18] sm:$0xff]
        %v2339 = vld [vmem:[%s2334 + $0x20] sm:$0xff]
        %v2340 = vrot.slane %v2252, 1
        %v2341 = vsel %vm2259, %v2340, 0
        %2343 = vmatprep.subr.mxu0 0.0
        %2344 = vmatpush1.msra.mxu0 %v2335
        %2345 = vmatprep.subr.mxu0 0.0
        %2346 = vmatpush1.msra.mxu0 %v2336
        %2347 = vmatprep.subr.mxu0 0.0
        %2348 = vmatpush1.msra.mxu0 %v2337
        %2349 = vmatprep.subr.mxu0 0.0
        %2350 = vmatpush1.msra.mxu0 %v2338
        %2351 = vmatprep.subr.mxu0 0.0
        %2352 = vmatpush1.msra.mxu0 %v2339
        %2353 = vmatprep.subr.mxu0 0.0
        %2354 = vmatpush1.msra.mxu0 0.0
        %2355 = vmatprep.subr.mxu0 0.0
        %2356 = vmatpush1.msra.mxu0 0.0
        %2357 = vmatprep.subr.mxu0 0.0
        %2358 = vmatpush1.msra.mxu0 0.0
        %2359 = vmatprep.subr.mxu0 0.0
        %2360 = vmatpush1.msra.mxu0 0.0
        %2361 = vmatprep.subr.mxu0 0.0
        %2362 = vmatpush1.msra.mxu0 0.0
        %2363 = vmatprep.subr.mxu0 0.0
        %2364 = vmatpush1.msra.mxu0 0.0
        %2365 = vmatprep.subr.mxu0 0.0
        %2366 = vmatpush1.msra.mxu0 0.0
        %2367 = vmatprep.subr.mxu0 0.0
        %2368 = vmatpush1.msra.mxu0 0.0
        %2369 = vmatprep.subr.mxu0 0.0
        %2370 = vmatpush1.msra.mxu0 0.0
        %2371 = vmatprep.subr.mxu0 0.0
        %2372 = vmatpush1.msra.mxu0 0.0
        %2373 = vmatprep.subr.mxu0 0.0
        %2374 = vmatpush1.msra.mxu0 0.0
        %2375 = vmatprep.subr.mxu0 0.0
        %2376 = vmatpush1.msra.mxu0 0.0
        %2377 = vmatprep.subr.mxu0 0.0
        %2378 = vmatpush1.msra.mxu0 0.0
        %2379 = vmatprep.subr.mxu0 0.0
        %2380 = vmatpush1.msra.mxu0 0.0
        %2381 = vmatprep.subr.mxu0 0.0
        %2382 = vmatpush1.msra.mxu0 0.0
        %2383 = vmatprep.subr.mxu0 0.0
        %2384 = vmatpush1.msra.mxu0 0.0
        %2385 = vmatprep.subr.mxu0 0.0
        %2386 = vmatpush1.msra.mxu0 0.0
        %2387 = vmatprep.subr.mxu0 0.0
        %2388 = vmatpush1.msra.mxu0 0.0
        %2389 = vmatprep.subr.mxu0 0.0
        %2390 = vmatpush1.msra.mxu0 0.0
        %2391 = vmatprep.subr.mxu0 0.0
        %2392 = vmatpush1.msra.mxu0 0.0
        %2393 = vmatprep.subr.mxu0 0.0
        %2394 = vmatpush1.msra.mxu0 0.0
        %2395 = vmatprep.subr.mxu0 0.0
        %2396 = vmatpush1.msra.mxu0 0.0
        %2397 = vmatprep.subr.mxu0 0.0
        %2398 = vmatpush1.msra.mxu0 0.0
        %2399 = vmatprep.subr.mxu0 0.0
        %2400 = vmatpush1.msra.mxu0 0.0
        %2401 = vmatprep.subr.mxu0 0.0
        %2402 = vmatpush1.msra.mxu0 0.0
        %2403 = vmatprep.subr.mxu0 0.0
        %2404 = vmatpush1.msra.mxu0 0.0
        %2405 = vmatprep.subr.mxu0 0.0
        %2406 = vmatpush1.msra.mxu0 0.0
        %2407 = vmatprep.mubr.f32.mxu0 0.0
        %2408 = vmatmul.mubr.f32.gmra.mrb[0].mxu0 %v2341
        %v2409 = vpop.f32.mrb[0].mxu0
        %v2410 = vadd.f32 0.0, %v2409
        %v2411 = vpop.f32.mrb[0].mxu0
        %2412 = vdwg.mxu0
        %v2413 = vadd.f32 %v2333, %v2410
        %s2414 = scalar_lea.vmem %s13, 80
        %v2415 = vld [vmem:[%s2414] sm:$0xff]
        %v2416 = vld [vmem:[%s2414 + $0x8] sm:$0xff]
        %v2417 = vld [vmem:[%s2414 + $0x10] sm:$0xff]
        %v2418 = vld [vmem:[%s2414 + $0x18] sm:$0xff]
        %v2419 = vld [vmem:[%s2414 + $0x20] sm:$0xff]
        %v2420 = vrot.slane %v2252, 2
        %v2421 = vsel %vm2259, %v2420, 0
        %2423 = vmatprep.subr.mxu0 0.0
        %2424 = vmatpush1.msra.mxu0 %v2415
        %2425 = vmatprep.subr.mxu0 0.0
        %2426 = vmatpush1.msra.mxu0 %v2416
        %2427 = vmatprep.subr.mxu0 0.0
        %2428 = vmatpush1.msra.mxu0 %v2417
        %2429 = vmatprep.subr.mxu0 0.0
        %2430 = vmatpush1.msra.mxu0 %v2418
        %2431 = vmatprep.subr.mxu0 0.0
        %2432 = vmatpush1.msra.mxu0 %v2419
        %2433 = vmatprep.subr.mxu0 0.0
        %2434 = vmatpush1.msra.mxu0 0.0
        %2435 = vmatprep.subr.mxu0 0.0
        %2436 = vmatpush1.msra.mxu0 0.0
        %2437 = vmatprep.subr.mxu0 0.0
        %2438 = vmatpush1.msra.mxu0 0.0
        %2439 = vmatprep.subr.mxu0 0.0
        %2440 = vmatpush1.msra.mxu0 0.0
        %2441 = vmatprep.subr.mxu0 0.0
        %2442 = vmatpush1.msra.mxu0 0.0
        %2443 = vmatprep.subr.mxu0 0.0
        %2444 = vmatpush1.msra.mxu0 0.0
        %2445 = vmatprep.subr.mxu0 0.0
        %2446 = vmatpush1.msra.mxu0 0.0
        %2447 = vmatprep.subr.mxu0 0.0
        %2448 = vmatpush1.msra.mxu0 0.0
        %2449 = vmatprep.subr.mxu0 0.0
        %2450 = vmatpush1.msra.mxu0 0.0
        %2451 = vmatprep.subr.mxu0 0.0
        %2452 = vmatpush1.msra.mxu0 0.0
        %2453 = vmatprep.subr.mxu0 0.0
        %2454 = vmatpush1.msra.mxu0 0.0
        %2455 = vmatprep.subr.mxu0 0.0
        %2456 = vmatpush1.msra.mxu0 0.0
        %2457 = vmatprep.subr.mxu0 0.0
        %2458 = vmatpush1.msra.mxu0 0.0
        %2459 = vmatprep.subr.mxu0 0.0
        %2460 = vmatpush1.msra.mxu0 0.0
        %2461 = vmatprep.subr.mxu0 0.0
        %2462 = vmatpush1.msra.mxu0 0.0
        %2463 = vmatprep.subr.mxu0 0.0
        %2464 = vmatpush1.msra.mxu0 0.0
        %2465 = vmatprep.subr.mxu0 0.0
        %2466 = vmatpush1.msra.mxu0 0.0
        %2467 = vmatprep.subr.mxu0 0.0
        %2468 = vmatpush1.msra.mxu0 0.0
        %2469 = vmatprep.subr.mxu0 0.0
        %2470 = vmatpush1.msra.mxu0 0.0
        %2471 = vmatprep.subr.mxu0 0.0
        %2472 = vmatpush1.msra.mxu0 0.0
        %2473 = vmatprep.subr.mxu0 0.0
        %2474 = vmatpush1.msra.mxu0 0.0
        %2475 = vmatprep.subr.mxu0 0.0
        %2476 = vmatpush1.msra.mxu0 0.0
        %2477 = vmatprep.subr.mxu0 0.0
        %2478 = vmatpush1.msra.mxu0 0.0
        %2479 = vmatprep.subr.mxu0 0.0
        %2480 = vmatpush1.msra.mxu0 0.0
        %2481 = vmatprep.subr.mxu0 0.0
        %2482 = vmatpush1.msra.mxu0 0.0
        %2483 = vmatprep.subr.mxu0 0.0
        %2484 = vmatpush1.msra.mxu0 0.0
        %2485 = vmatprep.subr.mxu0 0.0
        %2486 = vmatpush1.msra.mxu0 0.0
        %2487 = vmatprep.mubr.f32.mxu0 0.0
        %2488 = vmatmul.mubr.f32.gmra.mrb[0].mxu0 %v2421
        %v2489 = vpop.f32.mrb[0].mxu0
        %v2490 = vadd.f32 0.0, %v2489
        %v2491 = vpop.f32.mrb[0].mxu0
        %2492 = vdwg.mxu0
        %v2493 = vadd.f32 %v2413, %v2490
        %s2494 = scalar_lea.vmem %s13, 120
        %v2495 = vld [vmem:[%s2494] sm:$0xff]
        %v2496 = vld [vmem:[%s2494 + $0x8] sm:$0xff]
        %v2497 = vld [vmem:[%s2494 + $0x10] sm:$0xff]
        %v2498 = vld [vmem:[%s2494 + $0x18] sm:$0xff]
        %v2499 = vld [vmem:[%s2494 + $0x20] sm:$0xff]
        %v2500 = vrot.slane %v2252, 3
        %v2501 = vsel %vm2259, %v2500, 0
        %2503 = vmatprep.subr.mxu0 0.0
        %2504 = vmatpush1.msra.mxu0 %v2495
        %2505 = vmatprep.subr.mxu0 0.0
        %2506 = vmatpush1.msra.mxu0 %v2496
        %2507 = vmatprep.subr.mxu0 0.0
        %2508 = vmatpush1.msra.mxu0 %v2497
        %2509 = vmatprep.subr.mxu0 0.0
        %2510 = vmatpush1.msra.mxu0 %v2498
        %2511 = vmatprep.subr.mxu0 0.0
        %2512 = vmatpush1.msra.mxu0 %v2499
        %2513 = vmatprep.subr.mxu0 0.0
        %2514 = vmatpush1.msra.mxu0 0.0
        %2515 = vmatprep.subr.mxu0 0.0
        %2516 = vmatpush1.msra.mxu0 0.0
        %2517 = vmatprep.subr.mxu0 0.0
        %2518 = vmatpush1.msra.mxu0 0.0
        %2519 = vmatprep.subr.mxu0 0.0
        %2520 = vmatpush1.msra.mxu0 0.0
        %2521 = vmatprep.subr.mxu0 0.0
        %2522 = vmatpush1.msra.mxu0 0.0
        %2523 = vmatprep.subr.mxu0 0.0
        %2524 = vmatpush1.msra.mxu0 0.0
        %2525 = vmatprep.subr.mxu0 0.0
        %2526 = vmatpush1.msra.mxu0 0.0
        %2527 = vmatprep.subr.mxu0 0.0
        %2528 = vmatpush1.msra.mxu0 0.0
        %2529 = vmatprep.subr.mxu0 0.0
        %2530 = vmatpush1.msra.mxu0 0.0
        %2531 = vmatprep.subr.mxu0 0.0
        %2532 = vmatpush1.msra.mxu0 0.0
        %2533 = vmatprep.subr.mxu0 0.0
        %2534 = vmatpush1.msra.mxu0 0.0
        %2535 = vmatprep.subr.mxu0 0.0
        %2536 = vmatpush1.msra.mxu0 0.0
        %2537 = vmatprep.subr.mxu0 0.0
        %2538 = vmatpush1.msra.mxu0 0.0
        %2539 = vmatprep.subr.mxu0 0.0
        %2540 = vmatpush1.msra.mxu0 0.0
        %2541 = vmatprep.subr.mxu0 0.0
        %2542 = vmatpush1.msra.mxu0 0.0
        %2543 = vmatprep.subr.mxu0 0.0
        %2544 = vmatpush1.msra.mxu0 0.0
        %2545 = vmatprep.subr.mxu0 0.0
        %2546 = vmatpush1.msra.mxu0 0.0
        %2547 = vmatprep.subr.mxu0 0.0
        %2548 = vmatpush1.msra.mxu0 0.0
        %2549 = vmatprep.subr.mxu0 0.0
        %2550 = vmatpush1.msra.mxu0 0.0
        %2551 = vmatprep.subr.mxu0 0.0
        %2552 = vmatpush1.msra.mxu0 0.0
        %2553 = vmatprep.subr.mxu0 0.0
        %2554 = vmatpush1.msra.mxu0 0.0
        %2555 = vmatprep.subr.mxu0 0.0
        %2556 = vmatpush1.msra.mxu0 0.0
        %2557 = vmatprep.subr.mxu0 0.0
        %2558 = vmatpush1.msra.mxu0 0.0
        %2559 = vmatprep.subr.mxu0 0.0
        %2560 = vmatpush1.msra.mxu0 0.0
        %2561 = vmatprep.subr.mxu0 0.0
        %2562 = vmatpush1.msra.mxu0 0.0
        %2563 = vmatprep.subr.mxu0 0.0
        %2564 = vmatpush1.msra.mxu0 0.0
        %2565 = vmatprep.subr.mxu0 0.0
        %2566 = vmatpush1.msra.mxu0 0.0
        %2567 = vmatprep.mubr.f32.mxu0 0.0
        %2568 = vmatmul.mubr.f32.gmra.mrb[0].mxu0 %v2501
        %v2569 = vpop.f32.mrb[0].mxu0
        %v2570 = vadd.f32 0.0, %v2569
        %v2571 = vpop.f32.mrb[0].mxu0
        %2572 = vdwg.mxu0
        %v2573 = vadd.f32 %v2493, %v2570
        %v2574 = vxor.u32 %v2573, 2147483648
        %v2575 = vmul.f32 %v2574, 1.442695
        %v2576 = vpow.pop %v2575
        %v2577 = vadd.f32 %v2576, 1.0
        %v2578 = vrcp.pop %v2577
        %v2579 = vmul.f32 1.0, %v2578
        %v2580 = vld [vmem:[%s15] sm:$0xff]
        %v2581 = vld [vmem:[%s15 + $0x8] sm:$0xff]
        %v2582 = vld [vmem:[%s15 + $0x10] sm:$0xff]
        %v2583 = vld [vmem:[%s15 + $0x18] sm:$0xff]
        %v2584 = vld [vmem:[%s15 + $0x20] sm:$0xff]
        %v2585 = vld [vmem:[%s15 + $0x28] sm:$0xff]
        %v2586 = vld [vmem:[%s15 + $0x30] sm:$0xff]
        %v2587 = vld [vmem:[%s15 + $0x38] sm:$0xff]
        %v2588 = vld [vmem:[%s15 + $0x40] sm:$0xff]
        %v2589 = vld [vmem:[%s15 + $0x48] sm:$0xff]
        %v2590 = vld [vmem:[%s15 + $0x50] sm:$0xff]
        %v2591 = vld [vmem:[%s15 + $0x58] sm:$0xff]
        %v2592 = vld [vmem:[%s15 + $0x60] sm:$0xff]
        %v2593 = vld [vmem:[%s15 + $0x68] sm:$0xff]
        %v2594 = vld [vmem:[%s15 + $0x70] sm:$0xff]
        %v2595 = vld [vmem:[%s15 + $0x78] sm:$0xff]
        %v2596 = vld [vmem:[%s16] sm:$0x1]
        %2597 = vmatprep.subr.mxu0 0.0
        %2598 = vmatpush1.msra.mxu0 %v2580
        %2599 = vmatprep.subr.mxu0 0.0
        %2600 = vmatpush1.msra.mxu0 %v2581
        %2601 = vmatprep.subr.mxu0 0.0
        %2602 = vmatpush1.msra.mxu0 %v2582
        %2603 = vmatprep.subr.mxu0 0.0
        %2604 = vmatpush1.msra.mxu0 %v2583
        %2605 = vmatprep.subr.mxu0 0.0
        %2606 = vmatpush1.msra.mxu0 %v2584
        %2607 = vmatprep.subr.mxu0 0.0
        %2608 = vmatpush1.msra.mxu0 %v2585
        %2609 = vmatprep.subr.mxu0 0.0
        %2610 = vmatpush1.msra.mxu0 %v2586
        %2611 = vmatprep.subr.mxu0 0.0
        %2612 = vmatpush1.msra.mxu0 %v2587
        %2613 = vmatprep.subr.mxu0 0.0
        %2614 = vmatpush1.msra.mxu0 %v2588
        %2615 = vmatprep.subr.mxu0 0.0
        %2616 = vmatpush1.msra.mxu0 %v2589
        %2617 = vmatprep.subr.mxu0 0.0
        %2618 = vmatpush1.msra.mxu0 %v2590
        %2619 = vmatprep.subr.mxu0 0.0
        %2620 = vmatpush1.msra.mxu0 %v2591
        %2621 = vmatprep.subr.mxu0 0.0
        %2622 = vmatpush1.msra.mxu0 %v2592
        %2623 = vmatprep.subr.mxu0 0.0
        %2624 = vmatpush1.msra.mxu0 %v2593
        %2625 = vmatprep.subr.mxu0 0.0
        %2626 = vmatpush1.msra.mxu0 %v2594
        %2627 = vmatprep.subr.mxu0 0.0
        %2628 = vmatpush1.msra.mxu0 %v2595
        %2629 = vmatprep.subr.mxu0 0.0
        %2630 = vmatpush1.msra.mxu0 0.0
        %2631 = vmatprep.subr.mxu0 0.0
        %2632 = vmatpush1.msra.mxu0 0.0
        %2633 = vmatprep.subr.mxu0 0.0
        %2634 = vmatpush1.msra.mxu0 0.0
        %2635 = vmatprep.subr.mxu0 0.0
        %2636 = vmatpush1.msra.mxu0 0.0
        %2637 = vmatprep.subr.mxu0 0.0
        %2638 = vmatpush1.msra.mxu0 0.0
        %2639 = vmatprep.subr.mxu0 0.0
        %2640 = vmatpush1.msra.mxu0 0.0
        %2641 = vmatprep.subr.mxu0 0.0
        %2642 = vmatpush1.msra.mxu0 0.0
        %2643 = vmatprep.subr.mxu0 0.0
        %2644 = vmatpush1.msra.mxu0 0.0
        %2645 = vmatprep.subr.mxu0 0.0
        %2646 = vmatpush1.msra.mxu0 0.0
        %2647 = vmatprep.subr.mxu0 0.0
        %2648 = vmatpush1.msra.mxu0 0.0
        %2649 = vmatprep.subr.mxu0 0.0
        %2650 = vmatpush1.msra.mxu0 0.0
        %2651 = vmatprep.subr.mxu0 0.0
        %2652 = vmatpush1.msra.mxu0 0.0
        %2653 = vmatprep.subr.mxu0 0.0
        %2654 = vmatpush1.msra.mxu0 0.0
        %2655 = vmatprep.subr.mxu0 0.0
        %2656 = vmatpush1.msra.mxu0 0.0
        %2657 = vmatprep.subr.mxu0 0.0
        %2658 = vmatpush1.msra.mxu0 0.0
        %2659 = vmatprep.subr.mxu0 0.0
        %2660 = vmatpush1.msra.mxu0 0.0
        %2661 = vmatprep.mubr.f32.mxu0 0.0
        %2662 = vmatmul.mubr.f32.gmra.mrb[0].mxu0 %v2579
        %v2663 = vpop.f32.mrb[0].mxu0
        %v2664 = vadd.f32 %v2596, %v2663
        %v2665 = vpop.f32.mrb[0].mxu0
        %2666 = vdwg.mxu0
        %v2667 = vxor.u32 %v2664, 2147483648
        %v2668 = vmul.f32 %v2667, 1.442695
        %v2669 = vpow.pop %v2668
        %v2670 = vadd.f32 %v2669, 1.0
        %v2671 = vrcp.pop %v2670
        %v2672 = vmul.f32 1.0, %v2671
        %vm2673 = vcmask 73728
        %2674 = vst.msk [vmem:[%s578] sm:$0x1] %vm2673, %v2672
        %s2675 = sand.u32 %s403, 1
        %s2676 = scalar_lea.sflag [#allocation4], %s2675
        %s2677 = sand.u32 %s403, 1
        %s2678 = scalar_lea.vmem [#allocation8], %s2677
        // Predicated region
        $region101: #{mnist_classifier_forward.1} parent=87 // pred_check
          %p2679 = pneg %p413
        $region102: #{mnist_classifier_forward.1} parent=87 // pred_check_branch
          %2681 = sbr.rel (%p2679) target = $region104
        $region103: #{mnist_classifier_forward.1} parent=87 // pred_region
          %s2683 = ssub.s32 16, 16
          %2684 = vsyncadd %s2676, %s2683
          %s2685 = smul.addr %s33, 16
          %s2686 = scalar_lea.hbm %s17, %s2685
          %s2688 = sshll.u32 %s2678, 4
          %s2689 = int_to_ptr.vmem [resolvable:$true] %s2688
          %2691 = dma.vmem_to_hbm [thread:$0]  %s2689, 16, %s2686, %s2676
        $region104: #{mnist_classifier_forward.1} parent=87 // pred_fallthru
          _
      $region88: #{mnist_classifier_forward.1} parent=5 // pred_fallthru
        _
      %p2692 = scmp.le.s32.totalorder 2, %s28
      // Predicated region
      $region105: #{mnist_classifier_forward.1} parent=5 // pred_check
        %p2693 = pneg %p2692
      $region106: #{mnist_classifier_forward.1} parent=5 // pred_check_branch
        %2695 = sbr.rel (%p2693) target = $region108
      $region107: #{mnist_classifier_forward.1} parent=5 // pred_region
        %s2696 = ssub.s32 %s28, 2
        // Predicated region
        $region109: #{mnist_classifier_forward.1} parent=107 // pred_check
          %p2697 = pneg %p419
        $region110: #{mnist_classifier_forward.1} parent=107 // pred_check_branch
          %2699 = sbr.rel (%p2697) target = $region112
        $region111: #{mnist_classifier_forward.1} parent=107 // pred_region
          %s2700 = sand.u32 %s404, 1
          %s2701 = scalar_lea.sflag [#allocation4], %s2700
          %s2702 = sand.u32 %s404, 1
          %s2703 = scalar_lea.vmem [#allocation8], %s2702
          %2704 = dma.done %s2701, 16
        $region112: #{mnist_classifier_forward.1} parent=107 // pred_fallthru
          _
      $region108: #{mnist_classifier_forward.1} parent=5 // pred_fallthru
        _
    $region6: #{mnist_classifier_forward.1} parent=1 // loop_footer
      %s32 = sadd.s32 1, %s28
    $region7: #{mnist_classifier_forward.1} parent=1 // loop_footer_branch
      %27 = sbr.rel target = $region3
    $region8: #{mnist_classifier_forward.1} parent=1 // loop_exit
      _
    %2705 = vsyncpa [#allocation3], 1
    %s2706 = scalar_lea.sflag [#allocation3], 1
    %2707 = vsyncpa %s2706, 1
    %2708 = vsyncpa [#allocation6], 1
    %2709 = vsyncpa [#allocation4], 1
    %s2710 = scalar_lea.sflag [#allocation4], 1
    %2711 = vsyncpa %s2710, 1

</llo_original>
